<compile_context>
chip_gen: v6e
topology: v6e:2x2x1
jax: 0.10.0
libtpu: 0.0.40
codegen_flags: <defaults>
</compile_context>

<pallas_src>
import functools
import math

import jax
import jax.numpy as jnp
from jax import lax
from jax.experimental import pallas as pl
from jax.experimental.pallas import tpu as pltpu


def _layer_norm(x, gamma, beta, eps=1e-12):
    mu = jnp.mean(x, axis=-1, keepdims=True)
    var = jnp.mean((x - mu) ** 2, axis=-1, keepdims=True)
    return (x - mu) * lax.rsqrt(var + eps) * gamma + beta


def _gelu_tanh(x):
    # tanh-approx GELU: tanh goes to the EUP slot instead of a long erf polynomial
    # on the VALU.  Tiny (~1e-3) deviation from HF exact "gelu".
    c = math.sqrt(2.0 / math.pi)
    return 0.5 * x * (1.0 + jnp.tanh(c * (x + 0.044715 * x * x * x)))


def fused_encoder_kernel(B, L, H, nhead,
                         mask_ref, x0_ref,
                         wqkv_ref, bqkv_ref, wo_ref, bo_ref, ln1g_ref, ln1b_ref,
                         w1_ref, b1_ref, w2_ref, b2_ref, ln2g_ref, ln2b_ref,
                         out_ref):
    """Grid axis = transformer layer. out_ref carries x (B, L, H) across layers."""
    layer = pl.program_id(0)
    dh = H // nhead
    scale = 1.0 / math.sqrt(dh)
    M = B * L

    # ---- Layer 0: seed the VMEM-resident activation with the wrapper-computed
    # embedding (token gather + position add done outside the kernel). ----
    @pl.when(layer == 0)
    def _():
        out_ref[...] = x0_ref[...]

    add_mask = mask_ref[...]                              # (B, 1, L) additive f32 mask

    x = out_ref[...].reshape(M, H)                        # running activation, f32
    x_bf = x.astype(jnp.bfloat16)

    # ---- Fused QKV: one lane-dense (M, H) x (H, 3H) bf16 matmul, f32 accumulate. ----
    qkv = jnp.dot(x_bf, wqkv_ref[0],
                  preferred_element_type=jnp.float32) + bqkv_ref[0]      # (M, 3H)
    q = qkv[:, :H]
    k = qkv[:, H:2 * H]
    v = qkv[:, 2 * H:]

    # ---- Per-head score / softmax / context (tiny tensors), batched over B. ----
    ctx_heads = []
    for h in range(nhead):
        lo = h * dh
        q3 = q[:, lo:lo + dh].reshape(B, L, dh).astype(jnp.bfloat16)
        k3 = k[:, lo:lo + dh].reshape(B, L, dh).astype(jnp.bfloat16)
        v3 = v[:, lo:lo + dh].reshape(B, L, dh).astype(jnp.bfloat16)

        s = lax.dot_general(q3, k3, (((2,), (2,)), ((0,), (0,))),
                            preferred_element_type=jnp.float32) * scale  # (B, L, L)
        s = s + add_mask
        s = s - jnp.max(s, axis=-1, keepdims=True)
        p = jnp.exp(s)
        p = p * pl.reciprocal(jnp.sum(p, axis=-1, keepdims=True), approx=True)

        ctx_heads.append(
            lax.dot_general(p.astype(jnp.bfloat16), v3,
                            (((2,), (1,)), ((0,), (0,))),
                            preferred_element_type=jnp.float32))         # (B, L, dh)

    # ---- Concat-then-project: single (M, H) x (H, H) output projection. ----
    ctx = jnp.concatenate(ctx_heads, axis=-1).reshape(M, H)
    attn = jnp.dot(ctx.astype(jnp.bfloat16), wo_ref[0],
                   preferred_element_type=jnp.float32) + bo_ref[0]

    # ---- Residual + LayerNorm, FFN (tanh-GELU), residual + LayerNorm (f32). ----
    h1 = _layer_norm(attn + x, ln1g_ref[0], ln1b_ref[0])
    inter = _gelu_tanh(jnp.dot(h1.astype(jnp.bfloat16), w1_ref[0],
                               preferred_element_type=jnp.float32) + b1_ref[0])
    ffn = jnp.dot(inter.astype(jnp.bfloat16), w2_ref[0],
                  preferred_element_type=jnp.float32) + b2_ref[0]
    out = _layer_norm(ffn + h1, ln2g_ref[0], ln2b_ref[0])

    out_ref[...] = out.reshape(B, L, H)


def mol_roberta_forward(params, src, nhead):
    """src: (B, L) int32 token ids; returns last_hidden_state (B, L, H) f32."""
    B, L = src.shape
    tok = params["tok_emb"]                    # (vocab, H) f32
    pos = params["pos_emb"][:L]                # (L, H) f32
    H = tok.shape[1]
    sp = params["stacked"]
    nlayers = sp["wqkv"].shape[0]

    # Embedding gather + position add and the additive padding mask stay in plain
    # JAX: cheap, and keeps the vocab table out of kernel VMEM (matters on v7x).
    x0 = jnp.take(tok, src, axis=0) + pos[None, :, :]                     # (B, L, H)
    add_mask = jnp.where(src == 0, -1e9, 0.0).astype(jnp.float32)
    add_mask = add_mask.reshape(B, 1, L)

    def const_spec(shape):
        n = len(shape)
        return pl.BlockSpec(shape, lambda l, _n=n: (0,) * _n)

    def layer_spec(full_shape):
        block = (1,) + tuple(full_shape[1:])
        n = len(full_shape) - 1
        return pl.BlockSpec(block, lambda l, _n=n: (l,) + (0,) * _n)

    in_specs = [
        const_spec((B, 1, L)),                 # additive padding mask
        const_spec((B, L, H)),                 # embedded input x0
        layer_spec(sp["wqkv"].shape), layer_spec(sp["bqkv"].shape),
        layer_spec(sp["wo"].shape), layer_spec(sp["bo"].shape),
        layer_spec(sp["ln1g"].shape), layer_spec(sp["ln1b"].shape),
        layer_spec(sp["w1"].shape), layer_spec(sp["b1"].shape),
        layer_spec(sp["w2"].shape), layer_spec(sp["b2"].shape),
        layer_spec(sp["ln2g"].shape), layer_spec(sp["ln2b"].shape),
    ]

    return pl.pallas_call(
        functools.partial(fused_encoder_kernel, B, L, H, nhead),
        out_shape=jax.ShapeDtypeStruct((B, L, H), jnp.float32),
        grid=(nlayers,),
        in_specs=in_specs,
        # Constant block index across the layer axis -> x stays resident in VMEM and
        # is written to HBM exactly once at the end.
        out_specs=pl.BlockSpec((B, L, H), lambda l: (0, 0, 0)),
        compiler_params=pltpu.CompilerParams(
            dimension_semantics=("arbitrary",),
            # Demo shapes: ~0.8 MB double-buffered bf16 weights + ~50 KB activations.
            # TODO(synk): re-derive for real sizes (H=768, I=3072 -> ~29 MB of
            # double-buffered weights) and keep below the 64 MiB physical VMEM on v7x.
            vmem_limit_bytes=32 * 1024 * 1024,
        ),
    )(add_mask, x0,
      sp["wqkv"], sp["bqkv"], sp["wo"], sp["bo"], sp["ln1g"], sp["ln1b"],
      sp["w1"], sp["b1"], sp["w2"], sp["b2"], sp["ln2g"], sp["ln2b"])


def init_params(key, vocab, max_len, H, I, nlayers, nhead):
    """Random weights in (in, out) layout, packed lane-dense for the kernel."""
    scale = 0.02
    keys = jax.random.split(key, 2 + nlayers)

    tok = scale * jax.random.normal(keys[0], (vocab, H), jnp.float32)
    tok = tok.at[0].set(0.0)                   # nn.Embedding padding_idx=0
    pos = scale * jax.random.normal(keys[1], (max_len, H), jnp.float32)

    layers = []
    for li in range(nlayers):
        ks = jax.random.split(keys[2 + li], 6)
        wq = scale * jax.random.normal(ks[0], (H, H), jnp.float32)
        wk = scale * jax.random.normal(ks[1], (H, H), jnp.float32)
        wv = scale * jax.random.normal(ks[2], (H, H), jnp.float32)
        wo = scale * jax.random.normal(ks[3], (H, H), jnp.float32)
        w1 = scale * jax.random.normal(ks[4], (H, I), jnp.float32)
        w2 = scale * jax.random.normal(ks[5], (I, H), jnp.float32)
        layers.append(dict(
            wqkv=jnp.concatenate([wq, wk, wv], axis=1).astype(jnp.bfloat16),  # (H, 3H)
            bqkv=jnp.zeros((1, 3 * H), jnp.float32),
            wo=wo.astype(jnp.bfloat16),                                        # (H, H)
            bo=jnp.zeros((1, H), jnp.float32),
            ln1g=jnp.ones((1, H), jnp.float32), ln1b=jnp.zeros((1, H), jnp.float32),
            w1=w1.astype(jnp.bfloat16), b1=jnp.zeros((1, I), jnp.float32),
            w2=w2.astype(jnp.bfloat16), b2=jnp.zeros((1, H), jnp.float32),
            ln2g=jnp.ones((1, H), jnp.float32), ln2b=jnp.zeros((1, H), jnp.float32),
        ))
    stacked = {k: jnp.stack([lp[k] for lp in layers], axis=0) for k in layers[0]}
    return dict(tok_emb=tok, pos_emb=pos, stacked=stacked)


if __name__ == "__main__":
    # Small shapes consistent with the module's forward:
    # batch=2, seq(max_len)=16, hidden=128, 4 heads, 2 layers, vocab=48, intermediate=4*hidden.
    B, L, H, NHEAD, NLAYERS, VOCAB = 2, 16, 128, 4, 2, 48
    I = 4 * H

    key = jax.random.PRNGKey(0)
    k_param, k_src = jax.random.split(key)
    params = init_params(k_param, VOCAB, L, H, I, NLAYERS, NHEAD)

    src = jax.random.randint(k_src, (B, L), 1, VOCAB, dtype=jnp.int32)
    src = src.at[0, 12:].set(0)   # padded tail
    src = src.at[1, 10:].set(0)   # padded tail

    out = mol_roberta_forward(params, src, NHEAD)
    jax.block_until_ready(out)
    assert out.shape == (B, L, H) and out.dtype == jnp.float32
    print("KERNEL_OK")
</pallas_src>

<mosaic_0001>
module attributes {stable_mosaic.version = 11 : i64} {
  func.func @fused_encoder_kernel(%arg0: i32, %arg1: memref<2x1x16xf32, #tpu.memory_space<vmem>>, %arg2: memref<2x16x128xf32, #tpu.memory_space<vmem>>, %arg3: memref<1x128x384xbf16, #tpu.memory_space<vmem>>, %arg4: memref<1x1x384xf32, #tpu.memory_space<vmem>>, %arg5: memref<1x128x128xbf16, #tpu.memory_space<vmem>>, %arg6: memref<1x1x128xf32, #tpu.memory_space<vmem>>, %arg7: memref<1x1x128xf32, #tpu.memory_space<vmem>>, %arg8: memref<1x1x128xf32, #tpu.memory_space<vmem>>, %arg9: memref<1x128x512xbf16, #tpu.memory_space<vmem>>, %arg10: memref<1x1x512xf32, #tpu.memory_space<vmem>>, %arg11: memref<1x512x128xbf16, #tpu.memory_space<vmem>>, %arg12: memref<1x1x128xf32, #tpu.memory_space<vmem>>, %arg13: memref<1x1x128xf32, #tpu.memory_space<vmem>>, %arg14: memref<1x1x128xf32, #tpu.memory_space<vmem>>, %arg15: memref<2x16x128xf32, #tpu.memory_space<vmem>>) attributes {dimension_semantics = [#tpu.dimension_semantics<arbitrary>], iteration_bounds = array<i64: 2>, scalar_prefetch = 0 : i64, scratch_operands = 0 : i64, tpu.core_type = #tpu.core_type<tc>, window_params = [{pipeline_mode = #tpu.pipeline_mode<synchronous>, transform_indices = @transform_0, window_bounds = array<i64: 2, 1, 16>}, {pipeline_mode = #tpu.pipeline_mode<synchronous>, transform_indices = @transform_1, window_bounds = array<i64: 2, 16, 128>}, {transform_indices = @transform_2, window_bounds = array<i64: 1, 128, 384>}, {transform_indices = @transform_3, window_bounds = array<i64: 1, 1, 384>}, {transform_indices = @transform_4, window_bounds = array<i64: 1, 128, 128>}, {transform_indices = @transform_5, window_bounds = array<i64: 1, 1, 128>}, {transform_indices = @transform_6, window_bounds = array<i64: 1, 1, 128>}, {transform_indices = @transform_7, window_bounds = array<i64: 1, 1, 128>}, {transform_indices = @transform_8, window_bounds = array<i64: 1, 128, 512>}, {transform_indices = @transform_9, window_bounds = array<i64: 1, 1, 512>}, {transform_indices = @transform_10, window_bounds = array<i64: 1, 512, 128>}, {transform_indices = @transform_11, window_bounds = array<i64: 1, 1, 128>}, {transform_indices = @transform_12, window_bounds = array<i64: 1, 1, 128>}, {transform_indices = @transform_13, window_bounds = array<i64: 1, 1, 128>}, {pipeline_mode = #tpu.pipeline_mode<synchronous>, transform_indices = @transform_14, window_bounds = array<i64: 2, 16, 128>}]} {
    %c0_i32 = arith.constant 0 : i32
    %0 = arith.cmpi eq, %arg0, %c0_i32 : i32
    %1 = arith.extui %0 : i1 to i32
    %c0_i32_0 = arith.constant 0 : i32
    %2 = arith.cmpi ne, %1, %c0_i32_0 : i32
    scf.if %2 {
      %c0_82 = arith.constant 0 : index
      %c0_83 = arith.constant 0 : index
      %c0_84 = arith.constant 0 : index
      %216 = vector.load %arg2[%c0_82, %c0_83, %c0_84] : memref<2x16x128xf32, #tpu.memory_space<vmem>>, vector<2x16x128xf32>
      %c0_85 = arith.constant 0 : index
      %c0_86 = arith.constant 0 : index
      %c0_87 = arith.constant 0 : index
      %217 = vector.load %arg15[%c0_85, %c0_86, %c0_87] : memref<2x16x128xf32, #tpu.memory_space<vmem>>, vector<2x16x128xf32>
      tpu.vector_store %arg15[%c0_85, %c0_86, %c0_87], %216 {strides = array<i32>} : memref<2x16x128xf32, #tpu.memory_space<vmem>>, vector<2x16x128xf32>,
    } else {
    }
    %c0 = arith.constant 0 : index
    %c0_1 = arith.constant 0 : index
    %c0_2 = arith.constant 0 : index
    %3 = vector.load %arg1[%c0, %c0_1, %c0_2] : memref<2x1x16xf32, #tpu.memory_space<vmem>>, vector<2x1x16xf32>
    %c0_3 = arith.constant 0 : index
    %c0_4 = arith.constant 0 : index
    %c0_5 = arith.constant 0 : index
    %4 = vector.load %arg15[%c0_3, %c0_4, %c0_5] : memref<2x16x128xf32, #tpu.memory_space<vmem>>, vector<2x16x128xf32>
    %5 = vector.shape_cast %4 : vector<2x16x128xf32> to vector<32x128xf32>
    %6 = arith.truncf %5 : vector<32x128xf32> to vector<32x128xbf16>
    %c0_6 = arith.constant 0 : index
    %c0_7 = arith.constant 0 : index
    %c0_8 = arith.constant 0 : index
    %7 = vector.load %arg3[%c0_6, %c0_7, %c0_8] : memref<1x128x384xbf16, #tpu.memory_space<vmem>>, vector<1x128x384xbf16>
    %8 = vector.shape_cast %7 : vector<1x128x384xbf16> to vector<128x384xbf16>
    %cst = arith.constant dense<0.000000e+00> : vector<32x384xf32>
    %9 = tpu.matmul %6, %8, %cst {dimension_numbers = #tpu.dot_dimension_numbers<[1], [0], [0], [1], [0, 0, 1, 1], [], []>} : vector<32x128xbf16>, vector<128x384xbf16>, vector<32x384xf32> -> vector<32x384xf32>
    %c0_9 = arith.constant 0 : index
    %c0_10 = arith.constant 0 : index
    %c0_11 = arith.constant 0 : index
    %10 = vector.load %arg4[%c0_9, %c0_10, %c0_11] : memref<1x1x384xf32, #tpu.memory_space<vmem>>, vector<1x1x384xf32>
    %11 = vector.shape_cast %10 : vector<1x1x384xf32> to vector<1x384xf32>
    %12 = vector.broadcast %11 : vector<1x384xf32> to vector<32x384xf32>
    %13 = arith.addf %9, %12 : vector<32x384xf32>
    %14 = vector.extract_strided_slice %13 {offsets = [0, 0], sizes = [32, 128], strides = [1, 1]} : vector<32x384xf32> to vector<32x128xf32>
    %15 = vector.extract_strided_slice %13 {offsets = [0, 128], sizes = [32, 128], strides = [1, 1]} : vector<32x384xf32> to vector<32x128xf32>
    %16 = vector.extract_strided_slice %13 {offsets = [0, 256], sizes = [32, 128], strides = [1, 1]} : vector<32x384xf32> to vector<32x128xf32>
    %17 = vector.extract_strided_slice %14 {offsets = [0, 0], sizes = [32, 32], strides = [1, 1]} : vector<32x128xf32> to vector<32x32xf32>
    %18 = vector.shape_cast %17 : vector<32x32xf32> to vector<2x16x32xf32>
    %19 = arith.truncf %18 : vector<2x16x32xf32> to vector<2x16x32xbf16>
    %20 = vector.extract_strided_slice %15 {offsets = [0, 0], sizes = [32, 32], strides = [1, 1]} : vector<32x128xf32> to vector<32x32xf32>
    %21 = vector.shape_cast %20 : vector<32x32xf32> to vector<2x16x32xf32>
    %22 = arith.truncf %21 : vector<2x16x32xf32> to vector<2x16x32xbf16>
    %23 = vector.extract_strided_slice %16 {offsets = [0, 0], sizes = [32, 32], strides = [1, 1]} : vector<32x128xf32> to vector<32x32xf32>
    %24 = vector.shape_cast %23 : vector<32x32xf32> to vector<2x16x32xf32>
    %25 = arith.truncf %24 : vector<2x16x32xf32> to vector<2x16x32xbf16>
    %cst_12 = arith.constant dense<0.000000e+00> : vector<2x16x16xf32>
    %26 = tpu.matmul %19, %22, %cst_12 {dimension_numbers = #tpu.dot_dimension_numbers<[2], [2], [1], [1], [0, 0, 0, 1, 1, 1], [0], [0]>} : vector<2x16x32xbf16>, vector<2x16x32xbf16>, vector<2x16x16xf32> -> vector<2x16x16xf32>
    %cst_13 = arith.constant 0.176776692 : f32
    %27 = vector.broadcast %cst_13 : f32 to vector<2x16x16xf32>
    %28 = arith.mulf %26, %27 : vector<2x16x16xf32>
    %29 = vector.broadcast %3 : vector<2x1x16xf32> to vector<2x16x16xf32>
    %30 = arith.addf %28, %29 : vector<2x16x16xf32>
    %cst_14 = arith.constant dense<0xFF800000> : vector<2x16xf32>
    %31 = vector.multi_reduction <maximumf>, %30, %cst_14 [2] : vector<2x16x16xf32> to vector<2x16xf32>
    %32 = vector.shape_cast %31 : vector<2x16xf32> to vector<2x16x1xf32>
    %33 = vector.broadcast %32 : vector<2x16x1xf32> to vector<2x16x16xf32>
    %34 = arith.subf %30, %33 : vector<2x16x16xf32>
    %35 = math.exp %34 : vector<2x16x16xf32>
    %cst_15 = arith.constant dense<0.000000e+00> : vector<2x16xf32>
    %36 = vector.multi_reduction <add>, %35, %cst_15 [2] : vector<2x16x16xf32> to vector<2x16xf32>
    %37 = vector.shape_cast %36 : vector<2x16xf32> to vector<2x16x1xf32>
    %38 = tpu.reciprocal %37 {approx = true} : vector<2x16x1xf32> -> vector<2x16x1xf32>
    %39 = vector.broadcast %38 : vector<2x16x1xf32> to vector<2x16x16xf32>
    %40 = arith.mulf %35, %39 : vector<2x16x16xf32>
    %41 = arith.truncf %40 : vector<2x16x16xf32> to vector<2x16x16xbf16>
    %cst_16 = arith.constant dense<0.000000e+00> : vector<2x16x32xf32>
    %42 = tpu.matmul %41, %25, %cst_16 {dimension_numbers = #tpu.dot_dimension_numbers<[2], [1], [1], [2], [0, 0, 0, 1, 1, 2], [0], [0]>} : vector<2x16x16xbf16>, vector<2x16x32xbf16>, vector<2x16x32xf32> -> vector<2x16x32xf32>
    %43 = vector.extract_strided_slice %14 {offsets = [0, 32], sizes = [32, 32], strides = [1, 1]} : vector<32x128xf32> to vector<32x32xf32>
    %44 = vector.shape_cast %43 : vector<32x32xf32> to vector<2x16x32xf32>
    %45 = arith.truncf %44 : vector<2x16x32xf32> to vector<2x16x32xbf16>
    %46 = vector.extract_strided_slice %15 {offsets = [0, 32], sizes = [32, 32], strides = [1, 1]} : vector<32x128xf32> to vector<32x32xf32>
    %47 = vector.shape_cast %46 : vector<32x32xf32> to vector<2x16x32xf32>
    %48 = arith.truncf %47 : vector<2x16x32xf32> to vector<2x16x32xbf16>
    %49 = vector.extract_strided_slice %16 {offsets = [0, 32], sizes = [32, 32], strides = [1, 1]} : vector<32x128xf32> to vector<32x32xf32>
    %50 = vector.shape_cast %49 : vector<32x32xf32> to vector<2x16x32xf32>
    %51 = arith.truncf %50 : vector<2x16x32xf32> to vector<2x16x32xbf16>
    %cst_17 = arith.constant dense<0.000000e+00> : vector<2x16x16xf32>
    %52 = tpu.matmul %45, %48, %cst_17 {dimension_numbers = #tpu.dot_dimension_numbers<[2], [2], [1], [1], [0, 0, 0, 1, 1, 1], [0], [0]>} : vector<2x16x32xbf16>, vector<2x16x32xbf16>, vector<2x16x16xf32> -> vector<2x16x16xf32>
    %cst_18 = arith.constant 0.176776692 : f32
    %53 = vector.broadcast %cst_18 : f32 to vector<2x16x16xf32>
    %54 = arith.mulf %52, %53 : vector<2x16x16xf32>
    %55 = vector.broadcast %3 : vector<2x1x16xf32> to vector<2x16x16xf32>
    %56 = arith.addf %54, %55 : vector<2x16x16xf32>
    %cst_19 = arith.constant dense<0xFF800000> : vector<2x16xf32>
    %57 = vector.multi_reduction <maximumf>, %56, %cst_19 [2] : vector<2x16x16xf32> to vector<2x16xf32>
    %58 = vector.shape_cast %57 : vector<2x16xf32> to vector<2x16x1xf32>
    %59 = vector.broadcast %58 : vector<2x16x1xf32> to vector<2x16x16xf32>
    %60 = arith.subf %56, %59 : vector<2x16x16xf32>
    %61 = math.exp %60 : vector<2x16x16xf32>
    %cst_20 = arith.constant dense<0.000000e+00> : vector<2x16xf32>
    %62 = vector.multi_reduction <add>, %61, %cst_20 [2] : vector<2x16x16xf32> to vector<2x16xf32>
    %63 = vector.shape_cast %62 : vector<2x16xf32> to vector<2x16x1xf32>
    %64 = tpu.reciprocal %63 {approx = true} : vector<2x16x1xf32> -> vector<2x16x1xf32>
    %65 = vector.broadcast %64 : vector<2x16x1xf32> to vector<2x16x16xf32>
    %66 = arith.mulf %61, %65 : vector<2x16x16xf32>
    %67 = arith.truncf %66 : vector<2x16x16xf32> to vector<2x16x16xbf16>
    %cst_21 = arith.constant dense<0.000000e+00> : vector<2x16x32xf32>
    %68 = tpu.matmul %67, %51, %cst_21 {dimension_numbers = #tpu.dot_dimension_numbers<[2], [1], [1], [2], [0, 0, 0, 1, 1, 2], [0], [0]>} : vector<2x16x16xbf16>, vector<2x16x32xbf16>, vector<2x16x32xf32> -> vector<2x16x32xf32>
    %69 = vector.extract_strided_slice %14 {offsets = [0, 64], sizes = [32, 32], strides = [1, 1]} : vector<32x128xf32> to vector<32x32xf32>
    %70 = vector.shape_cast %69 : vector<32x32xf32> to vector<2x16x32xf32>
    %71 = arith.truncf %70 : vector<2x16x32xf32> to vector<2x16x32xbf16>
    %72 = vector.extract_strided_slice %15 {offsets = [0, 64], sizes = [32, 32], strides = [1, 1]} : vector<32x128xf32> to vector<32x32xf32>
    %73 = vector.shape_cast %72 : vector<32x32xf32> to vector<2x16x32xf32>
    %74 = arith.truncf %73 : vector<2x16x32xf32> to vector<2x16x32xbf16>
    %75 = vector.extract_strided_slice %16 {offsets = [0, 64], sizes = [32, 32], strides = [1, 1]} : vector<32x128xf32> to vector<32x32xf32>
    %76 = vector.shape_cast %75 : vector<32x32xf32> to vector<2x16x32xf32>
    %77 = arith.truncf %76 : vector<2x16x32xf32> to vector<2x16x32xbf16>
    %cst_22 = arith.constant dense<0.000000e+00> : vector<2x16x16xf32>
    %78 = tpu.matmul %71, %74, %cst_22 {dimension_numbers = #tpu.dot_dimension_numbers<[2], [2], [1], [1], [0, 0, 0, 1, 1, 1], [0], [0]>} : vector<2x16x32xbf16>, vector<2x16x32xbf16>, vector<2x16x16xf32> -> vector<2x16x16xf32>
    %cst_23 = arith.constant 0.176776692 : f32
    %79 = vector.broadcast %cst_23 : f32 to vector<2x16x16xf32>
    %80 = arith.mulf %78, %79 : vector<2x16x16xf32>
    %81 = vector.broadcast %3 : vector<2x1x16xf32> to vector<2x16x16xf32>
    %82 = arith.addf %80, %81 : vector<2x16x16xf32>
    %cst_24 = arith.constant dense<0xFF800000> : vector<2x16xf32>
    %83 = vector.multi_reduction <maximumf>, %82, %cst_24 [2] : vector<2x16x16xf32> to vector<2x16xf32>
    %84 = vector.shape_cast %83 : vector<2x16xf32> to vector<2x16x1xf32>
    %85 = vector.broadcast %84 : vector<2x16x1xf32> to vector<2x16x16xf32>
    %86 = arith.subf %82, %85 : vector<2x16x16xf32>
    %87 = math.exp %86 : vector<2x16x16xf32>
    %cst_25 = arith.constant dense<0.000000e+00> : vector<2x16xf32>
    %88 = vector.multi_reduction <add>, %87, %cst_25 [2] : vector<2x16x16xf32> to vector<2x16xf32>
    %89 = vector.shape_cast %88 : vector<2x16xf32> to vector<2x16x1xf32>
    %90 = tpu.reciprocal %89 {approx = true} : vector<2x16x1xf32> -> vector<2x16x1xf32>
    %91 = vector.broadcast %90 : vector<2x16x1xf32> to vector<2x16x16xf32>
    %92 = arith.mulf %87, %91 : vector<2x16x16xf32>
    %93 = arith.truncf %92 : vector<2x16x16xf32> to vector<2x16x16xbf16>
    %cst_26 = arith.constant dense<0.000000e+00> : vector<2x16x32xf32>
    %94 = tpu.matmul %93, %77, %cst_26 {dimension_numbers = #tpu.dot_dimension_numbers<[2], [1], [1], [2], [0, 0, 0, 1, 1, 2], [0], [0]>} : vector<2x16x16xbf16>, vector<2x16x32xbf16>, vector<2x16x32xf32> -> vector<2x16x32xf32>
    %95 = vector.extract_strided_slice %14 {offsets = [0, 96], sizes = [32, 32], strides = [1, 1]} : vector<32x128xf32> to vector<32x32xf32>
    %96 = vector.shape_cast %95 : vector<32x32xf32> to vector<2x16x32xf32>
    %97 = arith.truncf %96 : vector<2x16x32xf32> to vector<2x16x32xbf16>
    %98 = vector.extract_strided_slice %15 {offsets = [0, 96], sizes = [32, 32], strides = [1, 1]} : vector<32x128xf32> to vector<32x32xf32>
    %99 = vector.shape_cast %98 : vector<32x32xf32> to vector<2x16x32xf32>
    %100 = arith.truncf %99 : vector<2x16x32xf32> to vector<2x16x32xbf16>
    %101 = vector.extract_strided_slice %16 {offsets = [0, 96], sizes = [32, 32], strides = [1, 1]} : vector<32x128xf32> to vector<32x32xf32>
    %102 = vector.shape_cast %101 : vector<32x32xf32> to vector<2x16x32xf32>
    %103 = arith.truncf %102 : vector<2x16x32xf32> to vector<2x16x32xbf16>
    %cst_27 = arith.constant dense<0.000000e+00> : vector<2x16x16xf32>
    %104 = tpu.matmul %97, %100, %cst_27 {dimension_numbers = #tpu.dot_dimension_numbers<[2], [2], [1], [1], [0, 0, 0, 1, 1, 1], [0], [0]>} : vector<2x16x32xbf16>, vector<2x16x32xbf16>, vector<2x16x16xf32> -> vector<2x16x16xf32>
    %cst_28 = arith.constant 0.176776692 : f32
    %105 = vector.broadcast %cst_28 : f32 to vector<2x16x16xf32>
    %106 = arith.mulf %104, %105 : vector<2x16x16xf32>
    %107 = vector.broadcast %3 : vector<2x1x16xf32> to vector<2x16x16xf32>
    %108 = arith.addf %106, %107 : vector<2x16x16xf32>
    %cst_29 = arith.constant dense<0xFF800000> : vector<2x16xf32>
    %109 = vector.multi_reduction <maximumf>, %108, %cst_29 [2] : vector<2x16x16xf32> to vector<2x16xf32>
    %110 = vector.shape_cast %109 : vector<2x16xf32> to vector<2x16x1xf32>
    %111 = vector.broadcast %110 : vector<2x16x1xf32> to vector<2x16x16xf32>
    %112 = arith.subf %108, %111 : vector<2x16x16xf32>
    %113 = math.exp %112 : vector<2x16x16xf32>
    %cst_30 = arith.constant dense<0.000000e+00> : vector<2x16xf32>
    %114 = vector.multi_reduction <add>, %113, %cst_30 [2] : vector<2x16x16xf32> to vector<2x16xf32>
    %115 = vector.shape_cast %114 : vector<2x16xf32> to vector<2x16x1xf32>
    %116 = tpu.reciprocal %115 {approx = true} : vector<2x16x1xf32> -> vector<2x16x1xf32>
    %117 = vector.broadcast %116 : vector<2x16x1xf32> to vector<2x16x16xf32>
    %118 = arith.mulf %113, %117 : vector<2x16x16xf32>
    %119 = arith.truncf %118 : vector<2x16x16xf32> to vector<2x16x16xbf16>
    %cst_31 = arith.constant dense<0.000000e+00> : vector<2x16x32xf32>
    %120 = tpu.matmul %119, %103, %cst_31 {dimension_numbers = #tpu.dot_dimension_numbers<[2], [1], [1], [2], [0, 0, 0, 1, 1, 2], [0], [0]>} : vector<2x16x16xbf16>, vector<2x16x32xbf16>, vector<2x16x32xf32> -> vector<2x16x32xf32>
    %121 = tpu.concatenate %42, %68, %94, %120 in 2 : vector<2x16x32xf32>, vector<2x16x32xf32>, vector<2x16x32xf32>, vector<2x16x32xf32> -> vector<2x16x128xf32>
    %122 = vector.shape_cast %121 : vector<2x16x128xf32> to vector<32x128xf32>
    %123 = arith.truncf %122 : vector<32x128xf32> to vector<32x128xbf16>
    %c0_32 = arith.constant 0 : index
    %c0_33 = arith.constant 0 : index
    %c0_34 = arith.constant 0 : index
    %124 = vector.load %arg5[%c0_32, %c0_33, %c0_34] : memref<1x128x128xbf16, #tpu.memory_space<vmem>>, vector<1x128x128xbf16>
    %125 = vector.shape_cast %124 : vector<1x128x128xbf16> to vector<128x128xbf16>
    %cst_35 = arith.constant dense<0.000000e+00> : vector<32x128xf32>
    %126 = tpu.matmul %123, %125, %cst_35 {dimension_numbers = #tpu.dot_dimension_numbers<[1], [0], [0], [1], [0, 0, 1, 1], [], []>} : vector<32x128xbf16>, vector<128x128xbf16>, vector<32x128xf32> -> vector<32x128xf32>
    %c0_36 = arith.constant 0 : index
    %c0_37 = arith.constant 0 : index
    %c0_38 = arith.constant 0 : index
    %127 = vector.load %arg6[%c0_36, %c0_37, %c0_38] : memref<1x1x128xf32, #tpu.memory_space<vmem>>, vector<1x1x128xf32>
    %128 = vector.shape_cast %127 : vector<1x1x128xf32> to vector<1x128xf32>
    %129 = vector.broadcast %128 : vector<1x128xf32> to vector<32x128xf32>
    %130 = arith.addf %126, %129 : vector<32x128xf32>
    %131 = arith.addf %130, %5 : vector<32x128xf32>
    %c0_39 = arith.constant 0 : index
    %c0_40 = arith.constant 0 : index
    %c0_41 = arith.constant 0 : index
    %132 = vector.load %arg7[%c0_39, %c0_40, %c0_41] : memref<1x1x128xf32, #tpu.memory_space<vmem>>, vector<1x1x128xf32>
    %133 = vector.shape_cast %132 : vector<1x1x128xf32> to vector<1x128xf32>
    %c0_42 = arith.constant 0 : index
    %c0_43 = arith.constant 0 : index
    %c0_44 = arith.constant 0 : index
    %134 = vector.load %arg8[%c0_42, %c0_43, %c0_44] : memref<1x1x128xf32, #tpu.memory_space<vmem>>, vector<1x1x128xf32>
    %135 = vector.shape_cast %134 : vector<1x1x128xf32> to vector<1x128xf32>
    %cst_45 = arith.constant dense<0.000000e+00> : vector<32xf32>
    %136 = vector.multi_reduction <add>, %131, %cst_45 [1] : vector<32x128xf32> to vector<32xf32>
    %137 = vector.shape_cast %136 : vector<32xf32> to vector<32x1xf32>
    %cst_46 = arith.constant 1.280000e+02 : f32
    %138 = vector.broadcast %cst_46 : f32 to vector<32x1xf32>
    %139 = arith.divf %137, %138 : vector<32x1xf32>
    %140 = vector.broadcast %139 : vector<32x1xf32> to vector<32x128xf32>
    %141 = arith.subf %131, %140 : vector<32x128xf32>
    %142 = arith.mulf %141, %141 : vector<32x128xf32>
    %cst_47 = arith.constant dense<0.000000e+00> : vector<32xf32>
    %143 = vector.multi_reduction <add>, %142, %cst_47 [1] : vector<32x128xf32> to vector<32xf32>
    %144 = vector.shape_cast %143 : vector<32xf32> to vector<32x1xf32>
    %cst_48 = arith.constant 1.280000e+02 : f32
    %145 = vector.broadcast %cst_48 : f32 to vector<32x1xf32>
    %146 = arith.divf %144, %145 : vector<32x1xf32>
    %147 = vector.broadcast %139 : vector<32x1xf32> to vector<32x128xf32>
    %148 = arith.subf %131, %147 : vector<32x128xf32>
    %cst_49 = arith.constant 9.99999996E-13 : f32
    %149 = vector.broadcast %cst_49 : f32 to vector<32x1xf32>
    %150 = arith.addf %146, %149 : vector<32x1xf32>
    %151 = math.rsqrt %150 : vector<32x1xf32>
    %152 = vector.broadcast %151 : vector<32x1xf32> to vector<32x128xf32>
    %153 = arith.mulf %148, %152 : vector<32x128xf32>
    %154 = vector.broadcast %133 : vector<1x128xf32> to vector<32x128xf32>
    %155 = arith.mulf %153, %154 : vector<32x128xf32>
    %156 = vector.broadcast %135 : vector<1x128xf32> to vector<32x128xf32>
    %157 = arith.addf %155, %156 : vector<32x128xf32>
    %158 = arith.truncf %157 : vector<32x128xf32> to vector<32x128xbf16>
    %c0_50 = arith.constant 0 : index
    %c0_51 = arith.constant 0 : index
    %c0_52 = arith.constant 0 : index
    %159 = vector.load %arg9[%c0_50, %c0_51, %c0_52] : memref<1x128x512xbf16, #tpu.memory_space<vmem>>, vector<1x128x512xbf16>
    %160 = vector.shape_cast %159 : vector<1x128x512xbf16> to vector<128x512xbf16>
    %cst_53 = arith.constant dense<0.000000e+00> : vector<32x512xf32>
    %161 = tpu.matmul %158, %160, %cst_53 {dimension_numbers = #tpu.dot_dimension_numbers<[1], [0], [0], [1], [0, 0, 1, 1], [], []>} : vector<32x128xbf16>, vector<128x512xbf16>, vector<32x512xf32> -> vector<32x512xf32>
    %c0_54 = arith.constant 0 : index
    %c0_55 = arith.constant 0 : index
    %c0_56 = arith.constant 0 : index
    %162 = vector.load %arg10[%c0_54, %c0_55, %c0_56] : memref<1x1x512xf32, #tpu.memory_space<vmem>>, vector<1x1x512xf32>
    %163 = vector.shape_cast %162 : vector<1x1x512xf32> to vector<1x512xf32>
    %164 = vector.broadcast %163 : vector<1x512xf32> to vector<32x512xf32>
    %165 = arith.addf %161, %164 : vector<32x512xf32>
    %cst_57 = arith.constant 5.000000e-01 : f32
    %166 = vector.broadcast %cst_57 : f32 to vector<32x512xf32>
    %167 = arith.mulf %166, %165 : vector<32x512xf32>
    %cst_58 = arith.constant 4.471500e-02 : f32
    %168 = vector.broadcast %cst_58 : f32 to vector<32x512xf32>
    %169 = arith.mulf %168, %165 : vector<32x512xf32>
    %170 = arith.mulf %169, %165 : vector<32x512xf32>
    %171 = arith.mulf %170, %165 : vector<32x512xf32>
    %172 = arith.addf %165, %171 : vector<32x512xf32>
    %cst_59 = arith.constant 0.797884583 : f32
    %173 = vector.broadcast %cst_59 : f32 to vector<32x512xf32>
    %174 = arith.mulf %173, %172 : vector<32x512xf32>
    %175 = math.tanh %174 : vector<32x512xf32>
    %cst_60 = arith.constant 1.000000e+00 : f32
    %176 = vector.broadcast %cst_60 : f32 to vector<32x512xf32>
    %177 = arith.addf %176, %175 : vector<32x512xf32>
    %178 = arith.mulf %167, %177 : vector<32x512xf32>
    %179 = arith.truncf %178 : vector<32x512xf32> to vector<32x512xbf16>
    %c0_61 = arith.constant 0 : index
    %c0_62 = arith.constant 0 : index
    %c0_63 = arith.constant 0 : index
    %180 = vector.load %arg11[%c0_61, %c0_62, %c0_63] : memref<1x512x128xbf16, #tpu.memory_space<vmem>>, vector<1x512x128xbf16>
    %181 = vector.shape_cast %180 : vector<1x512x128xbf16> to vector<512x128xbf16>
    %cst_64 = arith.constant dense<0.000000e+00> : vector<32x128xf32>
    %182 = tpu.matmul %179, %181, %cst_64 {dimension_numbers = #tpu.dot_dimension_numbers<[1], [0], [0], [1], [0, 0, 1, 1], [], []>} : vector<32x512xbf16>, vector<512x128xbf16>, vector<32x128xf32> -> vector<32x128xf32>
    %c0_65 = arith.constant 0 : index
    %c0_66 = arith.constant 0 : index
    %c0_67 = arith.constant 0 : index
    %183 = vector.load %arg12[%c0_65, %c0_66, %c0_67] : memref<1x1x128xf32, #tpu.memory_space<vmem>>, vector<1x1x128xf32>
    %184 = vector.shape_cast %183 : vector<1x1x128xf32> to vector<1x128xf32>
    %185 = vector.broadcast %184 : vector<1x128xf32> to vector<32x128xf32>
    %186 = arith.addf %182, %185 : vector<32x128xf32>
    %187 = arith.addf %186, %157 : vector<32x128xf32>
    %c0_68 = arith.constant 0 : index
    %c0_69 = arith.constant 0 : index
    %c0_70 = arith.constant 0 : index
    %188 = vector.load %arg13[%c0_68, %c0_69, %c0_70] : memref<1x1x128xf32, #tpu.memory_space<vmem>>, vector<1x1x128xf32>
    %189 = vector.shape_cast %188 : vector<1x1x128xf32> to vector<1x128xf32>
    %c0_71 = arith.constant 0 : index
    %c0_72 = arith.constant 0 : index
    %c0_73 = arith.constant 0 : index
    %190 = vector.load %arg14[%c0_71, %c0_72, %c0_73] : memref<1x1x128xf32, #tpu.memory_space<vmem>>, vector<1x1x128xf32>
    %191 = vector.shape_cast %190 : vector<1x1x128xf32> to vector<1x128xf32>
    %cst_74 = arith.constant dense<0.000000e+00> : vector<32xf32>
    %192 = vector.multi_reduction <add>, %187, %cst_74 [1] : vector<32x128xf32> to vector<32xf32>
    %193 = vector.shape_cast %192 : vector<32xf32> to vector<32x1xf32>
    %cst_75 = arith.constant 1.280000e+02 : f32
    %194 = vector.broadcast %cst_75 : f32 to vector<32x1xf32>
    %195 = arith.divf %193, %194 : vector<32x1xf32>
    %196 = vector.broadcast %195 : vector<32x1xf32> to vector<32x128xf32>
    %197 = arith.subf %187, %196 : vector<32x128xf32>
    %198 = arith.mulf %197, %197 : vector<32x128xf32>
    %cst_76 = arith.constant dense<0.000000e+00> : vector<32xf32>
    %199 = vector.multi_reduction <add>, %198, %cst_76 [1] : vector<32x128xf32> to vector<32xf32>
    %200 = vector.shape_cast %199 : vector<32xf32> to vector<32x1xf32>
    %cst_77 = arith.constant 1.280000e+02 : f32
    %201 = vector.broadcast %cst_77 : f32 to vector<32x1xf32>
    %202 = arith.divf %200, %201 : vector<32x1xf32>
    %203 = vector.broadcast %195 : vector<32x1xf32> to vector<32x128xf32>
    %204 = arith.subf %187, %203 : vector<32x128xf32>
    %cst_78 = arith.constant 9.99999996E-13 : f32
    %205 = vector.broadcast %cst_78 : f32 to vector<32x1xf32>
    %206 = arith.addf %202, %205 : vector<32x1xf32>
    %207 = math.rsqrt %206 : vector<32x1xf32>
    %208 = vector.broadcast %207 : vector<32x1xf32> to vector<32x128xf32>
    %209 = arith.mulf %204, %208 : vector<32x128xf32>
    %210 = vector.broadcast %189 : vector<1x128xf32> to vector<32x128xf32>
    %211 = arith.mulf %209, %210 : vector<32x128xf32>
    %212 = vector.broadcast %191 : vector<1x128xf32> to vector<32x128xf32>
    %213 = arith.addf %211, %212 : vector<32x128xf32>
    %214 = vector.shape_cast %213 : vector<32x128xf32> to vector<2x16x128xf32>
    %c0_79 = arith.constant 0 : index
    %c0_80 = arith.constant 0 : index
    %c0_81 = arith.constant 0 : index
    %215 = vector.load %arg15[%c0_79, %c0_80, %c0_81] : memref<2x16x128xf32, #tpu.memory_space<vmem>>, vector<2x16x128xf32>
    tpu.vector_store %arg15[%c0_79, %c0_80, %c0_81], %214 {strides = array<i32>} : memref<2x16x128xf32, #tpu.memory_space<vmem>>, vector<2x16x128xf32>,
    return
  }
  func.func @transform_0(%arg0: i32) -> (i32, i32, i32) {
    %c0_i32 = arith.constant 0 : i32
    %c0_i32_0 = arith.constant 0 : i32
    %c0_i32_1 = arith.constant 0 : i32
    %c0_i32_2 = arith.constant 0 : i32
    return %c0_i32, %c0_i32_0, %c0_i32_1 : i32, i32, i32
  }
  func.func @transform_1(%arg0: i32) -> (i32, i32, i32) {
    %c0_i32 = arith.constant 0 : i32
    %c0_i32_0 = arith.constant 0 : i32
    %c0_i32_1 = arith.constant 0 : i32
    %c0_i32_2 = arith.constant 0 : i32
    return %c0_i32, %c0_i32_0, %c0_i32_1 : i32, i32, i32
  }
  func.func @transform_2(%arg0: i32) -> (i32, i32, i32) {
    %c0_i32 = arith.constant 0 : i32
    %c0_i32_0 = arith.constant 0 : i32
    %c0_i32_1 = arith.constant 0 : i32
    return %arg0, %c0_i32, %c0_i32_0 : i32, i32, i32
  }
  func.func @transform_3(%arg0: i32) -> (i32, i32, i32) {
    %c0_i32 = arith.constant 0 : i32
    %c0_i32_0 = arith.constant 0 : i32
    %c0_i32_1 = arith.constant 0 : i32
    return %arg0, %c0_i32, %c0_i32_0 : i32, i32, i32
  }
  func.func @transform_4(%arg0: i32) -> (i32, i32, i32) {
    %c0_i32 = arith.constant 0 : i32
    %c0_i32_0 = arith.constant 0 : i32
    %c0_i32_1 = arith.constant 0 : i32
    return %arg0, %c0_i32, %c0_i32_0 : i32, i32, i32
  }
  func.func @transform_5(%arg0: i32) -> (i32, i32, i32) {
    %c0_i32 = arith.constant 0 : i32
    %c0_i32_0 = arith.constant 0 : i32
    %c0_i32_1 = arith.constant 0 : i32
    return %arg0, %c0_i32, %c0_i32_0 : i32, i32, i32
  }
  func.func @transform_6(%arg0: i32) -> (i32, i32, i32) {
    %c0_i32 = arith.constant 0 : i32
    %c0_i32_0 = arith.constant 0 : i32
    %c0_i32_1 = arith.constant 0 : i32
    return %arg0, %c0_i32, %c0_i32_0 : i32, i32, i32
  }
  func.func @transform_7(%arg0: i32) -> (i32, i32, i32) {
    %c0_i32 = arith.constant 0 : i32
    %c0_i32_0 = arith.constant 0 : i32
    %c0_i32_1 = arith.constant 0 : i32
    return %arg0, %c0_i32, %c0_i32_0 : i32, i32, i32
  }
  func.func @transform_8(%arg0: i32) -> (i32, i32, i32) {
    %c0_i32 = arith.constant 0 : i32
    %c0_i32_0 = arith.constant 0 : i32
    %c0_i32_1 = arith.constant 0 : i32
    return %arg0, %c0_i32, %c0_i32_0 : i32, i32, i32
  }
  func.func @transform_9(%arg0: i32) -> (i32, i32, i32) {
    %c0_i32 = arith.constant 0 : i32
    %c0_i32_0 = arith.constant 0 : i32
    %c0_i32_1 = arith.constant 0 : i32
    return %arg0, %c0_i32, %c0_i32_0 : i32, i32, i32
  }
  func.func @transform_10(%arg0: i32) -> (i32, i32, i32) {
    %c0_i32 = arith.constant 0 : i32
    %c0_i32_0 = arith.constant 0 : i32
    %c0_i32_1 = arith.constant 0 : i32
    return %arg0, %c0_i32, %c0_i32_0 : i32, i32, i32
  }
  func.func @transform_11(%arg0: i32) -> (i32, i32, i32) {
    %c0_i32 = arith.constant 0 : i32
    %c0_i32_0 = arith.constant 0 : i32
    %c0_i32_1 = arith.constant 0 : i32
    return %arg0, %c0_i32, %c0_i32_0 : i32, i32, i32
  }
  func.func @transform_12(%arg0: i32) -> (i32, i32, i32) {
    %c0_i32 = arith.constant 0 : i32
    %c0_i32_0 = arith.constant 0 : i32
    %c0_i32_1 = arith.constant 0 : i32
    return %arg0, %c0_i32, %c0_i32_0 : i32, i32, i32
  }
  func.func @transform_13(%arg0: i32) -> (i32, i32, i32) {
    %c0_i32 = arith.constant 0 : i32
    %c0_i32_0 = arith.constant 0 : i32
    %c0_i32_1 = arith.constant 0 : i32
    return %arg0, %c0_i32, %c0_i32_0 : i32, i32, i32
  }
  func.func @transform_14(%arg0: i32) -> (i32, i32, i32) {
    %c0_i32 = arith.constant 0 : i32
    %c0_i32_0 = arith.constant 0 : i32
    %c0_i32_1 = arith.constant 0 : i32
    %c0_i32_2 = arith.constant 0 : i32
    return %c0_i32, %c0_i32_0, %c0_i32_1 : i32, i32, i32
  }
}

</mosaic_0001>

<llo_original>
// kernel: tpu_custom_call.1
$region0: #{tpu_custom_call.1}
  #allocation0 [shape = 'u32[]', space=smem, size = 0x4, offset = 0x4, fixed_abs, tag = 'smem constant byte address 0x4 - core index']
  #allocation1 [shape = 'u32[144,128]{1,0:T(1,128)}', space=vmem, size = 0x12000, scoped, tag = 'internal scratch']
  %s0 = inlined_call_operand.hbm [shape: f32[2,1,16], index: 0, kind: input, shape index: {}]
  %s1 = inlined_call_operand.hbm [shape: f32[2,16,128], index: 1, kind: input, shape index: {}]
  %s2 = inlined_call_operand.hbm [shape: bf16[2,128,384], index: 2, kind: input, shape index: {}]
  %s3 = inlined_call_operand.hbm [shape: f32[2,1,384], index: 3, kind: input, shape index: {}]
  %s4 = inlined_call_operand.hbm [shape: bf16[2,128,128], index: 4, kind: input, shape index: {}]
  %s5 = inlined_call_operand.vmem [shape: f32[2,1,128], index: 5, kind: input, shape index: {}]
  %s6 = inlined_call_operand.vmem [shape: f32[2,1,128], index: 6, kind: input, shape index: {}]
  %s7 = inlined_call_operand.vmem [shape: f32[2,1,128], index: 7, kind: input, shape index: {}]
  %s8 = inlined_call_operand.hbm [shape: bf16[2,128,512], index: 8, kind: input, shape index: {}]
  %s9 = inlined_call_operand.vmem [shape: f32[2,1,512], index: 9, kind: input, shape index: {}]
  %s10 = inlined_call_operand.hbm [shape: bf16[2,512,128], index: 10, kind: input, shape index: {}]
  %s11 = inlined_call_operand.vmem [shape: f32[2,1,128], index: 11, kind: input, shape index: {}]
  %s12 = inlined_call_operand.vmem [shape: f32[2,1,128], index: 12, kind: input, shape index: {}]
  %s13 = inlined_call_operand.vmem [shape: f32[2,1,128], index: 13, kind: input, shape index: {}]
  %s14 = inlined_call_operand.hbm [shape: f32[2,16,128], index: 14, kind: output, shape index: {}]
  %s15 = sld [smem:[#allocation0]]
  $region121: #{tpu_custom_call.1} parent=0
    _
  %s17 = ssub.s32 1, %s15
  %s18 = scalar_select 0, %s17, %s15
  $region1: #{tpu_custom_call.1} parent=0
    #allocation2 [shape = 'u8[1024]{0}', space=vmem, size = 0x400, scoped, tag = 'input window, operand 0, single buffered']
    #allocation3 [shape = 's32[2]{0}', space=sflag, size = 0x8, scoped, tag = 'scoped memory for tpu_custom_call.1']
    #allocation4 [shape = 's32[2]{0}', space=sflag, size = 0x8, scoped, tag = 'scoped memory for tpu_custom_call.1']
    #allocation5 [shape = 'u8[16384]{0}', space=vmem, size = 0x4000, scoped, tag = 'input window, operand 1, single buffered']
    #allocation6 [shape = 's32[1]{0}', space=sflag, size = 0x4, scoped, tag = 'scoped memory for tpu_custom_call.1']
    #allocation7 [shape = 'u8[196608]{0}', space=vmem, size = 0x30000, scoped, tag = 'input window, operand 2']
    #allocation8 [shape = 'u8[3072]{0}', space=vmem, size = 0xc00, scoped, tag = 'input window, operand 3']
    #allocation9 [shape = 'u8[65536]{0}', space=vmem, size = 0x10000, scoped, tag = 'input window, operand 4']
    #allocation10 [shape = 'u8[262144]{0}', space=vmem, size = 0x40000, scoped, tag = 'input window, operand 8']
    #allocation11 [shape = 'u8[262144]{0}', space=vmem, size = 0x40000, scoped, tag = 'input window, operand 10']
    #allocation12 [shape = 'u8[16384]{0}', space=vmem, size = 0x4000, scoped, tag = 'output window, operand 0, single buffered']
    %19 = vsyncpa [#allocation3], 0
    %20 = vsyncpa [#allocation6], 0
    %21 = vsyncpa [#allocation4], 0
    loop: start=0, step=1, limit=4
    $region2: #{tpu_custom_call.1} parent=1 // loop_pre_header
      _
    $region3: #{tpu_custom_call.1} parent=1 // loop_header
      %s23 = sphi 0, %s27
      %p24 = scmp.ge.s32.totalorder %s23, 4
      %s31 = sphi 0, %s31
      %s33 = sphi 0, %s31
      %s34 = sphi 0, %s33
      %s48 = sphi 0, %s34
      %s52 = sphi 0, %s52
      %s54 = sphi 0, %s52
      %s55 = sphi 0, %s54
      %s69 = sphi 0, %s55
      %s75 = sphi 0, %s77
      %s78 = sphi 0, %s75
      %s79 = sphi 0, %s78
      %s95 = sphi 0, %s79
      %s101 = sphi 0, %s103
      %s104 = sphi 0, %s101
      %s105 = sphi 0, %s104
      %s121 = sphi 0, %s105
      %s127 = sphi 0, %s129
      %s130 = sphi 0, %s127
      %s131 = sphi 0, %s130
      %s147 = sphi 0, %s131
      %s153 = sphi 0, %s155
      %s156 = sphi 0, %s153
      %s157 = sphi 0, %s156
      %s173 = sphi 0, %s157
      %s179 = sphi 0, %s181
      %s182 = sphi 0, %s179
      %s183 = sphi 0, %s182
      %s199 = sphi 0, %s183
      %s205 = sphi 0, %s207
      %s208 = sphi 0, %s205
      %s209 = sphi 0, %s208
      %s225 = sphi 0, %s209
      %s231 = sphi 0, %s233
      %s234 = sphi 0, %s231
      %s235 = sphi 0, %s234
      %s251 = sphi 0, %s235
      %s257 = sphi 0, %s259
      %s260 = sphi 0, %s257
      %s261 = sphi 0, %s260
      %s277 = sphi 0, %s261
      %s283 = sphi 0, %s285
      %s286 = sphi 0, %s283
      %s287 = sphi 0, %s286
      %s303 = sphi 0, %s287
      %s309 = sphi 0, %s311
      %s312 = sphi 0, %s309
      %s313 = sphi 0, %s312
      %s329 = sphi 0, %s313
      %s335 = sphi 0, %s337
      %s338 = sphi 0, %s335
      %s339 = sphi 0, %s338
      %s355 = sphi 0, %s339
      %s361 = sphi 0, %s363
      %s364 = sphi 0, %s361
      %s365 = sphi 0, %s364
      %s381 = sphi 0, %s365
      %s385 = sphi 0, %s385
      %s387 = sphi 0, %s385
      %s388 = sphi 0, %s387
      %s402 = sphi 0, %s388
    $region4: #{tpu_custom_call.1} parent=1 // loop_header_branch
      %26 = sbr.rel (%p24) target = $region8
    $region5: #{tpu_custom_call.1} parent=1 // loop_body
      %s28 = ssub.s32 %s23, 1
      %s29 = ssub.s32 %s23, 2
      %s30 = sadd.s32 %s23, 1
      %s32 = sadd.s32 %s31, 1
      %p35 = scmp.eq.s32.totalorder %s23, 1
      %p36 = scmp.ne.s32.totalorder %s31, %s33
      %p37 = scmp.eq.s32.totalorder %s23, 0
      %p38 = por %p36, %p37
      %p39 = scmp.ne.s32.totalorder %s31, %s33
      %p40 = scmp.eq.s32.totalorder %s28, 1
      %p41 = por %p39, %p40
      %p42 = scmp.ne.s32.totalorder %s33, %s34
      %p43 = scmp.eq.s32.totalorder %s28, 0
      %p44 = por %p42, %p43
      %p45 = scmp.ne.s32.totalorder %s33, %s34
      %p46 = scmp.eq.s32.totalorder %s29, 1
      %p47 = por %p45, %p46
      %p49 = scmp.ne.s32.totalorder %s34, %s48
      %p50 = scmp.eq.s32.totalorder %s29, 0
      %p51 = por %p49, %p50
      %s53 = sadd.s32 %s52, 1
      %p56 = scmp.eq.s32.totalorder %s23, 1
      %p57 = scmp.ne.s32.totalorder %s52, %s54
      %p58 = scmp.eq.s32.totalorder %s23, 0
      %p59 = por %p57, %p58
      %p60 = scmp.ne.s32.totalorder %s52, %s54
      %p61 = scmp.eq.s32.totalorder %s28, 1
      %p62 = por %p60, %p61
      %p63 = scmp.ne.s32.totalorder %s54, %s55
      %p64 = scmp.eq.s32.totalorder %s28, 0
      %p65 = por %p63, %p64
      %p66 = scmp.ne.s32.totalorder %s54, %s55
      %p67 = scmp.eq.s32.totalorder %s29, 1
      %p68 = por %p66, %p67
      %p70 = scmp.ne.s32.totalorder %s55, %s69
      %p71 = scmp.eq.s32.totalorder %s29, 0
      %p72 = por %p70, %p71
      %s73 = ssub.s32 %s23, %s30
      %p74 = scmp.eq.s32.totalorder %s73, 0
      %s76 = sadd.s32 %s75, 1
      %s77 = scalar_select %p74, %s75, %s76
      %p80 = pneg %p74
      %p81 = scmp.eq.s32.totalorder %s23, 1
      %p82 = por %p80, %p81
      %p83 = scmp.ne.s32.totalorder %s75, %s78
      %p84 = scmp.eq.s32.totalorder %s23, 0
      %p85 = por %p83, %p84
      %p86 = scmp.ne.s32.totalorder %s75, %s78
      %p87 = scmp.eq.s32.totalorder %s28, 1
      %p88 = por %p86, %p87
      %p89 = scmp.ne.s32.totalorder %s78, %s79
      %p90 = scmp.eq.s32.totalorder %s28, 0
      %p91 = por %p89, %p90
      %p92 = scmp.ne.s32.totalorder %s78, %s79
      %p93 = scmp.eq.s32.totalorder %s29, 1
      %p94 = por %p92, %p93
      %p96 = scmp.ne.s32.totalorder %s79, %s95
      %p97 = scmp.eq.s32.totalorder %s29, 0
      %p98 = por %p96, %p97
      %s99 = ssub.s32 %s23, %s30
      %p100 = scmp.eq.s32.totalorder %s99, 0
      %s102 = sadd.s32 %s101, 1
      %s103 = scalar_select %p100, %s101, %s102
      %p106 = pneg %p100
      %p107 = scmp.eq.s32.totalorder %s23, 1
      %p108 = por %p106, %p107
      %p109 = scmp.ne.s32.totalorder %s101, %s104
      %p110 = scmp.eq.s32.totalorder %s23, 0
      %p111 = por %p109, %p110
      %p112 = scmp.ne.s32.totalorder %s101, %s104
      %p113 = scmp.eq.s32.totalorder %s28, 1
      %p114 = por %p112, %p113
      %p115 = scmp.ne.s32.totalorder %s104, %s105
      %p116 = scmp.eq.s32.totalorder %s28, 0
      %p117 = por %p115, %p116
      %p118 = scmp.ne.s32.totalorder %s104, %s105
      %p119 = scmp.eq.s32.totalorder %s29, 1
      %p120 = por %p118, %p119
      %p122 = scmp.ne.s32.totalorder %s105, %s121
      %p123 = scmp.eq.s32.totalorder %s29, 0
      %p124 = por %p122, %p123
      %s125 = ssub.s32 %s23, %s30
      %p126 = scmp.eq.s32.totalorder %s125, 0
      %s128 = sadd.s32 %s127, 1
      %s129 = scalar_select %p126, %s127, %s128
      %p132 = pneg %p126
      %p133 = scmp.eq.s32.totalorder %s23, 1
      %p134 = por %p132, %p133
      %p135 = scmp.ne.s32.totalorder %s127, %s130
      %p136 = scmp.eq.s32.totalorder %s23, 0
      %p137 = por %p135, %p136
      %p138 = scmp.ne.s32.totalorder %s127, %s130
      %p139 = scmp.eq.s32.totalorder %s28, 1
      %p140 = por %p138, %p139
      %p141 = scmp.ne.s32.totalorder %s130, %s131
      %p142 = scmp.eq.s32.totalorder %s28, 0
      %p143 = por %p141, %p142
      %p144 = scmp.ne.s32.totalorder %s130, %s131
      %p145 = scmp.eq.s32.totalorder %s29, 1
      %p146 = por %p144, %p145
      %p148 = scmp.ne.s32.totalorder %s131, %s147
      %p149 = scmp.eq.s32.totalorder %s29, 0
      %p150 = por %p148, %p149
      %s151 = ssub.s32 %s23, %s30
      %p152 = scmp.eq.s32.totalorder %s151, 0
      %s154 = sadd.s32 %s153, 1
      %s155 = scalar_select %p152, %s153, %s154
      %p158 = pneg %p152
      %p159 = scmp.eq.s32.totalorder %s23, 1
      %p160 = por %p158, %p159
      %p161 = scmp.ne.s32.totalorder %s153, %s156
      %p162 = scmp.eq.s32.totalorder %s23, 0
      %p163 = por %p161, %p162
      %p164 = scmp.ne.s32.totalorder %s153, %s156
      %p165 = scmp.eq.s32.totalorder %s28, 1
      %p166 = por %p164, %p165
      %p167 = scmp.ne.s32.totalorder %s156, %s157
      %p168 = scmp.eq.s32.totalorder %s28, 0
      %p169 = por %p167, %p168
      %p170 = scmp.ne.s32.totalorder %s156, %s157
      %p171 = scmp.eq.s32.totalorder %s29, 1
      %p172 = por %p170, %p171
      %p174 = scmp.ne.s32.totalorder %s157, %s173
      %p175 = scmp.eq.s32.totalorder %s29, 0
      %p176 = por %p174, %p175
      %s177 = ssub.s32 %s23, %s30
      %p178 = scmp.eq.s32.totalorder %s177, 0
      %s180 = sadd.s32 %s179, 1
      %s181 = scalar_select %p178, %s179, %s180
      %p184 = pneg %p178
      %p185 = scmp.eq.s32.totalorder %s23, 1
      %p186 = por %p184, %p185
      %p187 = scmp.ne.s32.totalorder %s179, %s182
      %p188 = scmp.eq.s32.totalorder %s23, 0
      %p189 = por %p187, %p188
      %p190 = scmp.ne.s32.totalorder %s179, %s182
      %p191 = scmp.eq.s32.totalorder %s28, 1
      %p192 = por %p190, %p191
      %p193 = scmp.ne.s32.totalorder %s182, %s183
      %p194 = scmp.eq.s32.totalorder %s28, 0
      %p195 = por %p193, %p194
      %p196 = scmp.ne.s32.totalorder %s182, %s183
      %p197 = scmp.eq.s32.totalorder %s29, 1
      %p198 = por %p196, %p197
      %p200 = scmp.ne.s32.totalorder %s183, %s199
      %p201 = scmp.eq.s32.totalorder %s29, 0
      %p202 = por %p200, %p201
      %s203 = ssub.s32 %s23, %s30
      %p204 = scmp.eq.s32.totalorder %s203, 0
      %s206 = sadd.s32 %s205, 1
      %s207 = scalar_select %p204, %s205, %s206
      %p210 = pneg %p204
      %p211 = scmp.eq.s32.totalorder %s23, 1
      %p212 = por %p210, %p211
      %p213 = scmp.ne.s32.totalorder %s205, %s208
      %p214 = scmp.eq.s32.totalorder %s23, 0
      %p215 = por %p213, %p214
      %p216 = scmp.ne.s32.totalorder %s205, %s208
      %p217 = scmp.eq.s32.totalorder %s28, 1
      %p218 = por %p216, %p217
      %p219 = scmp.ne.s32.totalorder %s208, %s209
      %p220 = scmp.eq.s32.totalorder %s28, 0
      %p221 = por %p219, %p220
      %p222 = scmp.ne.s32.totalorder %s208, %s209
      %p223 = scmp.eq.s32.totalorder %s29, 1
      %p224 = por %p222, %p223
      %p226 = scmp.ne.s32.totalorder %s209, %s225
      %p227 = scmp.eq.s32.totalorder %s29, 0
      %p228 = por %p226, %p227
      %s229 = ssub.s32 %s23, %s30
      %p230 = scmp.eq.s32.totalorder %s229, 0
      %s232 = sadd.s32 %s231, 1
      %s233 = scalar_select %p230, %s231, %s232
      %p236 = pneg %p230
      %p237 = scmp.eq.s32.totalorder %s23, 1
      %p238 = por %p236, %p237
      %p239 = scmp.ne.s32.totalorder %s231, %s234
      %p240 = scmp.eq.s32.totalorder %s23, 0
      %p241 = por %p239, %p240
      %p242 = scmp.ne.s32.totalorder %s231, %s234
      %p243 = scmp.eq.s32.totalorder %s28, 1
      %p244 = por %p242, %p243
      %p245 = scmp.ne.s32.totalorder %s234, %s235
      %p246 = scmp.eq.s32.totalorder %s28, 0
      %p247 = por %p245, %p246
      %p248 = scmp.ne.s32.totalorder %s234, %s235
      %p249 = scmp.eq.s32.totalorder %s29, 1
      %p250 = por %p248, %p249
      %p252 = scmp.ne.s32.totalorder %s235, %s251
      %p253 = scmp.eq.s32.totalorder %s29, 0
      %p254 = por %p252, %p253
      %s255 = ssub.s32 %s23, %s30
      %p256 = scmp.eq.s32.totalorder %s255, 0
      %s258 = sadd.s32 %s257, 1
      %s259 = scalar_select %p256, %s257, %s258
      %p262 = pneg %p256
      %p263 = scmp.eq.s32.totalorder %s23, 1
      %p264 = por %p262, %p263
      %p265 = scmp.ne.s32.totalorder %s257, %s260
      %p266 = scmp.eq.s32.totalorder %s23, 0
      %p267 = por %p265, %p266
      %p268 = scmp.ne.s32.totalorder %s257, %s260
      %p269 = scmp.eq.s32.totalorder %s28, 1
      %p270 = por %p268, %p269
      %p271 = scmp.ne.s32.totalorder %s260, %s261
      %p272 = scmp.eq.s32.totalorder %s28, 0
      %p273 = por %p271, %p272
      %p274 = scmp.ne.s32.totalorder %s260, %s261
      %p275 = scmp.eq.s32.totalorder %s29, 1
      %p276 = por %p274, %p275
      %p278 = scmp.ne.s32.totalorder %s261, %s277
      %p279 = scmp.eq.s32.totalorder %s29, 0
      %p280 = por %p278, %p279
      %s281 = ssub.s32 %s23, %s30
      %p282 = scmp.eq.s32.totalorder %s281, 0
      %s284 = sadd.s32 %s283, 1
      %s285 = scalar_select %p282, %s283, %s284
      %p288 = pneg %p282
      %p289 = scmp.eq.s32.totalorder %s23, 1
      %p290 = por %p288, %p289
      %p291 = scmp.ne.s32.totalorder %s283, %s286
      %p292 = scmp.eq.s32.totalorder %s23, 0
      %p293 = por %p291, %p292
      %p294 = scmp.ne.s32.totalorder %s283, %s286
      %p295 = scmp.eq.s32.totalorder %s28, 1
      %p296 = por %p294, %p295
      %p297 = scmp.ne.s32.totalorder %s286, %s287
      %p298 = scmp.eq.s32.totalorder %s28, 0
      %p299 = por %p297, %p298
      %p300 = scmp.ne.s32.totalorder %s286, %s287
      %p301 = scmp.eq.s32.totalorder %s29, 1
      %p302 = por %p300, %p301
      %p304 = scmp.ne.s32.totalorder %s287, %s303
      %p305 = scmp.eq.s32.totalorder %s29, 0
      %p306 = por %p304, %p305
      %s307 = ssub.s32 %s23, %s30
      %p308 = scmp.eq.s32.totalorder %s307, 0
      %s310 = sadd.s32 %s309, 1
      %s311 = scalar_select %p308, %s309, %s310
      %p314 = pneg %p308
      %p315 = scmp.eq.s32.totalorder %s23, 1
      %p316 = por %p314, %p315
      %p317 = scmp.ne.s32.totalorder %s309, %s312
      %p318 = scmp.eq.s32.totalorder %s23, 0
      %p319 = por %p317, %p318
      %p320 = scmp.ne.s32.totalorder %s309, %s312
      %p321 = scmp.eq.s32.totalorder %s28, 1
      %p322 = por %p320, %p321
      %p323 = scmp.ne.s32.totalorder %s312, %s313
      %p324 = scmp.eq.s32.totalorder %s28, 0
      %p325 = por %p323, %p324
      %p326 = scmp.ne.s32.totalorder %s312, %s313
      %p327 = scmp.eq.s32.totalorder %s29, 1
      %p328 = por %p326, %p327
      %p330 = scmp.ne.s32.totalorder %s313, %s329
      %p331 = scmp.eq.s32.totalorder %s29, 0
      %p332 = por %p330, %p331
      %s333 = ssub.s32 %s23, %s30
      %p334 = scmp.eq.s32.totalorder %s333, 0
      %s336 = sadd.s32 %s335, 1
      %s337 = scalar_select %p334, %s335, %s336
      %p340 = pneg %p334
      %p341 = scmp.eq.s32.totalorder %s23, 1
      %p342 = por %p340, %p341
      %p343 = scmp.ne.s32.totalorder %s335, %s338
      %p344 = scmp.eq.s32.totalorder %s23, 0
      %p345 = por %p343, %p344
      %p346 = scmp.ne.s32.totalorder %s335, %s338
      %p347 = scmp.eq.s32.totalorder %s28, 1
      %p348 = por %p346, %p347
      %p349 = scmp.ne.s32.totalorder %s338, %s339
      %p350 = scmp.eq.s32.totalorder %s28, 0
      %p351 = por %p349, %p350
      %p352 = scmp.ne.s32.totalorder %s338, %s339
      %p353 = scmp.eq.s32.totalorder %s29, 1
      %p354 = por %p352, %p353
      %p356 = scmp.ne.s32.totalorder %s339, %s355
      %p357 = scmp.eq.s32.totalorder %s29, 0
      %p358 = por %p356, %p357
      %s359 = ssub.s32 %s23, %s30
      %p360 = scmp.eq.s32.totalorder %s359, 0
      %s362 = sadd.s32 %s361, 1
      %s363 = scalar_select %p360, %s361, %s362
      %p366 = pneg %p360
      %p367 = scmp.eq.s32.totalorder %s23, 1
      %p368 = por %p366, %p367
      %p369 = scmp.ne.s32.totalorder %s361, %s364
      %p370 = scmp.eq.s32.totalorder %s23, 0
      %p371 = por %p369, %p370
      %p372 = scmp.ne.s32.totalorder %s361, %s364
      %p373 = scmp.eq.s32.totalorder %s28, 1
      %p374 = por %p372, %p373
      %p375 = scmp.ne.s32.totalorder %s364, %s365
      %p376 = scmp.eq.s32.totalorder %s28, 0
      %p377 = por %p375, %p376
      %p378 = scmp.ne.s32.totalorder %s364, %s365
      %p379 = scmp.eq.s32.totalorder %s29, 1
      %p380 = por %p378, %p379
      %p382 = scmp.ne.s32.totalorder %s365, %s381
      %p383 = scmp.eq.s32.totalorder %s29, 0
      %p384 = por %p382, %p383
      %s386 = sadd.s32 %s385, 1
      %p389 = scmp.eq.s32.totalorder %s23, 1
      %p390 = scmp.ne.s32.totalorder %s385, %s387
      %p391 = scmp.eq.s32.totalorder %s23, 0
      %p392 = por %p390, %p391
      %p393 = scmp.ne.s32.totalorder %s385, %s387
      %p394 = scmp.eq.s32.totalorder %s28, 1
      %p395 = por %p393, %p394
      %p396 = scmp.ne.s32.totalorder %s387, %s388
      %p397 = scmp.eq.s32.totalorder %s28, 0
      %p398 = por %p396, %p397
      %p399 = scmp.ne.s32.totalorder %s387, %s388
      %p400 = scmp.eq.s32.totalorder %s29, 1
      %p401 = por %p399, %p400
      %p403 = scmp.ne.s32.totalorder %s388, %s402
      %p404 = scmp.eq.s32.totalorder %s29, 0
      %p405 = por %p403, %p404
      %p406 = scmp.le.s32.totalorder 1, %s23
      %p407 = scmp.lt.s32.totalorder %s23, 3
      %p408 = pnand %p406, %p407
      %p409 = pneg %p408
      // Predicated region
      $region9: #{tpu_custom_call.1} parent=5 // pred_check
        _
      $region10: #{tpu_custom_call.1} parent=5 // pred_check_branch
        %411 = sbr.rel (%p408) target = $region12
      $region11: #{tpu_custom_call.1} parent=5 // pred_region
        %s412 = ssub.s32 %s23, 1
        // Predicated region
        $region13: #{tpu_custom_call.1} parent=11 // pred_check
          %p413 = pneg %p44
        $region14: #{tpu_custom_call.1} parent=11 // pred_check_branch
          %415 = sbr.rel (%p413) target = $region16
        $region15: #{tpu_custom_call.1} parent=11 // pred_region
          %s417 = ssub.s32 32, 32
          %418 = vsyncadd [#allocation3], %s417
          %s419 = sshll.u32 [#allocation2], 4
          %s420 = int_to_ptr.vmem [resolvable:$true] %s419
          %425 = dma.hbm_to_vmem [thread:$0]  %s0, 32, %s420, [#allocation3], 16, 16, 1
        $region16: #{tpu_custom_call.1} parent=11 // pred_fallthru
          _
        // Predicated region
        $region17: #{tpu_custom_call.1} parent=11 // pred_check
          %p426 = pneg %p65
        $region18: #{tpu_custom_call.1} parent=11 // pred_check_branch
          %428 = sbr.rel (%p426) target = $region20
        $region19: #{tpu_custom_call.1} parent=11 // pred_region
          %s430 = ssub.s32 512, 512
          %431 = vsyncadd [#allocation6], %s430
          %s432 = sshll.u32 [#allocation5], 4
          %s433 = int_to_ptr.vmem [resolvable:$true] %s432
          %438 = dma.hbm_to_vmem [thread:$0]  %s1, 512, %s433, [#allocation6], 128, 128, 8
        $region20: #{tpu_custom_call.1} parent=11 // pred_fallthru
          _
      $region12: #{tpu_custom_call.1} parent=5 // pred_fallthru
        _
      %p439 = scmp.lt.s32.totalorder %s23, 2
      // Predicated region
      $region21: #{tpu_custom_call.1} parent=5 // pred_check
        %p440 = pneg %p439
      $region22: #{tpu_custom_call.1} parent=5 // pred_check_branch
        %442 = sbr.rel (%p440) target = $region24
      $region23: #{tpu_custom_call.1} parent=5 // pred_region
        // Predicated region
        $region25: #{tpu_custom_call.1} parent=23 // pred_check
          %p443 = pneg %p85
        $region26: #{tpu_custom_call.1} parent=23 // pred_check_branch
          %445 = sbr.rel (%p443) target = $region28
        $region27: #{tpu_custom_call.1} parent=23 // pred_region
          %s446 = sand.u32 %s23, 1
          %s447 = scalar_lea.sflag [#allocation3], %s446
          %s448 = sand.u32 %s75, 1
          %s449 = smul.addr %s448, 192
          %s450 = scalar_lea.vmem [#allocation7], %s449
          %s452 = ssub.s32 3072, 3072
          %453 = vsyncadd %s447, %s452
          %s454 = smul.addr %s23, 48
          %s455 = smul.addr %s454, 64
          %s456 = scalar_lea.hbm %s2, %s455
          %s457 = sshll.u32 %s450, 4
          %s458 = int_to_ptr.vmem [resolvable:$true] %s457
          %463 = dma.hbm_to_vmem [thread:$0]  %s456, 3072, %s458, %s447, 192, 192, 12
        $region28: #{tpu_custom_call.1} parent=23 // pred_fallthru
          _
        // Predicated region
        $region29: #{tpu_custom_call.1} parent=23 // pred_check
          %p464 = pneg %p111
        $region30: #{tpu_custom_call.1} parent=23 // pred_check_branch
          %466 = sbr.rel (%p464) target = $region32
        $region31: #{tpu_custom_call.1} parent=23 // pred_region
          %s467 = sand.u32 %s23, 1
          %s468 = scalar_lea.sflag [#allocation3], %s467
          %s469 = sand.u32 %s101, 1
          %s470 = smul.addr %s469, 3
          %s471 = scalar_lea.vmem [#allocation8], %s470
          %s473 = ssub.s32 48, 48
          %474 = vsyncadd %s468, %s473
          %s475 = smul.addr %s23, 3
          %s476 = smul.addr %s475, 16
          %s477 = scalar_lea.hbm %s3, %s476
          %s479 = sshll.u32 %s471, 4
          %s480 = int_to_ptr.vmem [resolvable:$true] %s479
          %482 = dma.hbm_to_vmem [thread:$0]  %s477, 48, %s480, %s468
        $region32: #{tpu_custom_call.1} parent=23 // pred_fallthru
          _
        // Predicated region
        $region33: #{tpu_custom_call.1} parent=23 // pred_check
          %p483 = pneg %p137
        $region34: #{tpu_custom_call.1} parent=23 // pred_check_branch
          %485 = sbr.rel (%p483) target = $region36
        $region35: #{tpu_custom_call.1} parent=23 // pred_region
          %s486 = sand.u32 %s23, 1
          %s487 = scalar_lea.sflag [#allocation3], %s486
          %s488 = sand.u32 %s127, 1
          %s489 = smul.addr %s488, 64
          %s490 = scalar_lea.vmem [#allocation9], %s489
          %s492 = ssub.s32 1024, 1024
          %493 = vsyncadd %s487, %s492
          %s494 = smul.addr %s23, 16
          %s495 = smul.addr %s494, 64
          %s496 = scalar_lea.hbm %s4, %s495
          %s497 = sshll.u32 %s490, 4
          %s498 = int_to_ptr.vmem [resolvable:$true] %s497
          %503 = dma.hbm_to_vmem [thread:$0]  %s496, 1024, %s498, %s487, 64, 64, 4
        $region36: #{tpu_custom_call.1} parent=23 // pred_fallthru
          _
        // Predicated region
        $region37: #{tpu_custom_call.1} parent=23 // pred_check
          %p504 = pneg %p163
        $region38: #{tpu_custom_call.1} parent=23 // pred_check_branch
          %506 = sbr.rel (%p504) target = $region40
        $region39: #{tpu_custom_call.1} parent=23 // pred_region
          %p507 = scmp.lt.s32.totalorder %s23, 1
          %s508 = scalar_select %p507, %s23, 1
          %s509 = scalar_lea.vmem %s5, %s508
        $region40: #{tpu_custom_call.1} parent=23 // pred_fallthru
          _
        // Predicated region
        $region41: #{tpu_custom_call.1} parent=23 // pred_check
          %p510 = pneg %p189
        $region42: #{tpu_custom_call.1} parent=23 // pred_check_branch
          %512 = sbr.rel (%p510) target = $region44
        $region43: #{tpu_custom_call.1} parent=23 // pred_region
          %p513 = scmp.lt.s32.totalorder %s23, 1
          %s514 = scalar_select %p513, %s23, 1
          %s515 = scalar_lea.vmem %s6, %s514
        $region44: #{tpu_custom_call.1} parent=23 // pred_fallthru
          _
        // Predicated region
        $region45: #{tpu_custom_call.1} parent=23 // pred_check
          %p516 = pneg %p215
        $region46: #{tpu_custom_call.1} parent=23 // pred_check_branch
          %518 = sbr.rel (%p516) target = $region48
        $region47: #{tpu_custom_call.1} parent=23 // pred_region
          %p519 = scmp.lt.s32.totalorder %s23, 1
          %s520 = scalar_select %p519, %s23, 1
          %s521 = scalar_lea.vmem %s7, %s520
        $region48: #{tpu_custom_call.1} parent=23 // pred_fallthru
          _
        // Predicated region
        $region49: #{tpu_custom_call.1} parent=23 // pred_check
          %p522 = pneg %p241
        $region50: #{tpu_custom_call.1} parent=23 // pred_check_branch
          %524 = sbr.rel (%p522) target = $region52
        $region51: #{tpu_custom_call.1} parent=23 // pred_region
          %s525 = sand.u32 %s23, 1
          %s526 = scalar_lea.sflag [#allocation3], %s525
          %s527 = sand.u32 %s231, 1
          %s528 = smul.addr %s527, 256
          %s529 = scalar_lea.vmem [#allocation10], %s528
          %s531 = ssub.s32 4096, 4096
          %532 = vsyncadd %s526, %s531
          %s533 = smul.addr %s23, 64
          %s534 = smul.addr %s533, 64
          %s535 = scalar_lea.hbm %s8, %s534
          %s536 = sshll.u32 %s529, 4
          %s537 = int_to_ptr.vmem [resolvable:$true] %s536
          %542 = dma.hbm_to_vmem [thread:$0]  %s535, 4096, %s537, %s526, 256, 256, 16
        $region52: #{tpu_custom_call.1} parent=23 // pred_fallthru
          _
        // Predicated region
        $region53: #{tpu_custom_call.1} parent=23 // pred_check
          %p543 = pneg %p267
        $region54: #{tpu_custom_call.1} parent=23 // pred_check_branch
          %545 = sbr.rel (%p543) target = $region56
        $region55: #{tpu_custom_call.1} parent=23 // pred_region
          %p546 = scmp.lt.s32.totalorder %s23, 1
          %s547 = scalar_select %p546, %s23, 1
          %s548 = smul.addr %s547, 4
          %s549 = scalar_lea.vmem %s9, %s548
        $region56: #{tpu_custom_call.1} parent=23 // pred_fallthru
          _
        // Predicated region
        $region57: #{tpu_custom_call.1} parent=23 // pred_check
          %p550 = pneg %p293
        $region58: #{tpu_custom_call.1} parent=23 // pred_check_branch
          %552 = sbr.rel (%p550) target = $region60
        $region59: #{tpu_custom_call.1} parent=23 // pred_region
          %s553 = sand.u32 %s23, 1
          %s554 = scalar_lea.sflag [#allocation3], %s553
          %s555 = sand.u32 %s283, 1
          %s556 = smul.addr %s555, 256
          %s557 = scalar_lea.vmem [#allocation11], %s556
          %s559 = ssub.s32 4096, 4096
          %560 = vsyncadd %s554, %s559
          %s561 = smul.addr %s23, 64
          %s562 = smul.addr %s561, 64
          %s563 = scalar_lea.hbm %s10, %s562
          %s564 = sshll.u32 %s557, 4
          %s565 = int_to_ptr.vmem [resolvable:$true] %s564
          %570 = dma.hbm_to_vmem [thread:$0]  %s563, 4096, %s565, %s554, 64, 64, 4
        $region60: #{tpu_custom_call.1} parent=23 // pred_fallthru
          _
        // Predicated region
        $region61: #{tpu_custom_call.1} parent=23 // pred_check
          %p571 = pneg %p319
        $region62: #{tpu_custom_call.1} parent=23 // pred_check_branch
          %573 = sbr.rel (%p571) target = $region64
        $region63: #{tpu_custom_call.1} parent=23 // pred_region
          %p574 = scmp.lt.s32.totalorder %s23, 1
          %s575 = scalar_select %p574, %s23, 1
          %s576 = scalar_lea.vmem %s11, %s575
        $region64: #{tpu_custom_call.1} parent=23 // pred_fallthru
          _
        // Predicated region
        $region65: #{tpu_custom_call.1} parent=23 // pred_check
          %p577 = pneg %p345
        $region66: #{tpu_custom_call.1} parent=23 // pred_check_branch
          %579 = sbr.rel (%p577) target = $region68
        $region67: #{tpu_custom_call.1} parent=23 // pred_region
          %p580 = scmp.lt.s32.totalorder %s23, 1
          %s581 = scalar_select %p580, %s23, 1
          %s582 = scalar_lea.vmem %s12, %s581
        $region68: #{tpu_custom_call.1} parent=23 // pred_fallthru
          _
        // Predicated region
        $region69: #{tpu_custom_call.1} parent=23 // pred_check
          %p583 = pneg %p371
        $region70: #{tpu_custom_call.1} parent=23 // pred_check_branch
          %585 = sbr.rel (%p583) target = $region72
        $region71: #{tpu_custom_call.1} parent=23 // pred_region
          %p586 = scmp.lt.s32.totalorder %s23, 1
          %s587 = scalar_select %p586, %s23, 1
          %s588 = scalar_lea.vmem %s13, %s587
        $region72: #{tpu_custom_call.1} parent=23 // pred_fallthru
          _
      $region24: #{tpu_custom_call.1} parent=5 // pred_fallthru
        _
      %p589 = scmp.le.s32.totalorder 1, %s23
      %p590 = scmp.lt.s32.totalorder %s23, 3
      %p591 = pnand %p589, %p590
      %p592 = pneg %p591
      // Predicated region
      $region73: #{tpu_custom_call.1} parent=5 // pred_check
        _
      $region74: #{tpu_custom_call.1} parent=5 // pred_check_branch
        %594 = sbr.rel (%p591) target = $region76
      $region75: #{tpu_custom_call.1} parent=5 // pred_region
        %s595 = ssub.s32 %s23, 1
        // Predicated region
        $region77: #{tpu_custom_call.1} parent=75 // pred_check
          %p596 = pneg %p44
        $region78: #{tpu_custom_call.1} parent=75 // pred_check_branch
          %598 = sbr.rel (%p596) target = $region80
        $region79: #{tpu_custom_call.1} parent=75 // pred_region
          %599 = dma.done [#allocation3], 32
        $region80: #{tpu_custom_call.1} parent=75 // pred_fallthru
          _
        // Predicated region
        $region81: #{tpu_custom_call.1} parent=75 // pred_check
          %p600 = pneg %p65
        $region82: #{tpu_custom_call.1} parent=75 // pred_check_branch
          %602 = sbr.rel (%p600) target = $region84
        $region83: #{tpu_custom_call.1} parent=75 // pred_region
          %603 = dma.done [#allocation6], 512
        $region84: #{tpu_custom_call.1} parent=75 // pred_fallthru
          _
        %s604 = sand.u32 %s28, 1
        %s605 = scalar_lea.sflag [#allocation3], %s604
        %s606 = sand.u32 %s78, 1
        %s607 = smul.addr %s606, 192
        %s608 = scalar_lea.vmem [#allocation7], %s607
        // Predicated region
        $region85: #{tpu_custom_call.1} parent=75 // pred_check
          %p609 = pneg %p91
        $region86: #{tpu_custom_call.1} parent=75 // pred_check_branch
          %611 = sbr.rel (%p609) target = $region88
        $region87: #{tpu_custom_call.1} parent=75 // pred_region
          %612 = dma.done %s605, 3072
        $region88: #{tpu_custom_call.1} parent=75 // pred_fallthru
          _
        %s613 = sand.u32 %s28, 1
        %s614 = scalar_lea.sflag [#allocation3], %s613
        %s615 = sand.u32 %s104, 1
        %s616 = smul.addr %s615, 3
        %s617 = scalar_lea.vmem [#allocation8], %s616
        // Predicated region
        $region89: #{tpu_custom_call.1} parent=75 // pred_check
          %p618 = pneg %p117
        $region90: #{tpu_custom_call.1} parent=75 // pred_check_branch
          %620 = sbr.rel (%p618) target = $region92
        $region91: #{tpu_custom_call.1} parent=75 // pred_region
          %621 = dma.done %s614, 48
        $region92: #{tpu_custom_call.1} parent=75 // pred_fallthru
          _
        %s622 = sand.u32 %s28, 1
        %s623 = scalar_lea.sflag [#allocation3], %s622
        %s624 = sand.u32 %s130, 1
        %s625 = smul.addr %s624, 64
        %s626 = scalar_lea.vmem [#allocation9], %s625
        // Predicated region
        $region93: #{tpu_custom_call.1} parent=75 // pred_check
          %p627 = pneg %p143
        $region94: #{tpu_custom_call.1} parent=75 // pred_check_branch
          %629 = sbr.rel (%p627) target = $region96
        $region95: #{tpu_custom_call.1} parent=75 // pred_region
          %630 = dma.done %s623, 1024
        $region96: #{tpu_custom_call.1} parent=75 // pred_fallthru
          _
        %s631 = sand.u32 %s28, 1
        %s632 = scalar_lea.sflag [#allocation3], %s631
        %s633 = sand.u32 %s234, 1
        %s634 = smul.addr %s633, 256
        %s635 = scalar_lea.vmem [#allocation10], %s634
        // Predicated region
        $region97: #{tpu_custom_call.1} parent=75 // pred_check
          %p636 = pneg %p247
        $region98: #{tpu_custom_call.1} parent=75 // pred_check_branch
          %638 = sbr.rel (%p636) target = $region100
        $region99: #{tpu_custom_call.1} parent=75 // pred_region
          %639 = dma.done %s632, 4096
        $region100: #{tpu_custom_call.1} parent=75 // pred_fallthru
          _
        %s640 = sand.u32 %s28, 1
        %s641 = scalar_lea.sflag [#allocation3], %s640
        %s642 = sand.u32 %s286, 1
        %s643 = smul.addr %s642, 256
        %s644 = scalar_lea.vmem [#allocation11], %s643
        // Predicated region
        $region101: #{tpu_custom_call.1} parent=75 // pred_check
          %p645 = pneg %p299
        $region102: #{tpu_custom_call.1} parent=75 // pred_check_branch
          %647 = sbr.rel (%p645) target = $region104
        $region103: #{tpu_custom_call.1} parent=75 // pred_region
          %648 = dma.done %s641, 4096
        $region104: #{tpu_custom_call.1} parent=75 // pred_fallthru
          _
        %p649 = pneg %p44
        %p650 = pneg %p41
        %p651 = pneg %p65
        %p652 = pneg %p62
        %s653 = sand.u32 %s28, 1
        %s654 = scalar_lea.sflag [#allocation3], %s653
        %s655 = sand.u32 %s78, 1
        %s656 = smul.addr %s655, 192
        %s657 = scalar_lea.vmem [#allocation7], %s656
        %p658 = pneg %p91
        %p659 = pneg %p88
        %s660 = sand.u32 %s28, 1
        %s661 = scalar_lea.sflag [#allocation3], %s660
        %s662 = sand.u32 %s104, 1
        %s663 = smul.addr %s662, 3
        %s664 = scalar_lea.vmem [#allocation8], %s663
        %p665 = pneg %p117
        %p666 = pneg %p114
        %s667 = sand.u32 %s28, 1
        %s668 = scalar_lea.sflag [#allocation3], %s667
        %s669 = sand.u32 %s130, 1
        %s670 = smul.addr %s669, 64
        %s671 = scalar_lea.vmem [#allocation9], %s670
        %p672 = pneg %p143
        %p673 = pneg %p140
        %p674 = scmp.lt.s32.totalorder %s28, 1
        %s675 = scalar_select %p674, %s28, 1
        %s676 = scalar_lea.vmem %s5, %s675
        %p677 = pneg %p169
        %p678 = pneg %p166
        %p679 = scmp.lt.s32.totalorder %s28, 1
        %s680 = scalar_select %p679, %s28, 1
        %s681 = scalar_lea.vmem %s6, %s680
        %p682 = pneg %p195
        %p683 = pneg %p192
        %p684 = scmp.lt.s32.totalorder %s28, 1
        %s685 = scalar_select %p684, %s28, 1
        %s686 = scalar_lea.vmem %s7, %s685
        %p687 = pneg %p221
        %p688 = pneg %p218
        %s689 = sand.u32 %s28, 1
        %s690 = scalar_lea.sflag [#allocation3], %s689
        %s691 = sand.u32 %s234, 1
        %s692 = smul.addr %s691, 256
        %s693 = scalar_lea.vmem [#allocation10], %s692
        %p694 = pneg %p247
        %p695 = pneg %p244
        %p696 = scmp.lt.s32.totalorder %s28, 1
        %s697 = scalar_select %p696, %s28, 1
        %s698 = smul.addr %s697, 4
        %s699 = scalar_lea.vmem %s9, %s698
        %p700 = pneg %p273
        %p701 = pneg %p270
        %s702 = sand.u32 %s28, 1
        %s703 = scalar_lea.sflag [#allocation3], %s702
        %s704 = sand.u32 %s286, 1
        %s705 = smul.addr %s704, 256
        %s706 = scalar_lea.vmem [#allocation11], %s705
        %p707 = pneg %p299
        %p708 = pneg %p296
        %p709 = scmp.lt.s32.totalorder %s28, 1
        %s710 = scalar_select %p709, %s28, 1
        %s711 = scalar_lea.vmem %s11, %s710
        %p712 = pneg %p325
        %p713 = pneg %p322
        %p714 = scmp.lt.s32.totalorder %s28, 1
        %s715 = scalar_select %p714, %s28, 1
        %s716 = scalar_lea.vmem %s12, %s715
        %p717 = pneg %p351
        %p718 = pneg %p348
        %p719 = scmp.lt.s32.totalorder %s28, 1
        %s720 = scalar_select %p719, %s28, 1
        %s721 = scalar_lea.vmem %s13, %s720
        %p722 = pneg %p377
        %p723 = pneg %p374
        %p724 = pneg %p398
        %p725 = pneg %p395
        %p726 = scmp.lt.s32.totalorder %s28, 1
        %s727 = scalar_select %p726, %s28, 1
        %s728 = scalar_lea.vmem %s5, %s727
        %p729 = scmp.lt.s32.totalorder %s28, 1
        %s730 = scalar_select %p729, %s28, 1
        %s731 = scalar_lea.vmem %s6, %s730
        %p732 = scmp.lt.s32.totalorder %s28, 1
        %s733 = scalar_select %p732, %s28, 1
        %s734 = scalar_lea.vmem %s7, %s733
        %p735 = scmp.lt.s32.totalorder %s28, 1
        %s736 = scalar_select %p735, %s28, 1
        %s737 = smul.addr %s736, 4
        %s738 = scalar_lea.vmem %s9, %s737
        %p739 = scmp.lt.s32.totalorder %s28, 1
        %s740 = scalar_select %p739, %s28, 1
        %s741 = scalar_lea.vmem %s11, %s740
        %p742 = scmp.lt.s32.totalorder %s28, 1
        %s743 = scalar_select %p742, %s28, 1
        %s744 = scalar_lea.vmem %s12, %s743
        %p745 = scmp.lt.s32.totalorder %s28, 1
        %s746 = scalar_select %p745, %s28, 1
        %s747 = scalar_lea.vmem %s13, %s746
        %p749 = scmp.eq.s32.totalorder %s28, 0
        // Predicated region
        $region105: #{tpu_custom_call.1} parent=75 // pred_check
          %p750 = pneg %p749
        $region106: #{tpu_custom_call.1} parent=75 // pred_check_branch
          %752 = sbr.rel (%p750) target = $region108
        $region107: #{tpu_custom_call.1} parent=75 // pred_region
          %v753 = vld [vmem:[#allocation5] sm:$0xff]
          %v754 = vld [vmem:[#allocation5 + $0x8] sm:$0xff]
          %v755 = vld [vmem:[#allocation5 + $0x10] sm:$0xff]
          %v756 = vld [vmem:[#allocation5 + $0x18] sm:$0xff]
          %757 = vst [vmem:[#allocation12] sm:$0xff] %v753
          %758 = vst [vmem:[#allocation12 + $0x8] sm:$0xff] %v754
          %759 = vst [vmem:[#allocation12 + $0x10] sm:$0xff] %v755
          %760 = vst [vmem:[#allocation12 + $0x18] sm:$0xff] %v756
        $region108: #{tpu_custom_call.1} parent=75 // pred_fallthru
          _
        %v761 = vld [vmem:[#allocation2] sm:$0x1]
        %v762 = vld [vmem:[#allocation2 + $0x1] sm:$0x1]
        %v763 = vld [vmem:[#allocation12] sm:$0xff]
        %v764 = vld [vmem:[#allocation12 + $0x8] sm:$0xff]
        %v765 = vld [vmem:[#allocation12 + $0x10] sm:$0xff]
        %v766 = vld [vmem:[#allocation12 + $0x18] sm:$0xff]
        %v767 = vpack.c.bf16 %v764, %v763
        %v768 = vpack.c.bf16 %v766, %v765
        %v769 = vld [vmem:[%s608] sm:$0xff]
        %v770 = vld [vmem:[%s608 + $0x8] sm:$0xf]
        %v771 = vld [vmem:[%s608 + $0xc] sm:$0xff]
        %v772 = vld [vmem:[%s608 + $0x14] sm:$0xf]
        %v773 = vld [vmem:[%s608 + $0x18] sm:$0xff]
        %v774 = vld [vmem:[%s608 + $0x20] sm:$0xf]
        %v775 = vld [vmem:[%s608 + $0x24] sm:$0xff]
        %v776 = vld [vmem:[%s608 + $0x2c] sm:$0xf]
        %v777 = vld [vmem:[%s608 + $0x30] sm:$0xff]
        %v778 = vld [vmem:[%s608 + $0x38] sm:$0xf]
        %v779 = vld [vmem:[%s608 + $0x3c] sm:$0xff]
        %v780 = vld [vmem:[%s608 + $0x44] sm:$0xf]
        %v781 = vld [vmem:[%s608 + $0x48] sm:$0xff]
        %v782 = vld [vmem:[%s608 + $0x50] sm:$0xf]
        %v783 = vld [vmem:[%s608 + $0x54] sm:$0xff]
        %v784 = vld [vmem:[%s608 + $0x5c] sm:$0xf]
        %v785 = vld [vmem:[%s608 + $0x60] sm:$0xff]
        %v786 = vld [vmem:[%s608 + $0x68] sm:$0xf]
        %v787 = vld [vmem:[%s608 + $0x6c] sm:$0xff]
        %v788 = vld [vmem:[%s608 + $0x74] sm:$0xf]
        %v789 = vld [vmem:[%s608 + $0x78] sm:$0xff]
        %v790 = vld [vmem:[%s608 + $0x80] sm:$0xf]
        %v791 = vld [vmem:[%s608 + $0x84] sm:$0xff]
        %v792 = vld [vmem:[%s608 + $0x8c] sm:$0xf]
        %v793 = vld [vmem:[%s608 + $0x90] sm:$0xff]
        %v794 = vld [vmem:[%s608 + $0x98] sm:$0xf]
        %v795 = vld [vmem:[%s608 + $0x9c] sm:$0xff]
        %v796 = vld [vmem:[%s608 + $0xa4] sm:$0xf]
        %v797 = vld [vmem:[%s608 + $0xa8] sm:$0xff]
        %v798 = vld [vmem:[%s608 + $0xb0] sm:$0xf]
        %v799 = vld [vmem:[%s608 + $0xb4] sm:$0xff]
        %v800 = vld [vmem:[%s608 + $0xbc] sm:$0xf]
        %v801 = vld [vmem:[%s617] sm:$0x7]
        %v803 = vlaneseq
        %v804 = vshrl.u32 %v803, 7
        %v805 = vsub.s32 0, %v804
        %v806 = vrot.slane %v801, %v805
        %v807 = vlaneseq
        %v808 = vshrl.u32 %v807, 7
        %v809 = vsub.s32 1, %v808
        %v810 = vrot.slane %v801, %v809
        %v811 = vlaneseq
        %v812 = vshrl.u32 %v811, 7
        %v813 = vsub.s32 2, %v812
        %v814 = vrot.slane %v801, %v813
        %v850 = vunpack.c.l.b16 %v769
        %v851 = vunpack.c.h.b16 %v769
        %v852 = vunpack.c.l.b16 %v770
        %v853 = vunpack.c.l.b16 %v771
        %v854 = vunpack.c.h.b16 %v771
        %v855 = vunpack.c.l.b16 %v772
        %v856 = vunpack.c.l.b16 %v773
        %v857 = vunpack.c.h.b16 %v773
        %v858 = vunpack.c.l.b16 %v774
        %v859 = vunpack.c.l.b16 %v775
        %v860 = vunpack.c.h.b16 %v775
        %v861 = vunpack.c.l.b16 %v776
        %v862 = vunpack.c.l.b16 %v777
        %v863 = vunpack.c.h.b16 %v777
        %v864 = vunpack.c.l.b16 %v778
        %v865 = vunpack.c.l.b16 %v779
        %v866 = vunpack.c.h.b16 %v779
        %v867 = vunpack.c.l.b16 %v780
        %v868 = vunpack.c.l.b16 %v781
        %v869 = vunpack.c.h.b16 %v781
        %v870 = vunpack.c.l.b16 %v782
        %v871 = vunpack.c.l.b16 %v783
        %v872 = vunpack.c.h.b16 %v783
        %v873 = vunpack.c.l.b16 %v784
        %v874 = vunpack.c.l.b16 %v785
        %v875 = vunpack.c.h.b16 %v785
        %v876 = vunpack.c.l.b16 %v786
        %v877 = vunpack.c.l.b16 %v787
        %v878 = vunpack.c.h.b16 %v787
        %v879 = vunpack.c.l.b16 %v788
        %v880 = vunpack.c.l.b16 %v789
        %v881 = vunpack.c.h.b16 %v789
        %v882 = vunpack.c.l.b16 %v790
        %v883 = vunpack.c.l.b16 %v791
        %v884 = vunpack.c.h.b16 %v791
        %v885 = vunpack.c.l.b16 %v792
        %v886 = vunpack.c.l.b16 %v793
        %v887 = vunpack.c.h.b16 %v793
        %v888 = vunpack.c.l.b16 %v794
        %v889 = vunpack.c.l.b16 %v795
        %v890 = vunpack.c.h.b16 %v795
        %v891 = vunpack.c.l.b16 %v796
        %v892 = vunpack.c.l.b16 %v797
        %v893 = vunpack.c.h.b16 %v797
        %v894 = vunpack.c.l.b16 %v798
        %v895 = vunpack.c.l.b16 %v799
        %v896 = vunpack.c.h.b16 %v799
        %v897 = vunpack.c.l.b16 %v800
        %v898 = vpack.c.b16 %v853, %v850
        %v899 = vpack.c.b16 %v854, %v851
        %v900 = vpack.c.b16 %v855, %v852
        %v901 = vpack.c.b16 %v859, %v856
        %v902 = vpack.c.b16 %v860, %v857
        %v903 = vpack.c.b16 %v861, %v858
        %v904 = vpack.c.b16 %v865, %v862
        %v905 = vpack.c.b16 %v866, %v863
        %v906 = vpack.c.b16 %v867, %v864
        %v907 = vpack.c.b16 %v871, %v868
        %v908 = vpack.c.b16 %v872, %v869
        %v909 = vpack.c.b16 %v873, %v870
        %v910 = vpack.c.b16 %v877, %v874
        %v911 = vpack.c.b16 %v878, %v875
        %v912 = vpack.c.b16 %v879, %v876
        %v913 = vpack.c.b16 %v883, %v880
        %v914 = vpack.c.b16 %v884, %v881
        %v915 = vpack.c.b16 %v885, %v882
        %v916 = vpack.c.b16 %v889, %v886
        %v917 = vpack.c.b16 %v890, %v887
        %v918 = vpack.c.b16 %v891, %v888
        %v919 = vpack.c.b16 %v895, %v892
        %v920 = vpack.c.b16 %v896, %v893
        %v921 = vpack.c.b16 %v897, %v894
        %946 = vmatprep.subr.bf16.mxu0 %v920
        %947 = vmatpush1.bf16.msra.mxu0 %v919
        %948 = vmatprep.subr.bf16.mxu0 %v917
        %949 = vmatpush1.bf16.msra.mxu0 %v916
        %950 = vmatprep.subr.bf16.mxu0 %v914
        %951 = vmatpush1.bf16.msra.mxu0 %v913
        %952 = vmatprep.subr.bf16.mxu0 %v911
        %953 = vmatpush1.bf16.msra.mxu0 %v910
        %954 = vmatprep.subr.bf16.mxu0 %v908
        %955 = vmatpush1.bf16.msra.mxu0 %v907
        %956 = vmatprep.subr.bf16.mxu0 %v905
        %957 = vmatpush1.bf16.msra.mxu0 %v904
        %958 = vmatprep.subr.bf16.mxu0 %v902
        %959 = vmatpush1.bf16.msra.mxu0 %v901
        %960 = vmatprep.subr.bf16.mxu0 %v899
        %961 = vmatpush1.bf16.msra.mxu0 %v898
        %962 = vmatprep.subr.bf16.mxu0 0
        %963 = vmatpush2.bf16.msra.mxu0 0
        %964 = vmatprep.subr.bf16.mxu0 0
        %965 = vmatpush2.bf16.msra.mxu0 0
        %966 = vmatprep.subr.bf16.mxu0 0
        %967 = vmatpush2.bf16.msra.mxu0 0
        %968 = vmatprep.subr.bf16.mxu0 0
        %969 = vmatpush2.bf16.msra.mxu0 0
        %970 = vmatprep.subr.bf16.mxu0 0
        %971 = vmatpush2.bf16.msra.mxu0 0
        %972 = vmatprep.subr.bf16.mxu0 0
        %973 = vmatpush2.bf16.msra.mxu0 0
        %974 = vmatprep.subr.bf16.mxu0 0
        %975 = vmatpush2.bf16.msra.mxu0 0
        %976 = vmatprep.subr.bf16.mxu0 0
        %977 = vmatpush2.bf16.msra.mxu0 0
        %978 = vmatprep.mubr.bf16.mxu0 0
        %979 = vmatmul.mubr.bf16.gmra.mxu0 %v767
        %v980 = vpop.f32.mrf.mxu0
        %v981 = vadd.f32 %v806, %v980
        %v982 = vpop.f32.mrf.mxu0
        %v983 = vadd.f32 %v810, %v982
        %v984 = vpop.f32.mrf.mxu0
        %v985 = vadd.f32 %v806, %v984
        %v986 = vpop.f32.mrf.mxu0
        %v987 = vadd.f32 %v810, %v986
        %988 = vmatprep.mubr.bf16.mxu0 0
        %989 = vmatmul.mubr.bf16.gmra.mxu0 %v768
        %v990 = vpop.f32.mrf.mxu0
        %v991 = vadd.f32 %v806, %v990
        %v992 = vpop.f32.mrf.mxu0
        %v993 = vadd.f32 %v810, %v992
        %v994 = vpop.f32.mrf.mxu0
        %v995 = vadd.f32 %v806, %v994
        %v996 = vpop.f32.mrf.mxu0
        %v997 = vadd.f32 %v810, %v996
        %998 = vdwg.mxu0
        %999 = vmatprep.subr.bf16.mxu0 0
        %1000 = vmatpush1.bf16.msra.mxu0 %v921
        %1001 = vmatprep.subr.bf16.mxu0 0
        %1002 = vmatpush1.bf16.msra.mxu0 %v918
        %1003 = vmatprep.subr.bf16.mxu0 0
        %1004 = vmatpush1.bf16.msra.mxu0 %v915
        %1005 = vmatprep.subr.bf16.mxu0 0
        %1006 = vmatpush1.bf16.msra.mxu0 %v912
        %1007 = vmatprep.subr.bf16.mxu0 0
        %1008 = vmatpush1.bf16.msra.mxu0 %v909
        %1009 = vmatprep.subr.bf16.mxu0 0
        %1010 = vmatpush1.bf16.msra.mxu0 %v906
        %1011 = vmatprep.subr.bf16.mxu0 0
        %1012 = vmatpush1.bf16.msra.mxu0 %v903
        %1013 = vmatprep.subr.bf16.mxu0 0
        %1014 = vmatpush1.bf16.msra.mxu0 %v900
        %1015 = vmatprep.subr.bf16.mxu0 0
        %1016 = vmatpush2.bf16.msra.mxu0 0
        %1017 = vmatprep.subr.bf16.mxu0 0
        %1018 = vmatpush2.bf16.msra.mxu0 0
        %1019 = vmatprep.subr.bf16.mxu0 0
        %1020 = vmatpush2.bf16.msra.mxu0 0
        %1021 = vmatprep.subr.bf16.mxu0 0
        %1022 = vmatpush2.bf16.msra.mxu0 0
        %1023 = vmatprep.subr.bf16.mxu0 0
        %1024 = vmatpush2.bf16.msra.mxu0 0
        %1025 = vmatprep.subr.bf16.mxu0 0
        %1026 = vmatpush2.bf16.msra.mxu0 0
        %1027 = vmatprep.subr.bf16.mxu0 0
        %1028 = vmatpush2.bf16.msra.mxu0 0
        %1029 = vmatprep.subr.bf16.mxu0 0
        %1030 = vmatpush2.bf16.msra.mxu0 0
        %1031 = vmatprep.mubr.bf16.mxu0 0
        %1032 = vmatmul.mubr.bf16.gmra.mxu0 %v767
        %v1033 = vpop.f32.mrf.mxu0
        %v1034 = vadd.f32 %v814, %v1033
        %v1035 = vpop.f32.mrf.mxu0
        %v1036 = vpop.f32.mrf.mxu0
        %v1037 = vadd.f32 %v814, %v1036
        %v1038 = vpop.f32.mrf.mxu0
        %1039 = vmatprep.mubr.bf16.mxu0 0
        %1040 = vmatmul.mubr.bf16.gmra.mxu0 %v768
        %v1041 = vpop.f32.mrf.mxu0
        %v1042 = vadd.f32 %v814, %v1041
        %v1043 = vpop.f32.mrf.mxu0
        %v1044 = vpop.f32.mrf.mxu0
        %v1045 = vadd.f32 %v814, %v1044
        %v1046 = vpop.f32.mrf.mxu0
        %1047 = vdwg.mxu0
        %v1048 = vpack.c.bf16 %v985, %v981
        %v1049 = vpack.c.bf16 %v995, %v991
        %v1050 = vpack.c.bf16 %v987, %v983
        %v1051 = vpack.c.bf16 %v997, %v993
        %v1052 = vpack.c.bf16 %v1037, %v1034
        %v1053 = vpack.c.bf16 %v1045, %v1042
        %vm1054 = vcmask 261120
        %v1056 = vsel %vm1054, %v1048, 0
        %v1059 = vsel %vm1054, %v1050, 0
        %1061 = vmatprep.subr.bf16.mxu0 0
        %1062 = vmatpush1.bf16.xpose.msra.mxu0 0
        %1063 = vmatprep.subr.bf16.mxu0 0
        %1064 = vmatpush1.bf16.xpose.msra.mxu0 0
        %1065 = vmatprep.subr.bf16.mxu0 0
        %1066 = vmatpush1.bf16.xpose.msra.mxu0 0
        %1067 = vmatprep.subr.bf16.mxu0 0
        %1068 = vmatpush1.bf16.xpose.msra.mxu0 0
        %1069 = vmatprep.subr.bf16.mxu0 0
        %1070 = vmatpush1.bf16.xpose.msra.mxu0 0
        %1071 = vmatprep.subr.bf16.mxu0 0
        %1072 = vmatpush1.bf16.xpose.msra.mxu0 0
        %1073 = vmatprep.subr.bf16.mxu0 0
        %1074 = vmatpush1.bf16.xpose.msra.mxu0 0
        %1075 = vmatprep.subr.bf16.mxu0 0
        %1076 = vmatpush1.bf16.xpose.msra.mxu0 %v1059
        %1077 = vmatprep.subr.bf16.mxu0 0
        %1078 = vmatpush2.bf16.xpose.msra.mxu0 0
        %1079 = vmatprep.subr.bf16.mxu0 0
        %1080 = vmatpush2.bf16.xpose.msra.mxu0 0
        %1081 = vmatprep.subr.bf16.mxu0 0
        %1082 = vmatpush2.bf16.xpose.msra.mxu0 0
        %1083 = vmatprep.subr.bf16.mxu0 0
        %1084 = vmatpush2.bf16.xpose.msra.mxu0 0
        %1085 = vmatprep.subr.bf16.mxu0 0
        %1086 = vmatpush2.bf16.xpose.msra.mxu0 0
        %1087 = vmatprep.subr.bf16.mxu0 0
        %1088 = vmatpush2.bf16.xpose.msra.mxu0 0
        %1089 = vmatprep.subr.bf16.mxu0 0
        %1090 = vmatpush2.bf16.xpose.msra.mxu0 0
        %1091 = vmatprep.subr.bf16.mxu0 0
        %1092 = vmatpush2.bf16.xpose.msra.mxu0 0
        %1093 = vmatprep.mubr.bf16.mxu0 0
        %1094 = vmatmul.mubr.bf16.gmra.mxu0 %v1056
        %v1095 = vpop.f32.mrf.mxu0
        %v1096 = vadd.f32 0.0, %v1095
        %v1097 = vpop.f32.mrf.mxu0
        %v1098 = vpop.f32.mrf.mxu0
        %v1099 = vadd.f32 0.0, %v1098
        %v1100 = vpop.f32.mrf.mxu0
        %1101 = vdwg.mxu0
        %v1103 = vsel %vm1054, %v1049, 0
        %v1106 = vsel %vm1054, %v1051, 0
        %1108 = vmatprep.subr.bf16.mxu0 0
        %1109 = vmatpush1.bf16.xpose.msra.mxu0 0
        %1110 = vmatprep.subr.bf16.mxu0 0
        %1111 = vmatpush1.bf16.xpose.msra.mxu0 0
        %1112 = vmatprep.subr.bf16.mxu0 0
        %1113 = vmatpush1.bf16.xpose.msra.mxu0 0
        %1114 = vmatprep.subr.bf16.mxu0 0
        %1115 = vmatpush1.bf16.xpose.msra.mxu0 0
        %1116 = vmatprep.subr.bf16.mxu0 0
        %1117 = vmatpush1.bf16.xpose.msra.mxu0 0
        %1118 = vmatprep.subr.bf16.mxu0 0
        %1119 = vmatpush1.bf16.xpose.msra.mxu0 0
        %1120 = vmatprep.subr.bf16.mxu0 0
        %1121 = vmatpush1.bf16.xpose.msra.mxu0 0
        %1122 = vmatprep.subr.bf16.mxu0 0
        %1123 = vmatpush1.bf16.xpose.msra.mxu0 %v1106
        %1124 = vmatprep.subr.bf16.mxu0 0
        %1125 = vmatpush2.bf16.xpose.msra.mxu0 0
        %1126 = vmatprep.subr.bf16.mxu0 0
        %1127 = vmatpush2.bf16.xpose.msra.mxu0 0
        %1128 = vmatprep.subr.bf16.mxu0 0
        %1129 = vmatpush2.bf16.xpose.msra.mxu0 0
        %1130 = vmatprep.subr.bf16.mxu0 0
        %1131 = vmatpush2.bf16.xpose.msra.mxu0 0
        %1132 = vmatprep.subr.bf16.mxu0 0
        %1133 = vmatpush2.bf16.xpose.msra.mxu0 0
        %1134 = vmatprep.subr.bf16.mxu0 0
        %1135 = vmatpush2.bf16.xpose.msra.mxu0 0
        %1136 = vmatprep.subr.bf16.mxu0 0
        %1137 = vmatpush2.bf16.xpose.msra.mxu0 0
        %1138 = vmatprep.subr.bf16.mxu0 0
        %1139 = vmatpush2.bf16.xpose.msra.mxu0 0
        %1140 = vmatprep.mubr.bf16.mxu0 0
        %1141 = vmatmul.mubr.bf16.gmra.mxu0 %v1103
        %v1142 = vpop.f32.mrf.mxu0
        %v1143 = vadd.f32 0.0, %v1142
        %v1144 = vpop.f32.mrf.mxu0
        %v1145 = vpop.f32.mrf.mxu0
        %v1146 = vadd.f32 0.0, %v1145
        %v1147 = vpop.f32.mrf.mxu0
        %1148 = vdwg.mxu0
        %v1149 = vmul.f32 %v1096, 0.17677669
        %v1150 = vmul.f32 %v1099, 0.17677669
        %v1151 = vmul.f32 %v1143, 0.17677669
        %v1152 = vmul.f32 %v1146, 0.17677669
        %v1155 = vlaneseq
        %v1156 = vshrl.u32 %v1155, 7
        %v1157 = vsub.s32 0, %v1156
        %v1158 = vrot.slane %v761, %v1157
        %v1159 = vlaneseq
        %v1160 = vshrl.u32 %v1159, 7
        %v1161 = vsub.s32 0, %v1160
        %v1162 = vrot.slane %v762, %v1161
        %v1165 = vadd.f32 %v1149, %v1158
        %v1166 = vadd.f32 %v1150, %v1158
        %v1167 = vadd.f32 %v1151, %v1162
        %v1168 = vadd.f32 %v1152, %v1162
        %vm1169 = vcmask 130048
        %v1170 = vsel %vm1169, %v1165, -inf
        %1171 = vmax.xlane.f32.xlu0 %v1170
        %v1172 = vpop.xlane.xlu0 %1171
        %v1173 = vsel %vm1169, %v1166, -inf
        %1174 = vmax.xlane.f32.xlu0 %v1173
        %v1175 = vpop.xlane.xlu0 %1174
        %v1176 = vsel %vm1169, %v1167, -inf
        %1177 = vmax.xlane.f32.xlu0 %v1176
        %v1178 = vpop.xlane.xlu0 %1177
        %v1179 = vsel %vm1169, %v1168, -inf
        %1180 = vmax.xlane.f32.xlu0 %v1179
        %v1181 = vpop.xlane.xlu0 %1180
        %v1182 = vsub.f32 %v1165, %v1172
        %v1183 = vsub.f32 %v1166, %v1175
        %v1184 = vsub.f32 %v1167, %v1178
        %v1185 = vsub.f32 %v1168, %v1181
        %v1186 = vmul.f32 %v1182, 1.442695
        %v1187 = vpow.pop %v1186
        %v1188 = vmul.f32 %v1183, 1.442695
        %v1189 = vpow.pop %v1188
        %v1190 = vmul.f32 %v1184, 1.442695
        %v1191 = vpow.pop %v1190
        %v1192 = vmul.f32 %v1185, 1.442695
        %v1193 = vpow.pop %v1192
        %v1194 = vsel %vm1169, %v1187, 0.0
        %1195 = vadd.xlane.f32.xlu0 %v1194
        %v1196 = vpop.xlane.xlu0 %1195
        %v1197 = vsel %vm1169, %v1189, 0.0
        %1198 = vadd.xlane.f32.xlu0 %v1197
        %v1199 = vpop.xlane.xlu0 %1198
        %v1200 = vsel %vm1169, %v1191, 0.0
        %1201 = vadd.xlane.f32.xlu0 %v1200
        %v1202 = vpop.xlane.xlu0 %1201
        %v1203 = vsel %vm1169, %v1193, 0.0
        %1204 = vadd.xlane.f32.xlu0 %v1203
        %v1205 = vpop.xlane.xlu0 %1204
        %v1206 = vrcp.pop %v1196
        %v1207 = vrcp.pop %v1199
        %v1208 = vrcp.pop %v1202
        %v1209 = vrcp.pop %v1205
        %v1210 = vmul.f32 %v1187, %v1206
        %v1211 = vmul.f32 %v1189, %v1207
        %v1212 = vmul.f32 %v1191, %v1208
        %v1213 = vmul.f32 %v1193, %v1209
        %v1214 = vpack.c.bf16 %v1211, %v1210
        %v1215 = vpack.c.bf16 %v1213, %v1212
        %v1217 = vsel %vm1169, %v1214, 0
        %1219 = vmatprep.subr.bf16.mxu0 0
        %1220 = vmatpush1.bf16.msra.mxu0 0
        %1221 = vmatprep.subr.bf16.mxu0 0
        %1222 = vmatpush1.bf16.msra.mxu0 0
        %1223 = vmatprep.subr.bf16.mxu0 0
        %1224 = vmatpush1.bf16.msra.mxu0 0
        %1225 = vmatprep.subr.bf16.mxu0 0
        %1226 = vmatpush1.bf16.msra.mxu0 0
        %1227 = vmatprep.subr.bf16.mxu0 0
        %1228 = vmatpush1.bf16.msra.mxu0 0
        %1229 = vmatprep.subr.bf16.mxu0 0
        %1230 = vmatpush1.bf16.msra.mxu0 0
        %1231 = vmatprep.subr.bf16.mxu0 0
        %1232 = vmatpush1.bf16.msra.mxu0 0
        %1233 = vmatprep.subr.bf16.mxu0 0
        %1234 = vmatpush1.bf16.msra.mxu0 %v1052
        %1235 = vmatprep.subr.bf16.mxu0 0
        %1236 = vmatpush2.bf16.msra.mxu0 0
        %1237 = vmatprep.subr.bf16.mxu0 0
        %1238 = vmatpush2.bf16.msra.mxu0 0
        %1239 = vmatprep.subr.bf16.mxu0 0
        %1240 = vmatpush2.bf16.msra.mxu0 0
        %1241 = vmatprep.subr.bf16.mxu0 0
        %1242 = vmatpush2.bf16.msra.mxu0 0
        %1243 = vmatprep.subr.bf16.mxu0 0
        %1244 = vmatpush2.bf16.msra.mxu0 0
        %1245 = vmatprep.subr.bf16.mxu0 0
        %1246 = vmatpush2.bf16.msra.mxu0 0
        %1247 = vmatprep.subr.bf16.mxu0 0
        %1248 = vmatpush2.bf16.msra.mxu0 0
        %1249 = vmatprep.subr.bf16.mxu0 0
        %1250 = vmatpush2.bf16.msra.mxu0 0
        %1251 = vmatprep.mubr.bf16.mxu0 0
        %1252 = vmatmul.mubr.bf16.gmra.mxu0 %v1217
        %v1253 = vpop.f32.mrf.mxu0
        %v1254 = vadd.f32 0.0, %v1253
        %v1255 = vpop.f32.mrf.mxu0
        %v1256 = vpop.f32.mrf.mxu0
        %v1257 = vadd.f32 0.0, %v1256
        %v1258 = vpop.f32.mrf.mxu0
        %1259 = vdwg.mxu0
        %v1261 = vsel %vm1169, %v1215, 0
        %1263 = vmatprep.subr.bf16.mxu0 0
        %1264 = vmatpush1.bf16.msra.mxu0 0
        %1265 = vmatprep.subr.bf16.mxu0 0
        %1266 = vmatpush1.bf16.msra.mxu0 0
        %1267 = vmatprep.subr.bf16.mxu0 0
        %1268 = vmatpush1.bf16.msra.mxu0 0
        %1269 = vmatprep.subr.bf16.mxu0 0
        %1270 = vmatpush1.bf16.msra.mxu0 0
        %1271 = vmatprep.subr.bf16.mxu0 0
        %1272 = vmatpush1.bf16.msra.mxu0 0
        %1273 = vmatprep.subr.bf16.mxu0 0
        %1274 = vmatpush1.bf16.msra.mxu0 0
        %1275 = vmatprep.subr.bf16.mxu0 0
        %1276 = vmatpush1.bf16.msra.mxu0 0
        %1277 = vmatprep.subr.bf16.mxu0 0
        %1278 = vmatpush1.bf16.msra.mxu0 %v1053
        %1279 = vmatprep.subr.bf16.mxu0 0
        %1280 = vmatpush2.bf16.msra.mxu0 0
        %1281 = vmatprep.subr.bf16.mxu0 0
        %1282 = vmatpush2.bf16.msra.mxu0 0
        %1283 = vmatprep.subr.bf16.mxu0 0
        %1284 = vmatpush2.bf16.msra.mxu0 0
        %1285 = vmatprep.subr.bf16.mxu0 0
        %1286 = vmatpush2.bf16.msra.mxu0 0
        %1287 = vmatprep.subr.bf16.mxu0 0
        %1288 = vmatpush2.bf16.msra.mxu0 0
        %1289 = vmatprep.subr.bf16.mxu0 0
        %1290 = vmatpush2.bf16.msra.mxu0 0
        %1291 = vmatprep.subr.bf16.mxu0 0
        %1292 = vmatpush2.bf16.msra.mxu0 0
        %1293 = vmatprep.subr.bf16.mxu0 0
        %1294 = vmatpush2.bf16.msra.mxu0 0
        %1295 = vmatprep.mubr.bf16.mxu0 0
        %1296 = vmatmul.mubr.bf16.gmra.mxu0 %v1261
        %v1297 = vpop.f32.mrf.mxu0
        %v1298 = vadd.f32 0.0, %v1297
        %v1299 = vpop.f32.mrf.mxu0
        %v1300 = vpop.f32.mrf.mxu0
        %v1301 = vadd.f32 0.0, %v1300
        %v1302 = vpop.f32.mrf.mxu0
        %1303 = vdwg.mxu0
        %1305 = vrot.lane.b32.xlu0 %v1048, 96
        %v1306 = vpop.permute.xlu0 %1305
        %1308 = vrot.lane.b32.xlu0 %v1050, 96
        %v1309 = vpop.permute.xlu0 %1308
        %v1311 = vsel %vm1054, %v1306, 0
        %v1314 = vsel %vm1054, %v1309, 0
        %1316 = vmatprep.subr.bf16.mxu0 0
        %1317 = vmatpush1.bf16.xpose.msra.mxu0 0
        %1318 = vmatprep.subr.bf16.mxu0 0
        %1319 = vmatpush1.bf16.xpose.msra.mxu0 0
        %1320 = vmatprep.subr.bf16.mxu0 0
        %1321 = vmatpush1.bf16.xpose.msra.mxu0 0
        %1322 = vmatprep.subr.bf16.mxu0 0
        %1323 = vmatpush1.bf16.xpose.msra.mxu0 0
        %1324 = vmatprep.subr.bf16.mxu0 0
        %1325 = vmatpush1.bf16.xpose.msra.mxu0 0
        %1326 = vmatprep.subr.bf16.mxu0 0
        %1327 = vmatpush1.bf16.xpose.msra.mxu0 0
        %1328 = vmatprep.subr.bf16.mxu0 0
        %1329 = vmatpush1.bf16.xpose.msra.mxu0 0
        %1330 = vmatprep.subr.bf16.mxu0 0
        %1331 = vmatpush1.bf16.xpose.msra.mxu0 %v1314
        %1332 = vmatprep.subr.bf16.mxu0 0
        %1333 = vmatpush2.bf16.xpose.msra.mxu0 0
        %1334 = vmatprep.subr.bf16.mxu0 0
        %1335 = vmatpush2.bf16.xpose.msra.mxu0 0
        %1336 = vmatprep.subr.bf16.mxu0 0
        %1337 = vmatpush2.bf16.xpose.msra.mxu0 0
        %1338 = vmatprep.subr.bf16.mxu0 0
        %1339 = vmatpush2.bf16.xpose.msra.mxu0 0
        %1340 = vmatprep.subr.bf16.mxu0 0
        %1341 = vmatpush2.bf16.xpose.msra.mxu0 0
        %1342 = vmatprep.subr.bf16.mxu0 0
        %1343 = vmatpush2.bf16.xpose.msra.mxu0 0
        %1344 = vmatprep.subr.bf16.mxu0 0
        %1345 = vmatpush2.bf16.xpose.msra.mxu0 0
        %1346 = vmatprep.subr.bf16.mxu0 0
        %1347 = vmatpush2.bf16.xpose.msra.mxu0 0
        %1348 = vmatprep.mubr.bf16.mxu0 0
        %1349 = vmatmul.mubr.bf16.gmra.mxu0 %v1311
        %v1350 = vpop.f32.mrf.mxu0
        %v1351 = vadd.f32 0.0, %v1350
        %v1352 = vpop.f32.mrf.mxu0
        %v1353 = vpop.f32.mrf.mxu0
        %v1354 = vadd.f32 0.0, %v1353
        %v1355 = vpop.f32.mrf.mxu0
        %1356 = vdwg.mxu0
        %1358 = vrot.lane.b32.xlu0 %v1049, 96
        %v1359 = vpop.permute.xlu0 %1358
        %1361 = vrot.lane.b32.xlu0 %v1051, 96
        %v1362 = vpop.permute.xlu0 %1361
        %v1364 = vsel %vm1054, %v1359, 0
        %v1367 = vsel %vm1054, %v1362, 0
        %1369 = vmatprep.subr.bf16.mxu0 0
        %1370 = vmatpush1.bf16.xpose.msra.mxu0 0
        %1371 = vmatprep.subr.bf16.mxu0 0
        %1372 = vmatpush1.bf16.xpose.msra.mxu0 0
        %1373 = vmatprep.subr.bf16.mxu0 0
        %1374 = vmatpush1.bf16.xpose.msra.mxu0 0
        %1375 = vmatprep.subr.bf16.mxu0 0
        %1376 = vmatpush1.bf16.xpose.msra.mxu0 0
        %1377 = vmatprep.subr.bf16.mxu0 0
        %1378 = vmatpush1.bf16.xpose.msra.mxu0 0
        %1379 = vmatprep.subr.bf16.mxu0 0
        %1380 = vmatpush1.bf16.xpose.msra.mxu0 0
        %1381 = vmatprep.subr.bf16.mxu0 0
        %1382 = vmatpush1.bf16.xpose.msra.mxu0 0
        %1383 = vmatprep.subr.bf16.mxu0 0
        %1384 = vmatpush1.bf16.xpose.msra.mxu0 %v1367
        %1385 = vmatprep.subr.bf16.mxu0 0
        %1386 = vmatpush2.bf16.xpose.msra.mxu0 0
        %1387 = vmatprep.subr.bf16.mxu0 0
        %1388 = vmatpush2.bf16.xpose.msra.mxu0 0
        %1389 = vmatprep.subr.bf16.mxu0 0
        %1390 = vmatpush2.bf16.xpose.msra.mxu0 0
        %1391 = vmatprep.subr.bf16.mxu0 0
        %1392 = vmatpush2.bf16.xpose.msra.mxu0 0
        %1393 = vmatprep.subr.bf16.mxu0 0
        %1394 = vmatpush2.bf16.xpose.msra.mxu0 0
        %1395 = vmatprep.subr.bf16.mxu0 0
        %1396 = vmatpush2.bf16.xpose.msra.mxu0 0
        %1397 = vmatprep.subr.bf16.mxu0 0
        %1398 = vmatpush2.bf16.xpose.msra.mxu0 0
        %1399 = vmatprep.subr.bf16.mxu0 0
        %1400 = vmatpush2.bf16.xpose.msra.mxu0 0
        %1401 = vmatprep.mubr.bf16.mxu0 0
        %1402 = vmatmul.mubr.bf16.gmra.mxu0 %v1364
        %v1403 = vpop.f32.mrf.mxu0
        %v1404 = vadd.f32 0.0, %v1403
        %v1405 = vpop.f32.mrf.mxu0
        %v1406 = vpop.f32.mrf.mxu0
        %v1407 = vadd.f32 0.0, %v1406
        %v1408 = vpop.f32.mrf.mxu0
        %1409 = vdwg.mxu0
        %v1410 = vmul.f32 %v1351, 0.17677669
        %v1411 = vmul.f32 %v1354, 0.17677669
        %v1412 = vmul.f32 %v1404, 0.17677669
        %v1413 = vmul.f32 %v1407, 0.17677669
        %v1414 = vadd.f32 %v1410, %v1158
        %v1415 = vadd.f32 %v1411, %v1158
        %v1416 = vadd.f32 %v1412, %v1162
        %v1417 = vadd.f32 %v1413, %v1162
        %v1418 = vsel %vm1169, %v1414, -inf
        %1419 = vmax.xlane.f32.xlu0 %v1418
        %v1420 = vpop.xlane.xlu0 %1419
        %v1421 = vsel %vm1169, %v1415, -inf
        %1422 = vmax.xlane.f32.xlu0 %v1421
        %v1423 = vpop.xlane.xlu0 %1422
        %v1424 = vsel %vm1169, %v1416, -inf
        %1425 = vmax.xlane.f32.xlu0 %v1424
        %v1426 = vpop.xlane.xlu0 %1425
        %v1427 = vsel %vm1169, %v1417, -inf
        %1428 = vmax.xlane.f32.xlu0 %v1427
        %v1429 = vpop.xlane.xlu0 %1428
        %v1430 = vsub.f32 %v1414, %v1420
        %v1431 = vsub.f32 %v1415, %v1423
        %v1432 = vsub.f32 %v1416, %v1426
        %v1433 = vsub.f32 %v1417, %v1429
        %v1434 = vmul.f32 %v1430, 1.442695
        %v1435 = vpow.pop %v1434
        %v1436 = vmul.f32 %v1431, 1.442695
        %v1437 = vpow.pop %v1436
        %v1438 = vmul.f32 %v1432, 1.442695
        %v1439 = vpow.pop %v1438
        %v1440 = vmul.f32 %v1433, 1.442695
        %v1441 = vpow.pop %v1440
        %v1442 = vsel %vm1169, %v1435, 0.0
        %1443 = vadd.xlane.f32.xlu0 %v1442
        %v1444 = vpop.xlane.xlu0 %1443
        %v1445 = vsel %vm1169, %v1437, 0.0
        %1446 = vadd.xlane.f32.xlu0 %v1445
        %v1447 = vpop.xlane.xlu0 %1446
        %v1448 = vsel %vm1169, %v1439, 0.0
        %1449 = vadd.xlane.f32.xlu0 %v1448
        %v1450 = vpop.xlane.xlu0 %1449
        %v1451 = vsel %vm1169, %v1441, 0.0
        %1452 = vadd.xlane.f32.xlu0 %v1451
        %v1453 = vpop.xlane.xlu0 %1452
        %v1454 = vrcp.pop %v1444
        %v1455 = vrcp.pop %v1447
        %v1456 = vrcp.pop %v1450
        %v1457 = vrcp.pop %v1453
        %v1458 = vmul.f32 %v1435, %v1454
        %v1459 = vmul.f32 %v1437, %v1455
        %v1460 = vmul.f32 %v1439, %v1456
        %v1461 = vmul.f32 %v1441, %v1457
        %v1462 = vpack.c.bf16 %v1459, %v1458
        %v1463 = vpack.c.bf16 %v1461, %v1460
        %1465 = vrot.lane.b32.xlu0 %v1052, 96
        %v1466 = vpop.permute.xlu0 %1465
        %v1469 = vsel %vm1169, %v1462, 0
        %1471 = vmatprep.subr.bf16.mxu0 0
        %1472 = vmatpush1.bf16.msra.mxu0 0
        %1473 = vmatprep.subr.bf16.mxu0 0
        %1474 = vmatpush1.bf16.msra.mxu0 0
        %1475 = vmatprep.subr.bf16.mxu0 0
        %1476 = vmatpush1.bf16.msra.mxu0 0
        %1477 = vmatprep.subr.bf16.mxu0 0
        %1478 = vmatpush1.bf16.msra.mxu0 0
        %1479 = vmatprep.subr.bf16.mxu0 0
        %1480 = vmatpush1.bf16.msra.mxu0 0
        %1481 = vmatprep.subr.bf16.mxu0 0
        %1482 = vmatpush1.bf16.msra.mxu0 0
        %1483 = vmatprep.subr.bf16.mxu0 0
        %1484 = vmatpush1.bf16.msra.mxu0 0
        %1485 = vmatprep.subr.bf16.mxu0 0
        %1486 = vmatpush1.bf16.msra.mxu0 %v1466
        %1487 = vmatprep.subr.bf16.mxu0 0
        %1488 = vmatpush2.bf16.msra.mxu0 0
        %1489 = vmatprep.subr.bf16.mxu0 0
        %1490 = vmatpush2.bf16.msra.mxu0 0
        %1491 = vmatprep.subr.bf16.mxu0 0
        %1492 = vmatpush2.bf16.msra.mxu0 0
        %1493 = vmatprep.subr.bf16.mxu0 0
        %1494 = vmatpush2.bf16.msra.mxu0 0
        %1495 = vmatprep.subr.bf16.mxu0 0
        %1496 = vmatpush2.bf16.msra.mxu0 0
        %1497 = vmatprep.subr.bf16.mxu0 0
        %1498 = vmatpush2.bf16.msra.mxu0 0
        %1499 = vmatprep.subr.bf16.mxu0 0
        %1500 = vmatpush2.bf16.msra.mxu0 0
        %1501 = vmatprep.subr.bf16.mxu0 0
        %1502 = vmatpush2.bf16.msra.mxu0 0
        %1503 = vmatprep.mubr.bf16.mxu0 0
        %1504 = vmatmul.mubr.bf16.gmra.mxu0 %v1469
        %v1505 = vpop.f32.mrf.mxu0
        %v1506 = vadd.f32 0.0, %v1505
        %v1507 = vpop.f32.mrf.mxu0
        %v1508 = vpop.f32.mrf.mxu0
        %v1509 = vadd.f32 0.0, %v1508
        %v1510 = vpop.f32.mrf.mxu0
        %1511 = vdwg.mxu0
        %1513 = vrot.lane.b32.xlu0 %v1053, 96
        %v1514 = vpop.permute.xlu0 %1513
        %v1517 = vsel %vm1169, %v1463, 0
        %1519 = vmatprep.subr.bf16.mxu0 0
        %1520 = vmatpush1.bf16.msra.mxu0 0
        %1521 = vmatprep.subr.bf16.mxu0 0
        %1522 = vmatpush1.bf16.msra.mxu0 0
        %1523 = vmatprep.subr.bf16.mxu0 0
        %1524 = vmatpush1.bf16.msra.mxu0 0
        %1525 = vmatprep.subr.bf16.mxu0 0
        %1526 = vmatpush1.bf16.msra.mxu0 0
        %1527 = vmatprep.subr.bf16.mxu0 0
        %1528 = vmatpush1.bf16.msra.mxu0 0
        %1529 = vmatprep.subr.bf16.mxu0 0
        %1530 = vmatpush1.bf16.msra.mxu0 0
        %1531 = vmatprep.subr.bf16.mxu0 0
        %1532 = vmatpush1.bf16.msra.mxu0 0
        %1533 = vmatprep.subr.bf16.mxu0 0
        %1534 = vmatpush1.bf16.msra.mxu0 %v1514
        %1535 = vmatprep.subr.bf16.mxu0 0
        %1536 = vmatpush2.bf16.msra.mxu0 0
        %1537 = vmatprep.subr.bf16.mxu0 0
        %1538 = vmatpush2.bf16.msra.mxu0 0
        %1539 = vmatprep.subr.bf16.mxu0 0
        %1540 = vmatpush2.bf16.msra.mxu0 0
        %1541 = vmatprep.subr.bf16.mxu0 0
        %1542 = vmatpush2.bf16.msra.mxu0 0
        %1543 = vmatprep.subr.bf16.mxu0 0
        %1544 = vmatpush2.bf16.msra.mxu0 0
        %1545 = vmatprep.subr.bf16.mxu0 0
        %1546 = vmatpush2.bf16.msra.mxu0 0
        %1547 = vmatprep.subr.bf16.mxu0 0
        %1548 = vmatpush2.bf16.msra.mxu0 0
        %1549 = vmatprep.subr.bf16.mxu0 0
        %1550 = vmatpush2.bf16.msra.mxu0 0
        %1551 = vmatprep.mubr.bf16.mxu0 0
        %1552 = vmatmul.mubr.bf16.gmra.mxu0 %v1517
        %v1553 = vpop.f32.mrf.mxu0
        %v1554 = vadd.f32 0.0, %v1553
        %v1555 = vpop.f32.mrf.mxu0
        %v1556 = vpop.f32.mrf.mxu0
        %v1557 = vadd.f32 0.0, %v1556
        %v1558 = vpop.f32.mrf.mxu0
        %1559 = vdwg.mxu0
        %1560 = vrot.lane.b32.xlu0 %v1048, 64
        %v1561 = vpop.permute.xlu0 %1560
        %1562 = vrot.lane.b32.xlu0 %v1050, 64
        %v1563 = vpop.permute.xlu0 %1562
        %v1565 = vsel %vm1054, %v1561, 0
        %v1568 = vsel %vm1054, %v1563, 0
        %1570 = vmatprep.subr.bf16.mxu0 0
        %1571 = vmatpush1.bf16.xpose.msra.mxu0 0
        %1572 = vmatprep.subr.bf16.mxu0 0
        %1573 = vmatpush1.bf16.xpose.msra.mxu0 0
        %1574 = vmatprep.subr.bf16.mxu0 0
        %1575 = vmatpush1.bf16.xpose.msra.mxu0 0
        %1576 = vmatprep.subr.bf16.mxu0 0
        %1577 = vmatpush1.bf16.xpose.msra.mxu0 0
        %1578 = vmatprep.subr.bf16.mxu0 0
        %1579 = vmatpush1.bf16.xpose.msra.mxu0 0
        %1580 = vmatprep.subr.bf16.mxu0 0
        %1581 = vmatpush1.bf16.xpose.msra.mxu0 0
        %1582 = vmatprep.subr.bf16.mxu0 0
        %1583 = vmatpush1.bf16.xpose.msra.mxu0 0
        %1584 = vmatprep.subr.bf16.mxu0 0
        %1585 = vmatpush1.bf16.xpose.msra.mxu0 %v1568
        %1586 = vmatprep.subr.bf16.mxu0 0
        %1587 = vmatpush2.bf16.xpose.msra.mxu0 0
        %1588 = vmatprep.subr.bf16.mxu0 0
        %1589 = vmatpush2.bf16.xpose.msra.mxu0 0
        %1590 = vmatprep.subr.bf16.mxu0 0
        %1591 = vmatpush2.bf16.xpose.msra.mxu0 0
        %1592 = vmatprep.subr.bf16.mxu0 0
        %1593 = vmatpush2.bf16.xpose.msra.mxu0 0
        %1594 = vmatprep.subr.bf16.mxu0 0
        %1595 = vmatpush2.bf16.xpose.msra.mxu0 0
        %1596 = vmatprep.subr.bf16.mxu0 0
        %1597 = vmatpush2.bf16.xpose.msra.mxu0 0
        %1598 = vmatprep.subr.bf16.mxu0 0
        %1599 = vmatpush2.bf16.xpose.msra.mxu0 0
        %1600 = vmatprep.subr.bf16.mxu0 0
        %1601 = vmatpush2.bf16.xpose.msra.mxu0 0
        %1602 = vmatprep.mubr.bf16.mxu0 0
        %1603 = vmatmul.mubr.bf16.gmra.mxu0 %v1565
        %v1604 = vpop.f32.mrf.mxu0
        %v1605 = vadd.f32 0.0, %v1604
        %v1606 = vpop.f32.mrf.mxu0
        %v1607 = vpop.f32.mrf.mxu0
        %v1608 = vadd.f32 0.0, %v1607
        %v1609 = vpop.f32.mrf.mxu0
        %1610 = vdwg.mxu0
        %1611 = vrot.lane.b32.xlu0 %v1049, 64
        %v1612 = vpop.permute.xlu0 %1611
        %1613 = vrot.lane.b32.xlu0 %v1051, 64
        %v1614 = vpop.permute.xlu0 %1613
        %v1616 = vsel %vm1054, %v1612, 0
        %v1619 = vsel %vm1054, %v1614, 0
        %1621 = vmatprep.subr.bf16.mxu0 0
        %1622 = vmatpush1.bf16.xpose.msra.mxu0 0
        %1623 = vmatprep.subr.bf16.mxu0 0
        %1624 = vmatpush1.bf16.xpose.msra.mxu0 0
        %1625 = vmatprep.subr.bf16.mxu0 0
        %1626 = vmatpush1.bf16.xpose.msra.mxu0 0
        %1627 = vmatprep.subr.bf16.mxu0 0
        %1628 = vmatpush1.bf16.xpose.msra.mxu0 0
        %1629 = vmatprep.subr.bf16.mxu0 0
        %1630 = vmatpush1.bf16.xpose.msra.mxu0 0
        %1631 = vmatprep.subr.bf16.mxu0 0
        %1632 = vmatpush1.bf16.xpose.msra.mxu0 0
        %1633 = vmatprep.subr.bf16.mxu0 0
        %1634 = vmatpush1.bf16.xpose.msra.mxu0 0
        %1635 = vmatprep.subr.bf16.mxu0 0
        %1636 = vmatpush1.bf16.xpose.msra.mxu0 %v1619
        %1637 = vmatprep.subr.bf16.mxu0 0
        %1638 = vmatpush2.bf16.xpose.msra.mxu0 0
        %1639 = vmatprep.subr.bf16.mxu0 0
        %1640 = vmatpush2.bf16.xpose.msra.mxu0 0
        %1641 = vmatprep.subr.bf16.mxu0 0
        %1642 = vmatpush2.bf16.xpose.msra.mxu0 0
        %1643 = vmatprep.subr.bf16.mxu0 0
        %1644 = vmatpush2.bf16.xpose.msra.mxu0 0
        %1645 = vmatprep.subr.bf16.mxu0 0
        %1646 = vmatpush2.bf16.xpose.msra.mxu0 0
        %1647 = vmatprep.subr.bf16.mxu0 0
        %1648 = vmatpush2.bf16.xpose.msra.mxu0 0
        %1649 = vmatprep.subr.bf16.mxu0 0
        %1650 = vmatpush2.bf16.xpose.msra.mxu0 0
        %1651 = vmatprep.subr.bf16.mxu0 0
        %1652 = vmatpush2.bf16.xpose.msra.mxu0 0
        %1653 = vmatprep.mubr.bf16.mxu0 0
        %1654 = vmatmul.mubr.bf16.gmra.mxu0 %v1616
        %v1655 = vpop.f32.mrf.mxu0
        %v1656 = vadd.f32 0.0, %v1655
        %v1657 = vpop.f32.mrf.mxu0
        %v1658 = vpop.f32.mrf.mxu0
        %v1659 = vadd.f32 0.0, %v1658
        %v1660 = vpop.f32.mrf.mxu0
        %1661 = vdwg.mxu0
        %v1662 = vmul.f32 %v1605, 0.17677669
        %v1663 = vmul.f32 %v1608, 0.17677669
        %v1664 = vmul.f32 %v1656, 0.17677669
        %v1665 = vmul.f32 %v1659, 0.17677669
        %v1666 = vadd.f32 %v1662, %v1158
        %v1667 = vadd.f32 %v1663, %v1158
        %v1668 = vadd.f32 %v1664, %v1162
        %v1669 = vadd.f32 %v1665, %v1162
        %v1670 = vsel %vm1169, %v1666, -inf
        %1671 = vmax.xlane.f32.xlu0 %v1670
        %v1672 = vpop.xlane.xlu0 %1671
        %v1673 = vsel %vm1169, %v1667, -inf
        %1674 = vmax.xlane.f32.xlu0 %v1673
        %v1675 = vpop.xlane.xlu0 %1674
        %v1676 = vsel %vm1169, %v1668, -inf
        %1677 = vmax.xlane.f32.xlu0 %v1676
        %v1678 = vpop.xlane.xlu0 %1677
        %v1679 = vsel %vm1169, %v1669, -inf
        %1680 = vmax.xlane.f32.xlu0 %v1679
        %v1681 = vpop.xlane.xlu0 %1680
        %v1682 = vsub.f32 %v1666, %v1672
        %v1683 = vsub.f32 %v1667, %v1675
        %v1684 = vsub.f32 %v1668, %v1678
        %v1685 = vsub.f32 %v1669, %v1681
        %v1686 = vmul.f32 %v1682, 1.442695
        %v1687 = vpow.pop %v1686
        %v1688 = vmul.f32 %v1683, 1.442695
        %v1689 = vpow.pop %v1688
        %v1690 = vmul.f32 %v1684, 1.442695
        %v1691 = vpow.pop %v1690
        %v1692 = vmul.f32 %v1685, 1.442695
        %v1693 = vpow.pop %v1692
        %v1694 = vsel %vm1169, %v1687, 0.0
        %1695 = vadd.xlane.f32.xlu0 %v1694
        %v1696 = vpop.xlane.xlu0 %1695
        %v1697 = vsel %vm1169, %v1689, 0.0
        %1698 = vadd.xlane.f32.xlu0 %v1697
        %v1699 = vpop.xlane.xlu0 %1698
        %v1700 = vsel %vm1169, %v1691, 0.0
        %1701 = vadd.xlane.f32.xlu0 %v1700
        %v1702 = vpop.xlane.xlu0 %1701
        %v1703 = vsel %vm1169, %v1693, 0.0
        %1704 = vadd.xlane.f32.xlu0 %v1703
        %v1705 = vpop.xlane.xlu0 %1704
        %v1706 = vrcp.pop %v1696
        %v1707 = vrcp.pop %v1699
        %v1708 = vrcp.pop %v1702
        %v1709 = vrcp.pop %v1705
        %v1710 = vmul.f32 %v1687, %v1706
        %v1711 = vmul.f32 %v1689, %v1707
        %v1712 = vmul.f32 %v1691, %v1708
        %v1713 = vmul.f32 %v1693, %v1709
        %v1714 = vpack.c.bf16 %v1711, %v1710
        %v1715 = vpack.c.bf16 %v1713, %v1712
        %1716 = vrot.lane.b32.xlu0 %v1052, 64
        %v1717 = vpop.permute.xlu0 %1716
        %v1720 = vsel %vm1169, %v1714, 0
        %1722 = vmatprep.subr.bf16.mxu0 0
        %1723 = vmatpush1.bf16.msra.mxu0 0
        %1724 = vmatprep.subr.bf16.mxu0 0
        %1725 = vmatpush1.bf16.msra.mxu0 0
        %1726 = vmatprep.subr.bf16.mxu0 0
        %1727 = vmatpush1.bf16.msra.mxu0 0
        %1728 = vmatprep.subr.bf16.mxu0 0
        %1729 = vmatpush1.bf16.msra.mxu0 0
        %1730 = vmatprep.subr.bf16.mxu0 0
        %1731 = vmatpush1.bf16.msra.mxu0 0
        %1732 = vmatprep.subr.bf16.mxu0 0
        %1733 = vmatpush1.bf16.msra.mxu0 0
        %1734 = vmatprep.subr.bf16.mxu0 0
        %1735 = vmatpush1.bf16.msra.mxu0 0
        %1736 = vmatprep.subr.bf16.mxu0 0
        %1737 = vmatpush1.bf16.msra.mxu0 %v1717
        %1738 = vmatprep.subr.bf16.mxu0 0
        %1739 = vmatpush2.bf16.msra.mxu0 0
        %1740 = vmatprep.subr.bf16.mxu0 0
        %1741 = vmatpush2.bf16.msra.mxu0 0
        %1742 = vmatprep.subr.bf16.mxu0 0
        %1743 = vmatpush2.bf16.msra.mxu0 0
        %1744 = vmatprep.subr.bf16.mxu0 0
        %1745 = vmatpush2.bf16.msra.mxu0 0
        %1746 = vmatprep.subr.bf16.mxu0 0
        %1747 = vmatpush2.bf16.msra.mxu0 0
        %1748 = vmatprep.subr.bf16.mxu0 0
        %1749 = vmatpush2.bf16.msra.mxu0 0
        %1750 = vmatprep.subr.bf16.mxu0 0
        %1751 = vmatpush2.bf16.msra.mxu0 0
        %1752 = vmatprep.subr.bf16.mxu0 0
        %1753 = vmatpush2.bf16.msra.mxu0 0
        %1754 = vmatprep.mubr.bf16.mxu0 0
        %1755 = vmatmul.mubr.bf16.gmra.mxu0 %v1720
        %v1756 = vpop.f32.mrf.mxu0
        %v1757 = vadd.f32 0.0, %v1756
        %v1758 = vpop.f32.mrf.mxu0
        %v1759 = vpop.f32.mrf.mxu0
        %v1760 = vadd.f32 0.0, %v1759
        %v1761 = vpop.f32.mrf.mxu0
        %1762 = vdwg.mxu0
        %1763 = vrot.lane.b32.xlu0 %v1053, 64
        %v1764 = vpop.permute.xlu0 %1763
        %v1767 = vsel %vm1169, %v1715, 0
        %1769 = vmatprep.subr.bf16.mxu0 0
        %1770 = vmatpush1.bf16.msra.mxu0 0
        %1771 = vmatprep.subr.bf16.mxu0 0
        %1772 = vmatpush1.bf16.msra.mxu0 0
        %1773 = vmatprep.subr.bf16.mxu0 0
        %1774 = vmatpush1.bf16.msra.mxu0 0
        %1775 = vmatprep.subr.bf16.mxu0 0
        %1776 = vmatpush1.bf16.msra.mxu0 0
        %1777 = vmatprep.subr.bf16.mxu0 0
        %1778 = vmatpush1.bf16.msra.mxu0 0
        %1779 = vmatprep.subr.bf16.mxu0 0
        %1780 = vmatpush1.bf16.msra.mxu0 0
        %1781 = vmatprep.subr.bf16.mxu0 0
        %1782 = vmatpush1.bf16.msra.mxu0 0
        %1783 = vmatprep.subr.bf16.mxu0 0
        %1784 = vmatpush1.bf16.msra.mxu0 %v1764
        %1785 = vmatprep.subr.bf16.mxu0 0
        %1786 = vmatpush2.bf16.msra.mxu0 0
        %1787 = vmatprep.subr.bf16.mxu0 0
        %1788 = vmatpush2.bf16.msra.mxu0 0
        %1789 = vmatprep.subr.bf16.mxu0 0
        %1790 = vmatpush2.bf16.msra.mxu0 0
        %1791 = vmatprep.subr.bf16.mxu0 0
        %1792 = vmatpush2.bf16.msra.mxu0 0
        %1793 = vmatprep.subr.bf16.mxu0 0
        %1794 = vmatpush2.bf16.msra.mxu0 0
        %1795 = vmatprep.subr.bf16.mxu0 0
        %1796 = vmatpush2.bf16.msra.mxu0 0
        %1797 = vmatprep.subr.bf16.mxu0 0
        %1798 = vmatpush2.bf16.msra.mxu0 0
        %1799 = vmatprep.subr.bf16.mxu0 0
        %1800 = vmatpush2.bf16.msra.mxu0 0
        %1801 = vmatprep.mubr.bf16.mxu0 0
        %1802 = vmatmul.mubr.bf16.gmra.mxu0 %v1767
        %v1803 = vpop.f32.mrf.mxu0
        %v1804 = vadd.f32 0.0, %v1803
        %v1805 = vpop.f32.mrf.mxu0
        %v1806 = vpop.f32.mrf.mxu0
        %v1807 = vadd.f32 0.0, %v1806
        %v1808 = vpop.f32.mrf.mxu0
        %1809 = vdwg.mxu0
        %1810 = vrot.lane.b32.xlu0 %v1048, 32
        %v1811 = vpop.permute.xlu0 %1810
        %1812 = vrot.lane.b32.xlu0 %v1050, 32
        %v1813 = vpop.permute.xlu0 %1812
        %v1815 = vsel %vm1054, %v1811, 0
        %v1818 = vsel %vm1054, %v1813, 0
        %1820 = vmatprep.subr.bf16.mxu0 0
        %1821 = vmatpush1.bf16.xpose.msra.mxu0 0
        %1822 = vmatprep.subr.bf16.mxu0 0
        %1823 = vmatpush1.bf16.xpose.msra.mxu0 0
        %1824 = vmatprep.subr.bf16.mxu0 0
        %1825 = vmatpush1.bf16.xpose.msra.mxu0 0
        %1826 = vmatprep.subr.bf16.mxu0 0
        %1827 = vmatpush1.bf16.xpose.msra.mxu0 0
        %1828 = vmatprep.subr.bf16.mxu0 0
        %1829 = vmatpush1.bf16.xpose.msra.mxu0 0
        %1830 = vmatprep.subr.bf16.mxu0 0
        %1831 = vmatpush1.bf16.xpose.msra.mxu0 0
        %1832 = vmatprep.subr.bf16.mxu0 0
        %1833 = vmatpush1.bf16.xpose.msra.mxu0 0
        %1834 = vmatprep.subr.bf16.mxu0 0
        %1835 = vmatpush1.bf16.xpose.msra.mxu0 %v1818
        %1836 = vmatprep.subr.bf16.mxu0 0
        %1837 = vmatpush2.bf16.xpose.msra.mxu0 0
        %1838 = vmatprep.subr.bf16.mxu0 0
        %1839 = vmatpush2.bf16.xpose.msra.mxu0 0
        %1840 = vmatprep.subr.bf16.mxu0 0
        %1841 = vmatpush2.bf16.xpose.msra.mxu0 0
        %1842 = vmatprep.subr.bf16.mxu0 0
        %1843 = vmatpush2.bf16.xpose.msra.mxu0 0
        %1844 = vmatprep.subr.bf16.mxu0 0
        %1845 = vmatpush2.bf16.xpose.msra.mxu0 0
        %1846 = vmatprep.subr.bf16.mxu0 0
        %1847 = vmatpush2.bf16.xpose.msra.mxu0 0
        %1848 = vmatprep.subr.bf16.mxu0 0
        %1849 = vmatpush2.bf16.xpose.msra.mxu0 0
        %1850 = vmatprep.subr.bf16.mxu0 0
        %1851 = vmatpush2.bf16.xpose.msra.mxu0 0
        %1852 = vmatprep.mubr.bf16.mxu0 0
        %1853 = vmatmul.mubr.bf16.gmra.mxu0 %v1815
        %v1854 = vpop.f32.mrf.mxu0
        %v1855 = vadd.f32 0.0, %v1854
        %v1856 = vpop.f32.mrf.mxu0
        %v1857 = vpop.f32.mrf.mxu0
        %v1858 = vadd.f32 0.0, %v1857
        %v1859 = vpop.f32.mrf.mxu0
        %1860 = vdwg.mxu0
        %1861 = vrot.lane.b32.xlu0 %v1049, 32
        %v1862 = vpop.permute.xlu0 %1861
        %1863 = vrot.lane.b32.xlu0 %v1051, 32
        %v1864 = vpop.permute.xlu0 %1863
        %v1866 = vsel %vm1054, %v1862, 0
        %v1869 = vsel %vm1054, %v1864, 0
        %1871 = vmatprep.subr.bf16.mxu0 0
        %1872 = vmatpush1.bf16.xpose.msra.mxu0 0
        %1873 = vmatprep.subr.bf16.mxu0 0
        %1874 = vmatpush1.bf16.xpose.msra.mxu0 0
        %1875 = vmatprep.subr.bf16.mxu0 0
        %1876 = vmatpush1.bf16.xpose.msra.mxu0 0
        %1877 = vmatprep.subr.bf16.mxu0 0
        %1878 = vmatpush1.bf16.xpose.msra.mxu0 0
        %1879 = vmatprep.subr.bf16.mxu0 0
        %1880 = vmatpush1.bf16.xpose.msra.mxu0 0
        %1881 = vmatprep.subr.bf16.mxu0 0
        %1882 = vmatpush1.bf16.xpose.msra.mxu0 0
        %1883 = vmatprep.subr.bf16.mxu0 0
        %1884 = vmatpush1.bf16.xpose.msra.mxu0 0
        %1885 = vmatprep.subr.bf16.mxu0 0
        %1886 = vmatpush1.bf16.xpose.msra.mxu0 %v1869
        %1887 = vmatprep.subr.bf16.mxu0 0
        %1888 = vmatpush2.bf16.xpose.msra.mxu0 0
        %1889 = vmatprep.subr.bf16.mxu0 0
        %1890 = vmatpush2.bf16.xpose.msra.mxu0 0
        %1891 = vmatprep.subr.bf16.mxu0 0
        %1892 = vmatpush2.bf16.xpose.msra.mxu0 0
        %1893 = vmatprep.subr.bf16.mxu0 0
        %1894 = vmatpush2.bf16.xpose.msra.mxu0 0
        %1895 = vmatprep.subr.bf16.mxu0 0
        %1896 = vmatpush2.bf16.xpose.msra.mxu0 0
        %1897 = vmatprep.subr.bf16.mxu0 0
        %1898 = vmatpush2.bf16.xpose.msra.mxu0 0
        %1899 = vmatprep.subr.bf16.mxu0 0
        %1900 = vmatpush2.bf16.xpose.msra.mxu0 0
        %1901 = vmatprep.subr.bf16.mxu0 0
        %1902 = vmatpush2.bf16.xpose.msra.mxu0 0
        %1903 = vmatprep.mubr.bf16.mxu0 0
        %1904 = vmatmul.mubr.bf16.gmra.mxu0 %v1866
        %v1905 = vpop.f32.mrf.mxu0
        %v1906 = vadd.f32 0.0, %v1905
        %v1907 = vpop.f32.mrf.mxu0
        %v1908 = vpop.f32.mrf.mxu0
        %v1909 = vadd.f32 0.0, %v1908
        %v1910 = vpop.f32.mrf.mxu0
        %1911 = vdwg.mxu0
        %v1912 = vmul.f32 %v1855, 0.17677669
        %v1913 = vmul.f32 %v1858, 0.17677669
        %v1914 = vmul.f32 %v1906, 0.17677669
        %v1915 = vmul.f32 %v1909, 0.17677669
        %v1916 = vadd.f32 %v1912, %v1158
        %v1917 = vadd.f32 %v1913, %v1158
        %v1918 = vadd.f32 %v1914, %v1162
        %v1919 = vadd.f32 %v1915, %v1162
        %v1920 = vsel %vm1169, %v1916, -inf
        %1921 = vmax.xlane.f32.xlu0 %v1920
        %v1922 = vpop.xlane.xlu0 %1921
        %v1923 = vsel %vm1169, %v1917, -inf
        %1924 = vmax.xlane.f32.xlu0 %v1923
        %v1925 = vpop.xlane.xlu0 %1924
        %v1926 = vsel %vm1169, %v1918, -inf
        %1927 = vmax.xlane.f32.xlu0 %v1926
        %v1928 = vpop.xlane.xlu0 %1927
        %v1929 = vsel %vm1169, %v1919, -inf
        %1930 = vmax.xlane.f32.xlu0 %v1929
        %v1931 = vpop.xlane.xlu0 %1930
        %v1932 = vsub.f32 %v1916, %v1922
        %v1933 = vsub.f32 %v1917, %v1925
        %v1934 = vsub.f32 %v1918, %v1928
        %v1935 = vsub.f32 %v1919, %v1931
        %v1936 = vmul.f32 %v1932, 1.442695
        %v1937 = vpow.pop %v1936
        %v1938 = vmul.f32 %v1933, 1.442695
        %v1939 = vpow.pop %v1938
        %v1940 = vmul.f32 %v1934, 1.442695
        %v1941 = vpow.pop %v1940
        %v1942 = vmul.f32 %v1935, 1.442695
        %v1943 = vpow.pop %v1942
        %v1944 = vsel %vm1169, %v1937, 0.0
        %1945 = vadd.xlane.f32.xlu0 %v1944
        %v1946 = vpop.xlane.xlu0 %1945
        %v1947 = vsel %vm1169, %v1939, 0.0
        %1948 = vadd.xlane.f32.xlu0 %v1947
        %v1949 = vpop.xlane.xlu0 %1948
        %v1950 = vsel %vm1169, %v1941, 0.0
        %1951 = vadd.xlane.f32.xlu0 %v1950
        %v1952 = vpop.xlane.xlu0 %1951
        %v1953 = vsel %vm1169, %v1943, 0.0
        %1954 = vadd.xlane.f32.xlu0 %v1953
        %v1955 = vpop.xlane.xlu0 %1954
        %v1956 = vrcp.pop %v1946
        %v1957 = vrcp.pop %v1949
        %v1958 = vrcp.pop %v1952
        %v1959 = vrcp.pop %v1955
        %v1960 = vmul.f32 %v1937, %v1956
        %v1961 = vmul.f32 %v1939, %v1957
        %v1962 = vmul.f32 %v1941, %v1958
        %v1963 = vmul.f32 %v1943, %v1959
        %v1964 = vpack.c.bf16 %v1961, %v1960
        %v1965 = vpack.c.bf16 %v1963, %v1962
        %1966 = vrot.lane.b32.xlu0 %v1052, 32
        %v1967 = vpop.permute.xlu0 %1966
        %v1970 = vsel %vm1169, %v1964, 0
        %1972 = vmatprep.subr.bf16.mxu0 0
        %1973 = vmatpush1.bf16.msra.mxu0 0
        %1974 = vmatprep.subr.bf16.mxu0 0
        %1975 = vmatpush1.bf16.msra.mxu0 0
        %1976 = vmatprep.subr.bf16.mxu0 0
        %1977 = vmatpush1.bf16.msra.mxu0 0
        %1978 = vmatprep.subr.bf16.mxu0 0
        %1979 = vmatpush1.bf16.msra.mxu0 0
        %1980 = vmatprep.subr.bf16.mxu0 0
        %1981 = vmatpush1.bf16.msra.mxu0 0
        %1982 = vmatprep.subr.bf16.mxu0 0
        %1983 = vmatpush1.bf16.msra.mxu0 0
        %1984 = vmatprep.subr.bf16.mxu0 0
        %1985 = vmatpush1.bf16.msra.mxu0 0
        %1986 = vmatprep.subr.bf16.mxu0 0
        %1987 = vmatpush1.bf16.msra.mxu0 %v1967
        %1988 = vmatprep.subr.bf16.mxu0 0
        %1989 = vmatpush2.bf16.msra.mxu0 0
        %1990 = vmatprep.subr.bf16.mxu0 0
        %1991 = vmatpush2.bf16.msra.mxu0 0
        %1992 = vmatprep.subr.bf16.mxu0 0
        %1993 = vmatpush2.bf16.msra.mxu0 0
        %1994 = vmatprep.subr.bf16.mxu0 0
        %1995 = vmatpush2.bf16.msra.mxu0 0
        %1996 = vmatprep.subr.bf16.mxu0 0
        %1997 = vmatpush2.bf16.msra.mxu0 0
        %1998 = vmatprep.subr.bf16.mxu0 0
        %1999 = vmatpush2.bf16.msra.mxu0 0
        %2000 = vmatprep.subr.bf16.mxu0 0
        %2001 = vmatpush2.bf16.msra.mxu0 0
        %2002 = vmatprep.subr.bf16.mxu0 0
        %2003 = vmatpush2.bf16.msra.mxu0 0
        %2004 = vmatprep.mubr.bf16.mxu0 0
        %2005 = vmatmul.mubr.bf16.gmra.mxu0 %v1970
        %v2006 = vpop.f32.mrf.mxu0
        %v2007 = vadd.f32 0.0, %v2006
        %v2008 = vpop.f32.mrf.mxu0
        %v2009 = vpop.f32.mrf.mxu0
        %v2010 = vadd.f32 0.0, %v2009
        %v2011 = vpop.f32.mrf.mxu0
        %2012 = vdwg.mxu0
        %2013 = vrot.lane.b32.xlu0 %v1053, 32
        %v2014 = vpop.permute.xlu0 %2013
        %v2017 = vsel %vm1169, %v1965, 0
        %2019 = vmatprep.subr.bf16.mxu0 0
        %2020 = vmatpush1.bf16.msra.mxu0 0
        %2021 = vmatprep.subr.bf16.mxu0 0
        %2022 = vmatpush1.bf16.msra.mxu0 0
        %2023 = vmatprep.subr.bf16.mxu0 0
        %2024 = vmatpush1.bf16.msra.mxu0 0
        %2025 = vmatprep.subr.bf16.mxu0 0
        %2026 = vmatpush1.bf16.msra.mxu0 0
        %2027 = vmatprep.subr.bf16.mxu0 0
        %2028 = vmatpush1.bf16.msra.mxu0 0
        %2029 = vmatprep.subr.bf16.mxu0 0
        %2030 = vmatpush1.bf16.msra.mxu0 0
        %2031 = vmatprep.subr.bf16.mxu0 0
        %2032 = vmatpush1.bf16.msra.mxu0 0
        %2033 = vmatprep.subr.bf16.mxu0 0
        %2034 = vmatpush1.bf16.msra.mxu0 %v2014
        %2035 = vmatprep.subr.bf16.mxu0 0
        %2036 = vmatpush2.bf16.msra.mxu0 0
        %2037 = vmatprep.subr.bf16.mxu0 0
        %2038 = vmatpush2.bf16.msra.mxu0 0
        %2039 = vmatprep.subr.bf16.mxu0 0
        %2040 = vmatpush2.bf16.msra.mxu0 0
        %2041 = vmatprep.subr.bf16.mxu0 0
        %2042 = vmatpush2.bf16.msra.mxu0 0
        %2043 = vmatprep.subr.bf16.mxu0 0
        %2044 = vmatpush2.bf16.msra.mxu0 0
        %2045 = vmatprep.subr.bf16.mxu0 0
        %2046 = vmatpush2.bf16.msra.mxu0 0
        %2047 = vmatprep.subr.bf16.mxu0 0
        %2048 = vmatpush2.bf16.msra.mxu0 0
        %2049 = vmatprep.subr.bf16.mxu0 0
        %2050 = vmatpush2.bf16.msra.mxu0 0
        %2051 = vmatprep.mubr.bf16.mxu0 0
        %2052 = vmatmul.mubr.bf16.gmra.mxu0 %v2017
        %v2053 = vpop.f32.mrf.mxu0
        %v2054 = vadd.f32 0.0, %v2053
        %v2055 = vpop.f32.mrf.mxu0
        %v2056 = vpop.f32.mrf.mxu0
        %v2057 = vadd.f32 0.0, %v2056
        %v2058 = vpop.f32.mrf.mxu0
        %2059 = vdwg.mxu0
        %2064 = vrot.lane.b32.xlu0 %v1506, 32
        %v2065 = vpop.permute.xlu0 %2064
        %2066 = vrot.lane.b32.xlu0 %v1509, 32
        %v2067 = vpop.permute.xlu0 %2066
        %2068 = vrot.lane.b32.xlu0 %v1554, 32
        %v2069 = vpop.permute.xlu0 %2068
        %2070 = vrot.lane.b32.xlu0 %v1557, 32
        %v2071 = vpop.permute.xlu0 %2070
        %2080 = vrot.lane.b32.xlu0 %v1757, 64
        %v2081 = vpop.permute.xlu0 %2080
        %2082 = vrot.lane.b32.xlu0 %v1760, 64
        %v2083 = vpop.permute.xlu0 %2082
        %2084 = vrot.lane.b32.xlu0 %v1804, 64
        %v2085 = vpop.permute.xlu0 %2084
        %2086 = vrot.lane.b32.xlu0 %v1807, 64
        %v2087 = vpop.permute.xlu0 %2086
        %2096 = vrot.lane.b32.xlu0 %v2007, 96
        %v2097 = vpop.permute.xlu0 %2096
        %2098 = vrot.lane.b32.xlu0 %v2010, 96
        %v2099 = vpop.permute.xlu0 %2098
        %2100 = vrot.lane.b32.xlu0 %v2054, 96
        %v2101 = vpop.permute.xlu0 %2100
        %2102 = vrot.lane.b32.xlu0 %v2057, 96
        %v2103 = vpop.permute.xlu0 %2102
        %v2108 = vsel %vm1054, %v1254, %v2065
        %v2109 = vsel %vm1054, %v1257, %v2067
        %v2110 = vsel %vm1054, %v1298, %v2069
        %v2111 = vsel %vm1054, %v1301, %v2071
        %vm2112 = vcmask 523264
        %v2113 = vsel %vm2112, %v2108, %v2081
        %v2114 = vsel %vm2112, %v2109, %v2083
        %v2115 = vsel %vm2112, %v2110, %v2085
        %v2116 = vsel %vm2112, %v2111, %v2087
        %vm2117 = vcmask 785408
        %v2118 = vsel %vm2117, %v2113, %v2097
        %v2119 = vsel %vm2117, %v2114, %v2099
        %v2120 = vsel %vm2117, %v2115, %v2101
        %v2121 = vsel %vm2117, %v2116, %v2103
        %v2122 = vpack.c.bf16 %v2119, %v2118
        %v2123 = vpack.c.bf16 %v2121, %v2120
        %v2124 = vld [vmem:[%s626] sm:$0xf]
        %v2125 = vld [vmem:[%s626 + $0x4] sm:$0xf]
        %v2126 = vld [vmem:[%s626 + $0x8] sm:$0xf]
        %v2127 = vld [vmem:[%s626 + $0xc] sm:$0xf]
        %v2128 = vld [vmem:[%s626 + $0x10] sm:$0xf]
        %v2129 = vld [vmem:[%s626 + $0x14] sm:$0xf]
        %v2130 = vld [vmem:[%s626 + $0x18] sm:$0xf]
        %v2131 = vld [vmem:[%s626 + $0x1c] sm:$0xf]
        %v2132 = vld [vmem:[%s626 + $0x20] sm:$0xf]
        %v2133 = vld [vmem:[%s626 + $0x24] sm:$0xf]
        %v2134 = vld [vmem:[%s626 + $0x28] sm:$0xf]
        %v2135 = vld [vmem:[%s626 + $0x2c] sm:$0xf]
        %v2136 = vld [vmem:[%s626 + $0x30] sm:$0xf]
        %v2137 = vld [vmem:[%s626 + $0x34] sm:$0xf]
        %v2138 = vld [vmem:[%s626 + $0x38] sm:$0xf]
        %v2139 = vld [vmem:[%s626 + $0x3c] sm:$0xf]
        %v2140 = vld [vmem:[%s728] sm:$0x1]
        %v2142 = vlaneseq
        %v2143 = vshrl.u32 %v2142, 7
        %v2144 = vsub.s32 0, %v2143
        %v2145 = vrot.slane %v2140, %v2144
        %v2163 = vunpack.c.l.b16 %v2124
        %v2164 = vunpack.c.l.b16 %v2125
        %v2165 = vunpack.c.l.b16 %v2126
        %v2166 = vunpack.c.l.b16 %v2127
        %v2167 = vunpack.c.l.b16 %v2128
        %v2168 = vunpack.c.l.b16 %v2129
        %v2169 = vunpack.c.l.b16 %v2130
        %v2170 = vunpack.c.l.b16 %v2131
        %v2171 = vunpack.c.l.b16 %v2132
        %v2172 = vunpack.c.l.b16 %v2133
        %v2173 = vunpack.c.l.b16 %v2134
        %v2174 = vunpack.c.l.b16 %v2135
        %v2175 = vunpack.c.l.b16 %v2136
        %v2176 = vunpack.c.l.b16 %v2137
        %v2177 = vunpack.c.l.b16 %v2138
        %v2178 = vunpack.c.l.b16 %v2139
        %v2179 = vpack.c.b16 %v2164, %v2163
        %v2180 = vpack.c.b16 %v2166, %v2165
        %v2181 = vpack.c.b16 %v2168, %v2167
        %v2182 = vpack.c.b16 %v2170, %v2169
        %v2183 = vpack.c.b16 %v2172, %v2171
        %v2184 = vpack.c.b16 %v2174, %v2173
        %v2185 = vpack.c.b16 %v2176, %v2175
        %v2186 = vpack.c.b16 %v2178, %v2177
        %2195 = vmatprep.subr.bf16.mxu0 0
        %2196 = vmatpush1.bf16.msra.mxu0 %v2186
        %2197 = vmatprep.subr.bf16.mxu0 0
        %2198 = vmatpush1.bf16.msra.mxu0 %v2185
        %2199 = vmatprep.subr.bf16.mxu0 0
        %2200 = vmatpush1.bf16.msra.mxu0 %v2184
        %2201 = vmatprep.subr.bf16.mxu0 0
        %2202 = vmatpush1.bf16.msra.mxu0 %v2183
        %2203 = vmatprep.subr.bf16.mxu0 0
        %2204 = vmatpush1.bf16.msra.mxu0 %v2182
        %2205 = vmatprep.subr.bf16.mxu0 0
        %2206 = vmatpush1.bf16.msra.mxu0 %v2181
        %2207 = vmatprep.subr.bf16.mxu0 0
        %2208 = vmatpush1.bf16.msra.mxu0 %v2180
        %2209 = vmatprep.subr.bf16.mxu0 0
        %2210 = vmatpush1.bf16.msra.mxu0 %v2179
        %2211 = vmatprep.subr.bf16.mxu0 0
        %2212 = vmatpush2.bf16.msra.mxu0 0
        %2213 = vmatprep.subr.bf16.mxu0 0
        %2214 = vmatpush2.bf16.msra.mxu0 0
        %2215 = vmatprep.subr.bf16.mxu0 0
        %2216 = vmatpush2.bf16.msra.mxu0 0
        %2217 = vmatprep.subr.bf16.mxu0 0
        %2218 = vmatpush2.bf16.msra.mxu0 0
        %2219 = vmatprep.subr.bf16.mxu0 0
        %2220 = vmatpush2.bf16.msra.mxu0 0
        %2221 = vmatprep.subr.bf16.mxu0 0
        %2222 = vmatpush2.bf16.msra.mxu0 0
        %2223 = vmatprep.subr.bf16.mxu0 0
        %2224 = vmatpush2.bf16.msra.mxu0 0
        %2225 = vmatprep.subr.bf16.mxu0 0
        %2226 = vmatpush2.bf16.msra.mxu0 0
        %2227 = vmatprep.mubr.bf16.mxu0 0
        %2228 = vmatmul.mubr.bf16.gmra.mxu0 %v2122
        %v2229 = vpop.f32.mrf.mxu0
        %v2230 = vadd.f32 %v2145, %v2229
        %v2231 = vpop.f32.mrf.mxu0
        %v2232 = vpop.f32.mrf.mxu0
        %v2233 = vadd.f32 %v2145, %v2232
        %v2234 = vpop.f32.mrf.mxu0
        %2235 = vmatprep.mubr.bf16.mxu0 0
        %2236 = vmatmul.mubr.bf16.gmra.mxu0 %v2123
        %v2237 = vpop.f32.mrf.mxu0
        %v2238 = vadd.f32 %v2145, %v2237
        %v2239 = vpop.f32.mrf.mxu0
        %v2240 = vpop.f32.mrf.mxu0
        %v2241 = vadd.f32 %v2145, %v2240
        %v2242 = vpop.f32.mrf.mxu0
        %2243 = vdwg.mxu0
        %v2244 = vadd.f32 %v2230, %v763
        %v2245 = vadd.f32 %v2233, %v764
        %v2246 = vadd.f32 %v2238, %v765
        %v2247 = vadd.f32 %v2241, %v766
        %v2248 = vld [vmem:[%s731] sm:$0x1]
        %v2249 = vld [vmem:[%s734] sm:$0x1]
        %2250 = vadd.xlane.f32.xlu0 %v2244
        %v2251 = vpop.xlane.xlu0 %2250
        %2252 = vadd.xlane.f32.xlu0 %v2245
        %v2253 = vpop.xlane.xlu0 %2252
        %2254 = vadd.xlane.f32.xlu0 %v2246
        %v2255 = vpop.xlane.xlu0 %2254
        %2256 = vadd.xlane.f32.xlu0 %v2247
        %v2257 = vpop.xlane.xlu0 %2256
        %v2258 = vrcp.pop 128.0
        %v2259 = vmul.f32 %v2251, %v2258
        %v2260 = vmul.f32 %v2253, %v2258
        %v2261 = vmul.f32 %v2255, %v2258
        %v2262 = vmul.f32 %v2257, %v2258
        %v2263 = vsub.f32 %v2244, %v2259
        %v2264 = vsub.f32 %v2245, %v2260
        %v2265 = vsub.f32 %v2246, %v2261
        %v2266 = vsub.f32 %v2247, %v2262
        %v2267 = vmul.f32 %v2263, %v2263
        %v2268 = vmul.f32 %v2264, %v2264
        %v2269 = vmul.f32 %v2265, %v2265
        %v2270 = vmul.f32 %v2266, %v2266
        %2271 = vadd.xlane.f32.xlu0 %v2267
        %v2272 = vpop.xlane.xlu0 %2271
        %2273 = vadd.xlane.f32.xlu0 %v2268
        %v2274 = vpop.xlane.xlu0 %2273
        %2275 = vadd.xlane.f32.xlu0 %v2269
        %v2276 = vpop.xlane.xlu0 %2275
        %2277 = vadd.xlane.f32.xlu0 %v2270
        %v2278 = vpop.xlane.xlu0 %2277
        %v2279 = vmul.f32 %v2272, %v2258
        %v2280 = vmul.f32 %v2274, %v2258
        %v2281 = vmul.f32 %v2276, %v2258
        %v2282 = vmul.f32 %v2278, %v2258
        %v2283 = vadd.f32 %v2279, 1e-12
        %v2284 = vadd.f32 %v2280, 1e-12
        %v2285 = vadd.f32 %v2281, 1e-12
        %v2286 = vadd.f32 %v2282, 1e-12
        %v2287 = vrsqrt.pop %v2283
        %v2288 = vrsqrt.pop %v2284
        %v2289 = vrsqrt.pop %v2285
        %v2290 = vrsqrt.pop %v2286
        %v2291 = vmul.f32 %v2263, %v2287
        %v2292 = vmul.f32 %v2264, %v2288
        %v2293 = vmul.f32 %v2265, %v2289
        %v2294 = vmul.f32 %v2266, %v2290
        %v2296 = vlaneseq
        %v2297 = vshrl.u32 %v2296, 7
        %v2298 = vsub.s32 0, %v2297
        %v2299 = vrot.slane %v2248, %v2298
        %v2301 = vmul.f32 %v2291, %v2299
        %v2302 = vmul.f32 %v2292, %v2299
        %v2303 = vmul.f32 %v2293, %v2299
        %v2304 = vmul.f32 %v2294, %v2299
        %v2306 = vlaneseq
        %v2307 = vshrl.u32 %v2306, 7
        %v2308 = vsub.s32 0, %v2307
        %v2309 = vrot.slane %v2249, %v2308
        %v2311 = vadd.f32 %v2301, %v2309
        %v2312 = vadd.f32 %v2302, %v2309
        %v2313 = vadd.f32 %v2303, %v2309
        %v2314 = vadd.f32 %v2304, %v2309
        %v2315 = vpack.c.bf16 %v2312, %v2311
        %v2316 = vpack.c.bf16 %v2314, %v2313
        %v2317 = vld [vmem:[%s635] sm:$0xff]
        %v2318 = vld [vmem:[%s635 + $0x8] sm:$0xff]
        %v2319 = vld [vmem:[%s635 + $0x10] sm:$0xff]
        %v2320 = vld [vmem:[%s635 + $0x18] sm:$0xff]
        %v2321 = vld [vmem:[%s635 + $0x20] sm:$0xff]
        %v2322 = vld [vmem:[%s635 + $0x28] sm:$0xff]
        %v2323 = vld [vmem:[%s635 + $0x30] sm:$0xff]
        %v2324 = vld [vmem:[%s635 + $0x38] sm:$0xff]
        %v2325 = vld [vmem:[%s635 + $0x40] sm:$0xff]
        %v2326 = vld [vmem:[%s635 + $0x48] sm:$0xff]
        %v2327 = vld [vmem:[%s635 + $0x50] sm:$0xff]
        %v2328 = vld [vmem:[%s635 + $0x58] sm:$0xff]
        %v2329 = vld [vmem:[%s635 + $0x60] sm:$0xff]
        %v2330 = vld [vmem:[%s635 + $0x68] sm:$0xff]
        %v2331 = vld [vmem:[%s635 + $0x70] sm:$0xff]
        %v2332 = vld [vmem:[%s635 + $0x78] sm:$0xff]
        %v2333 = vld [vmem:[%s635 + $0x80] sm:$0xff]
        %v2334 = vld [vmem:[%s635 + $0x88] sm:$0xff]
        %v2335 = vld [vmem:[%s635 + $0x90] sm:$0xff]
        %v2336 = vld [vmem:[%s635 + $0x98] sm:$0xff]
        %v2337 = vld [vmem:[%s635 + $0xa0] sm:$0xff]
        %v2338 = vld [vmem:[%s635 + $0xa8] sm:$0xff]
        %v2339 = vld [vmem:[%s635 + $0xb0] sm:$0xff]
        %v2340 = vld [vmem:[%s635 + $0xb8] sm:$0xff]
        %v2341 = vld [vmem:[%s635 + $0xc0] sm:$0xff]
        %v2342 = vld [vmem:[%s635 + $0xc8] sm:$0xff]
        %v2343 = vld [vmem:[%s635 + $0xd0] sm:$0xff]
        %v2344 = vld [vmem:[%s635 + $0xd8] sm:$0xff]
        %v2345 = vld [vmem:[%s635 + $0xe0] sm:$0xff]
        %v2346 = vld [vmem:[%s635 + $0xe8] sm:$0xff]
        %v2347 = vld [vmem:[%s635 + $0xf0] sm:$0xff]
        %v2348 = vld [vmem:[%s635 + $0xf8] sm:$0xff]
        %v2349 = vld [vmem:[%s738] sm:$0xf]
        %v2351 = vlaneseq
        %v2352 = vshrl.u32 %v2351, 7
        %v2353 = vsub.s32 0, %v2352
        %v2354 = vrot.slane %v2349, %v2353
        %v2355 = vlaneseq
        %v2356 = vshrl.u32 %v2355, 7
        %v2357 = vsub.s32 1, %v2356
        %v2358 = vrot.slane %v2349, %v2357
        %v2359 = vlaneseq
        %v2360 = vshrl.u32 %v2359, 7
        %v2361 = vsub.s32 2, %v2360
        %v2362 = vrot.slane %v2349, %v2361
        %v2363 = vlaneseq
        %v2364 = vshrl.u32 %v2363, 7
        %v2365 = vsub.s32 3, %v2364
        %v2366 = vrot.slane %v2349, %v2365
        %v2403 = vunpack.c.l.b16 %v2317
        %v2404 = vunpack.c.h.b16 %v2317
        %v2405 = vunpack.c.l.b16 %v2318
        %v2406 = vunpack.c.h.b16 %v2318
        %v2407 = vunpack.c.l.b16 %v2319
        %v2408 = vunpack.c.h.b16 %v2319
        %v2409 = vunpack.c.l.b16 %v2320
        %v2410 = vunpack.c.h.b16 %v2320
        %v2411 = vunpack.c.l.b16 %v2321
        %v2412 = vunpack.c.h.b16 %v2321
        %v2413 = vunpack.c.l.b16 %v2322
        %v2414 = vunpack.c.h.b16 %v2322
        %v2415 = vunpack.c.l.b16 %v2323
        %v2416 = vunpack.c.h.b16 %v2323
        %v2417 = vunpack.c.l.b16 %v2324
        %v2418 = vunpack.c.h.b16 %v2324
        %v2419 = vunpack.c.l.b16 %v2325
        %v2420 = vunpack.c.h.b16 %v2325
        %v2421 = vunpack.c.l.b16 %v2326
        %v2422 = vunpack.c.h.b16 %v2326
        %v2423 = vunpack.c.l.b16 %v2327
        %v2424 = vunpack.c.h.b16 %v2327
        %v2425 = vunpack.c.l.b16 %v2328
        %v2426 = vunpack.c.h.b16 %v2328
        %v2427 = vunpack.c.l.b16 %v2329
        %v2428 = vunpack.c.h.b16 %v2329
        %v2429 = vunpack.c.l.b16 %v2330
        %v2430 = vunpack.c.h.b16 %v2330
        %v2431 = vunpack.c.l.b16 %v2331
        %v2432 = vunpack.c.h.b16 %v2331
        %v2433 = vunpack.c.l.b16 %v2332
        %v2434 = vunpack.c.h.b16 %v2332
        %v2435 = vunpack.c.l.b16 %v2333
        %v2436 = vunpack.c.h.b16 %v2333
        %v2437 = vunpack.c.l.b16 %v2334
        %v2438 = vunpack.c.h.b16 %v2334
        %v2439 = vunpack.c.l.b16 %v2335
        %v2440 = vunpack.c.h.b16 %v2335
        %v2441 = vunpack.c.l.b16 %v2336
        %v2442 = vunpack.c.h.b16 %v2336
        %v2443 = vunpack.c.l.b16 %v2337
        %v2444 = vunpack.c.h.b16 %v2337
        %v2445 = vunpack.c.l.b16 %v2338
        %v2446 = vunpack.c.h.b16 %v2338
        %v2447 = vunpack.c.l.b16 %v2339
        %v2448 = vunpack.c.h.b16 %v2339
        %v2449 = vunpack.c.l.b16 %v2340
        %v2450 = vunpack.c.h.b16 %v2340
        %v2451 = vunpack.c.l.b16 %v2341
        %v2452 = vunpack.c.h.b16 %v2341
        %v2453 = vunpack.c.l.b16 %v2342
        %v2454 = vunpack.c.h.b16 %v2342
        %v2455 = vunpack.c.l.b16 %v2343
        %v2456 = vunpack.c.h.b16 %v2343
        %v2457 = vunpack.c.l.b16 %v2344
        %v2458 = vunpack.c.h.b16 %v2344
        %v2459 = vunpack.c.l.b16 %v2345
        %v2460 = vunpack.c.h.b16 %v2345
        %v2461 = vunpack.c.l.b16 %v2346
        %v2462 = vunpack.c.h.b16 %v2346
        %v2463 = vunpack.c.l.b16 %v2347
        %v2464 = vunpack.c.h.b16 %v2347
        %v2465 = vunpack.c.l.b16 %v2348
        %v2466 = vunpack.c.h.b16 %v2348
        %v2467 = vpack.c.b16 %v2407, %v2403
        %v2468 = vpack.c.b16 %v2408, %v2404
        %v2469 = vpack.c.b16 %v2409, %v2405
        %v2470 = vpack.c.b16 %v2410, %v2406
        %v2471 = vpack.c.b16 %v2415, %v2411
        %v2472 = vpack.c.b16 %v2416, %v2412
        %v2473 = vpack.c.b16 %v2417, %v2413
        %v2474 = vpack.c.b16 %v2418, %v2414
        %v2475 = vpack.c.b16 %v2423, %v2419
        %v2476 = vpack.c.b16 %v2424, %v2420
        %v2477 = vpack.c.b16 %v2425, %v2421
        %v2478 = vpack.c.b16 %v2426, %v2422
        %v2479 = vpack.c.b16 %v2431, %v2427
        %v2480 = vpack.c.b16 %v2432, %v2428
        %v2481 = vpack.c.b16 %v2433, %v2429
        %v2482 = vpack.c.b16 %v2434, %v2430
        %v2483 = vpack.c.b16 %v2439, %v2435
        %v2484 = vpack.c.b16 %v2440, %v2436
        %v2485 = vpack.c.b16 %v2441, %v2437
        %v2486 = vpack.c.b16 %v2442, %v2438
        %v2487 = vpack.c.b16 %v2447, %v2443
        %v2488 = vpack.c.b16 %v2448, %v2444
        %v2489 = vpack.c.b16 %v2449, %v2445
        %v2490 = vpack.c.b16 %v2450, %v2446
        %v2491 = vpack.c.b16 %v2455, %v2451
        %v2492 = vpack.c.b16 %v2456, %v2452
        %v2493 = vpack.c.b16 %v2457, %v2453
        %v2494 = vpack.c.b16 %v2458, %v2454
        %v2495 = vpack.c.b16 %v2463, %v2459
        %v2496 = vpack.c.b16 %v2464, %v2460
        %v2497 = vpack.c.b16 %v2465, %v2461
        %v2498 = vpack.c.b16 %v2466, %v2462
        %2531 = vmatprep.subr.bf16.mxu0 %v2496
        %2532 = vmatpush1.bf16.msra.mxu0 %v2495
        %2533 = vmatprep.subr.bf16.mxu0 %v2492
        %2534 = vmatpush1.bf16.msra.mxu0 %v2491
        %2535 = vmatprep.subr.bf16.mxu0 %v2488
        %2536 = vmatpush1.bf16.msra.mxu0 %v2487
        %2537 = vmatprep.subr.bf16.mxu0 %v2484
        %2538 = vmatpush1.bf16.msra.mxu0 %v2483
        %2539 = vmatprep.subr.bf16.mxu0 %v2480
        %2540 = vmatpush1.bf16.msra.mxu0 %v2479
        %2541 = vmatprep.subr.bf16.mxu0 %v2476
        %2542 = vmatpush1.bf16.msra.mxu0 %v2475
        %2543 = vmatprep.subr.bf16.mxu0 %v2472
        %2544 = vmatpush1.bf16.msra.mxu0 %v2471
        %2545 = vmatprep.subr.bf16.mxu0 %v2468
        %2546 = vmatpush1.bf16.msra.mxu0 %v2467
        %2547 = vmatprep.subr.bf16.mxu0 0
        %2548 = vmatpush2.bf16.msra.mxu0 0
        %2549 = vmatprep.subr.bf16.mxu0 0
        %2550 = vmatpush2.bf16.msra.mxu0 0
        %2551 = vmatprep.subr.bf16.mxu0 0
        %2552 = vmatpush2.bf16.msra.mxu0 0
        %2553 = vmatprep.subr.bf16.mxu0 0
        %2554 = vmatpush2.bf16.msra.mxu0 0
        %2555 = vmatprep.subr.bf16.mxu0 0
        %2556 = vmatpush2.bf16.msra.mxu0 0
        %2557 = vmatprep.subr.bf16.mxu0 0
        %2558 = vmatpush2.bf16.msra.mxu0 0
        %2559 = vmatprep.subr.bf16.mxu0 0
        %2560 = vmatpush2.bf16.msra.mxu0 0
        %2561 = vmatprep.subr.bf16.mxu0 0
        %2562 = vmatpush2.bf16.msra.mxu0 0
        %2563 = vmatprep.mubr.bf16.mxu0 0
        %2564 = vmatmul.mubr.bf16.gmra.mxu0 %v2315
        %v2565 = vpop.f32.mrf.mxu0
        %v2566 = vadd.f32 %v2354, %v2565
        %v2567 = vpop.f32.mrf.mxu0
        %v2568 = vadd.f32 %v2358, %v2567
        %v2569 = vpop.f32.mrf.mxu0
        %v2570 = vadd.f32 %v2354, %v2569
        %v2571 = vpop.f32.mrf.mxu0
        %v2572 = vadd.f32 %v2358, %v2571
        %2573 = vmatprep.mubr.bf16.mxu0 0
        %2574 = vmatmul.mubr.bf16.gmra.mxu0 %v2316
        %v2575 = vpop.f32.mrf.mxu0
        %v2576 = vadd.f32 %v2354, %v2575
        %v2577 = vpop.f32.mrf.mxu0
        %v2578 = vadd.f32 %v2358, %v2577
        %v2579 = vpop.f32.mrf.mxu0
        %v2580 = vadd.f32 %v2354, %v2579
        %v2581 = vpop.f32.mrf.mxu0
        %v2582 = vadd.f32 %v2358, %v2581
        %2583 = vdwg.mxu0
        %2584 = vmatprep.subr.bf16.mxu0 %v2498
        %2585 = vmatpush1.bf16.msra.mxu0 %v2497
        %2586 = vmatprep.subr.bf16.mxu0 %v2494
        %2587 = vmatpush1.bf16.msra.mxu0 %v2493
        %2588 = vmatprep.subr.bf16.mxu0 %v2490
        %2589 = vmatpush1.bf16.msra.mxu0 %v2489
        %2590 = vmatprep.subr.bf16.mxu0 %v2486
        %2591 = vmatpush1.bf16.msra.mxu0 %v2485
        %2592 = vmatprep.subr.bf16.mxu0 %v2482
        %2593 = vmatpush1.bf16.msra.mxu0 %v2481
        %2594 = vmatprep.subr.bf16.mxu0 %v2478
        %2595 = vmatpush1.bf16.msra.mxu0 %v2477
        %2596 = vmatprep.subr.bf16.mxu0 %v2474
        %2597 = vmatpush1.bf16.msra.mxu0 %v2473
        %2598 = vmatprep.subr.bf16.mxu0 %v2470
        %2599 = vmatpush1.bf16.msra.mxu0 %v2469
        %2600 = vmatprep.subr.bf16.mxu0 0
        %2601 = vmatpush2.bf16.msra.mxu0 0
        %2602 = vmatprep.subr.bf16.mxu0 0
        %2603 = vmatpush2.bf16.msra.mxu0 0
        %2604 = vmatprep.subr.bf16.mxu0 0
        %2605 = vmatpush2.bf16.msra.mxu0 0
        %2606 = vmatprep.subr.bf16.mxu0 0
        %2607 = vmatpush2.bf16.msra.mxu0 0
        %2608 = vmatprep.subr.bf16.mxu0 0
        %2609 = vmatpush2.bf16.msra.mxu0 0
        %2610 = vmatprep.subr.bf16.mxu0 0
        %2611 = vmatpush2.bf16.msra.mxu0 0
        %2612 = vmatprep.subr.bf16.mxu0 0
        %2613 = vmatpush2.bf16.msra.mxu0 0
        %2614 = vmatprep.subr.bf16.mxu0 0
        %2615 = vmatpush2.bf16.msra.mxu0 0
        %2616 = vmatprep.mubr.bf16.mxu0 0
        %2617 = vmatmul.mubr.bf16.gmra.mxu0 %v2315
        %v2618 = vpop.f32.mrf.mxu0
        %v2619 = vadd.f32 %v2362, %v2618
        %v2620 = vpop.f32.mrf.mxu0
        %v2621 = vadd.f32 %v2366, %v2620
        %v2622 = vpop.f32.mrf.mxu0
        %v2623 = vadd.f32 %v2362, %v2622
        %v2624 = vpop.f32.mrf.mxu0
        %v2625 = vadd.f32 %v2366, %v2624
        %2626 = vmatprep.mubr.bf16.mxu0 0
        %2627 = vmatmul.mubr.bf16.gmra.mxu0 %v2316
        %v2628 = vpop.f32.mrf.mxu0
        %v2629 = vadd.f32 %v2362, %v2628
        %v2630 = vpop.f32.mrf.mxu0
        %v2631 = vadd.f32 %v2366, %v2630
        %v2632 = vpop.f32.mrf.mxu0
        %v2633 = vadd.f32 %v2362, %v2632
        %v2634 = vpop.f32.mrf.mxu0
        %v2635 = vadd.f32 %v2366, %v2634
        %2636 = vdwg.mxu0
        %v2637 = vmul.f32 %v2566, 0.5
        %v2638 = vmul.f32 %v2568, 0.5
        %v2639 = vmul.f32 %v2619, 0.5
        %v2640 = vmul.f32 %v2621, 0.5
        %v2641 = vmul.f32 %v2570, 0.5
        %v2642 = vmul.f32 %v2572, 0.5
        %v2643 = vmul.f32 %v2623, 0.5
        %v2644 = vmul.f32 %v2625, 0.5
        %v2645 = vmul.f32 %v2576, 0.5
        %v2646 = vmul.f32 %v2578, 0.5
        %v2647 = vmul.f32 %v2629, 0.5
        %v2648 = vmul.f32 %v2631, 0.5
        %v2649 = vmul.f32 %v2580, 0.5
        %v2650 = vmul.f32 %v2582, 0.5
        %v2651 = vmul.f32 %v2633, 0.5
        %v2652 = vmul.f32 %v2635, 0.5
        %v2653 = vmul.f32 %v2566, 0.044715
        %v2654 = vmul.f32 %v2568, 0.044715
        %v2655 = vmul.f32 %v2619, 0.044715
        %v2656 = vmul.f32 %v2621, 0.044715
        %v2657 = vmul.f32 %v2570, 0.044715
        %v2658 = vmul.f32 %v2572, 0.044715
        %v2659 = vmul.f32 %v2623, 0.044715
        %v2660 = vmul.f32 %v2625, 0.044715
        %v2661 = vmul.f32 %v2576, 0.044715
        %v2662 = vmul.f32 %v2578, 0.044715
        %v2663 = vmul.f32 %v2629, 0.044715
        %v2664 = vmul.f32 %v2631, 0.044715
        %v2665 = vmul.f32 %v2580, 0.044715
        %v2666 = vmul.f32 %v2582, 0.044715
        %v2667 = vmul.f32 %v2633, 0.044715
        %v2668 = vmul.f32 %v2635, 0.044715
        %v2669 = vmul.f32 %v2653, %v2566
        %v2670 = vmul.f32 %v2654, %v2568
        %v2671 = vmul.f32 %v2655, %v2619
        %v2672 = vmul.f32 %v2656, %v2621
        %v2673 = vmul.f32 %v2657, %v2570
        %v2674 = vmul.f32 %v2658, %v2572
        %v2675 = vmul.f32 %v2659, %v2623
        %v2676 = vmul.f32 %v2660, %v2625
        %v2677 = vmul.f32 %v2661, %v2576
        %v2678 = vmul.f32 %v2662, %v2578
        %v2679 = vmul.f32 %v2663, %v2629
        %v2680 = vmul.f32 %v2664, %v2631
        %v2681 = vmul.f32 %v2665, %v2580
        %v2682 = vmul.f32 %v2666, %v2582
        %v2683 = vmul.f32 %v2667, %v2633
        %v2684 = vmul.f32 %v2668, %v2635
        %v2685 = vmul.f32 %v2669, %v2566
        %v2686 = vmul.f32 %v2670, %v2568
        %v2687 = vmul.f32 %v2671, %v2619
        %v2688 = vmul.f32 %v2672, %v2621
        %v2689 = vmul.f32 %v2673, %v2570
        %v2690 = vmul.f32 %v2674, %v2572
        %v2691 = vmul.f32 %v2675, %v2623
        %v2692 = vmul.f32 %v2676, %v2625
        %v2693 = vmul.f32 %v2677, %v2576
        %v2694 = vmul.f32 %v2678, %v2578
        %v2695 = vmul.f32 %v2679, %v2629
        %v2696 = vmul.f32 %v2680, %v2631
        %v2697 = vmul.f32 %v2681, %v2580
        %v2698 = vmul.f32 %v2682, %v2582
        %v2699 = vmul.f32 %v2683, %v2633
        %v2700 = vmul.f32 %v2684, %v2635
        %v2701 = vadd.f32 %v2566, %v2685
        %v2702 = vadd.f32 %v2568, %v2686
        %v2703 = vadd.f32 %v2619, %v2687
        %v2704 = vadd.f32 %v2621, %v2688
        %v2705 = vadd.f32 %v2570, %v2689
        %v2706 = vadd.f32 %v2572, %v2690
        %v2707 = vadd.f32 %v2623, %v2691
        %v2708 = vadd.f32 %v2625, %v2692
        %v2709 = vadd.f32 %v2576, %v2693
        %v2710 = vadd.f32 %v2578, %v2694
        %v2711 = vadd.f32 %v2629, %v2695
        %v2712 = vadd.f32 %v2631, %v2696
        %v2713 = vadd.f32 %v2580, %v2697
        %v2714 = vadd.f32 %v2582, %v2698
        %v2715 = vadd.f32 %v2633, %v2699
        %v2716 = vadd.f32 %v2635, %v2700
        %v2717 = vmul.f32 %v2701, 0.7978846
        %v2718 = vmul.f32 %v2702, 0.7978846
        %v2719 = vmul.f32 %v2703, 0.7978846
        %v2720 = vmul.f32 %v2704, 0.7978846
        %v2721 = vmul.f32 %v2705, 0.7978846
        %v2722 = vmul.f32 %v2706, 0.7978846
        %v2723 = vmul.f32 %v2707, 0.7978846
        %v2724 = vmul.f32 %v2708, 0.7978846
        %v2725 = vmul.f32 %v2709, 0.7978846
        %v2726 = vmul.f32 %v2710, 0.7978846
        %v2727 = vmul.f32 %v2711, 0.7978846
        %v2728 = vmul.f32 %v2712, 0.7978846
        %v2729 = vmul.f32 %v2713, 0.7978846
        %v2730 = vmul.f32 %v2714, 0.7978846
        %v2731 = vmul.f32 %v2715, 0.7978846
        %v2732 = vmul.f32 %v2716, 0.7978846
        %v2733 = vtanh.pop %v2717
        %v2734 = vtanh.pop %v2718
        %v2735 = vtanh.pop %v2719
        %v2736 = vtanh.pop %v2720
        %v2737 = vtanh.pop %v2721
        %v2738 = vtanh.pop %v2722
        %v2739 = vtanh.pop %v2723
        %v2740 = vtanh.pop %v2724
        %v2741 = vtanh.pop %v2725
        %v2742 = vtanh.pop %v2726
        %v2743 = vtanh.pop %v2727
        %v2744 = vtanh.pop %v2728
        %v2745 = vtanh.pop %v2729
        %v2746 = vtanh.pop %v2730
        %v2747 = vtanh.pop %v2731
        %v2748 = vtanh.pop %v2732
        %v2749 = vadd.f32 %v2733, 1.0
        %v2750 = vadd.f32 %v2734, 1.0
        %v2751 = vadd.f32 %v2735, 1.0
        %v2752 = vadd.f32 %v2736, 1.0
        %v2753 = vadd.f32 %v2737, 1.0
        %v2754 = vadd.f32 %v2738, 1.0
        %v2755 = vadd.f32 %v2739, 1.0
        %v2756 = vadd.f32 %v2740, 1.0
        %v2757 = vadd.f32 %v2741, 1.0
        %v2758 = vadd.f32 %v2742, 1.0
        %v2759 = vadd.f32 %v2743, 1.0
        %v2760 = vadd.f32 %v2744, 1.0
        %v2761 = vadd.f32 %v2745, 1.0
        %v2762 = vadd.f32 %v2746, 1.0
        %v2763 = vadd.f32 %v2747, 1.0
        %v2764 = vadd.f32 %v2748, 1.0
        %v2765 = vmul.f32 %v2637, %v2749
        %v2766 = vmul.f32 %v2638, %v2750
        %v2767 = vmul.f32 %v2639, %v2751
        %v2768 = vmul.f32 %v2640, %v2752
        %v2769 = vmul.f32 %v2641, %v2753
        %v2770 = vmul.f32 %v2642, %v2754
        %v2771 = vmul.f32 %v2643, %v2755
        %v2772 = vmul.f32 %v2644, %v2756
        %v2773 = vmul.f32 %v2645, %v2757
        %v2774 = vmul.f32 %v2646, %v2758
        %v2775 = vmul.f32 %v2647, %v2759
        %v2776 = vmul.f32 %v2648, %v2760
        %v2777 = vmul.f32 %v2649, %v2761
        %v2778 = vmul.f32 %v2650, %v2762
        %v2779 = vmul.f32 %v2651, %v2763
        %v2780 = vmul.f32 %v2652, %v2764
        %v2781 = vpack.c.bf16 %v2769, %v2765
        %v2782 = vpack.c.bf16 %v2770, %v2766
        %v2783 = vpack.c.bf16 %v2771, %v2767
        %v2784 = vpack.c.bf16 %v2772, %v2768
        %v2785 = vpack.c.bf16 %v2777, %v2773
        %v2786 = vpack.c.bf16 %v2778, %v2774
        %v2787 = vpack.c.bf16 %v2779, %v2775
        %v2788 = vpack.c.bf16 %v2780, %v2776
        %v2789 = vld [vmem:[%s644] sm:$0xf]
        %v2790 = vld [vmem:[%s644 + $0x4] sm:$0xf]
        %v2791 = vld [vmem:[%s644 + $0x8] sm:$0xf]
        %v2792 = vld [vmem:[%s644 + $0xc] sm:$0xf]
        %v2793 = vld [vmem:[%s644 + $0x10] sm:$0xf]
        %v2794 = vld [vmem:[%s644 + $0x14] sm:$0xf]
        %v2795 = vld [vmem:[%s644 + $0x18] sm:$0xf]
        %v2796 = vld [vmem:[%s644 + $0x1c] sm:$0xf]
        %v2797 = vld [vmem:[%s644 + $0x20] sm:$0xf]
        %v2798 = vld [vmem:[%s644 + $0x24] sm:$0xf]
        %v2799 = vld [vmem:[%s644 + $0x28] sm:$0xf]
        %v2800 = vld [vmem:[%s644 + $0x2c] sm:$0xf]
        %v2801 = vld [vmem:[%s644 + $0x30] sm:$0xf]
        %v2802 = vld [vmem:[%s644 + $0x34] sm:$0xf]
        %v2803 = vld [vmem:[%s644 + $0x38] sm:$0xf]
        %v2804 = vld [vmem:[%s644 + $0x3c] sm:$0xf]
        %v2805 = vld [vmem:[%s644 + $0x40] sm:$0xf]
        %v2806 = vld [vmem:[%s644 + $0x44] sm:$0xf]
        %v2807 = vld [vmem:[%s644 + $0x48] sm:$0xf]
        %v2808 = vld [vmem:[%s644 + $0x4c] sm:$0xf]
        %v2809 = vld [vmem:[%s644 + $0x50] sm:$0xf]
        %v2810 = vld [vmem:[%s644 + $0x54] sm:$0xf]
        %v2811 = vld [vmem:[%s644 + $0x58] sm:$0xf]
        %v2812 = vld [vmem:[%s644 + $0x5c] sm:$0xf]
        %v2813 = vld [vmem:[%s644 + $0x60] sm:$0xf]
        %v2814 = vld [vmem:[%s644 + $0x64] sm:$0xf]
        %v2815 = vld [vmem:[%s644 + $0x68] sm:$0xf]
        %v2816 = vld [vmem:[%s644 + $0x6c] sm:$0xf]
        %v2817 = vld [vmem:[%s644 + $0x70] sm:$0xf]
        %v2818 = vld [vmem:[%s644 + $0x74] sm:$0xf]
        %v2819 = vld [vmem:[%s644 + $0x78] sm:$0xf]
        %v2820 = vld [vmem:[%s644 + $0x7c] sm:$0xf]
        %v2821 = vld [vmem:[%s644 + $0x80] sm:$0xf]
        %v2822 = vld [vmem:[%s644 + $0x84] sm:$0xf]
        %v2823 = vld [vmem:[%s644 + $0x88] sm:$0xf]
        %v2824 = vld [vmem:[%s644 + $0x8c] sm:$0xf]
        %v2825 = vld [vmem:[%s644 + $0x90] sm:$0xf]
        %v2826 = vld [vmem:[%s644 + $0x94] sm:$0xf]
        %v2827 = vld [vmem:[%s644 + $0x98] sm:$0xf]
        %v2828 = vld [vmem:[%s644 + $0x9c] sm:$0xf]
        %v2829 = vld [vmem:[%s644 + $0xa0] sm:$0xf]
        %v2830 = vld [vmem:[%s644 + $0xa4] sm:$0xf]
        %v2831 = vld [vmem:[%s644 + $0xa8] sm:$0xf]
        %v2832 = vld [vmem:[%s644 + $0xac] sm:$0xf]
        %v2833 = vld [vmem:[%s644 + $0xb0] sm:$0xf]
        %v2834 = vld [vmem:[%s644 + $0xb4] sm:$0xf]
        %v2835 = vld [vmem:[%s644 + $0xb8] sm:$0xf]
        %v2836 = vld [vmem:[%s644 + $0xbc] sm:$0xf]
        %v2837 = vld [vmem:[%s644 + $0xc0] sm:$0xf]
        %v2838 = vld [vmem:[%s644 + $0xc4] sm:$0xf]
        %v2839 = vld [vmem:[%s644 + $0xc8] sm:$0xf]
        %v2840 = vld [vmem:[%s644 + $0xcc] sm:$0xf]
        %v2841 = vld [vmem:[%s644 + $0xd0] sm:$0xf]
        %v2842 = vld [vmem:[%s644 + $0xd4] sm:$0xf]
        %v2843 = vld [vmem:[%s644 + $0xd8] sm:$0xf]
        %v2844 = vld [vmem:[%s644 + $0xdc] sm:$0xf]
        %v2845 = vld [vmem:[%s644 + $0xe0] sm:$0xf]
        %v2846 = vld [vmem:[%s644 + $0xe4] sm:$0xf]
        %v2847 = vld [vmem:[%s644 + $0xe8] sm:$0xf]
        %v2848 = vld [vmem:[%s644 + $0xec] sm:$0xf]
        %v2849 = vld [vmem:[%s644 + $0xf0] sm:$0xf]
        %v2850 = vld [vmem:[%s644 + $0xf4] sm:$0xf]
        %v2851 = vld [vmem:[%s644 + $0xf8] sm:$0xf]
        %v2852 = vld [vmem:[%s644 + $0xfc] sm:$0xf]
        %v2853 = vld [vmem:[%s741] sm:$0x1]
        %v2855 = vlaneseq
        %v2856 = vshrl.u32 %v2855, 7
        %v2857 = vsub.s32 0, %v2856
        %v2858 = vrot.slane %v2853, %v2857
        %v2924 = vunpack.c.l.b16 %v2789
        %v2925 = vunpack.c.l.b16 %v2790
        %v2926 = vunpack.c.l.b16 %v2791
        %v2927 = vunpack.c.l.b16 %v2792
        %v2928 = vunpack.c.l.b16 %v2793
        %v2929 = vunpack.c.l.b16 %v2794
        %v2930 = vunpack.c.l.b16 %v2795
        %v2931 = vunpack.c.l.b16 %v2796
        %v2932 = vunpack.c.l.b16 %v2797
        %v2933 = vunpack.c.l.b16 %v2798
        %v2934 = vunpack.c.l.b16 %v2799
        %v2935 = vunpack.c.l.b16 %v2800
        %v2936 = vunpack.c.l.b16 %v2801
        %v2937 = vunpack.c.l.b16 %v2802
        %v2938 = vunpack.c.l.b16 %v2803
        %v2939 = vunpack.c.l.b16 %v2804
        %v2940 = vunpack.c.l.b16 %v2805
        %v2941 = vunpack.c.l.b16 %v2806
        %v2942 = vunpack.c.l.b16 %v2807
        %v2943 = vunpack.c.l.b16 %v2808
        %v2944 = vunpack.c.l.b16 %v2809
        %v2945 = vunpack.c.l.b16 %v2810
        %v2946 = vunpack.c.l.b16 %v2811
        %v2947 = vunpack.c.l.b16 %v2812
        %v2948 = vunpack.c.l.b16 %v2813
        %v2949 = vunpack.c.l.b16 %v2814
        %v2950 = vunpack.c.l.b16 %v2815
        %v2951 = vunpack.c.l.b16 %v2816
        %v2952 = vunpack.c.l.b16 %v2817
        %v2953 = vunpack.c.l.b16 %v2818
        %v2954 = vunpack.c.l.b16 %v2819
        %v2955 = vunpack.c.l.b16 %v2820
        %v2956 = vunpack.c.l.b16 %v2821
        %v2957 = vunpack.c.l.b16 %v2822
        %v2958 = vunpack.c.l.b16 %v2823
        %v2959 = vunpack.c.l.b16 %v2824
        %v2960 = vunpack.c.l.b16 %v2825
        %v2961 = vunpack.c.l.b16 %v2826
        %v2962 = vunpack.c.l.b16 %v2827
        %v2963 = vunpack.c.l.b16 %v2828
        %v2964 = vunpack.c.l.b16 %v2829
        %v2965 = vunpack.c.l.b16 %v2830
        %v2966 = vunpack.c.l.b16 %v2831
        %v2967 = vunpack.c.l.b16 %v2832
        %v2968 = vunpack.c.l.b16 %v2833
        %v2969 = vunpack.c.l.b16 %v2834
        %v2970 = vunpack.c.l.b16 %v2835
        %v2971 = vunpack.c.l.b16 %v2836
        %v2972 = vunpack.c.l.b16 %v2837
        %v2973 = vunpack.c.l.b16 %v2838
        %v2974 = vunpack.c.l.b16 %v2839
        %v2975 = vunpack.c.l.b16 %v2840
        %v2976 = vunpack.c.l.b16 %v2841
        %v2977 = vunpack.c.l.b16 %v2842
        %v2978 = vunpack.c.l.b16 %v2843
        %v2979 = vunpack.c.l.b16 %v2844
        %v2980 = vunpack.c.l.b16 %v2845
        %v2981 = vunpack.c.l.b16 %v2846
        %v2982 = vunpack.c.l.b16 %v2847
        %v2983 = vunpack.c.l.b16 %v2848
        %v2984 = vunpack.c.l.b16 %v2849
        %v2985 = vunpack.c.l.b16 %v2850
        %v2986 = vunpack.c.l.b16 %v2851
        %v2987 = vunpack.c.l.b16 %v2852
        %v2988 = vpack.c.b16 %v2925, %v2924
        %v2989 = vpack.c.b16 %v2927, %v2926
        %v2990 = vpack.c.b16 %v2929, %v2928
        %v2991 = vpack.c.b16 %v2931, %v2930
        %v2992 = vpack.c.b16 %v2933, %v2932
        %v2993 = vpack.c.b16 %v2935, %v2934
        %v2994 = vpack.c.b16 %v2937, %v2936
        %v2995 = vpack.c.b16 %v2939, %v2938
        %v2996 = vpack.c.b16 %v2941, %v2940
        %v2997 = vpack.c.b16 %v2943, %v2942
        %v2998 = vpack.c.b16 %v2945, %v2944
        %v2999 = vpack.c.b16 %v2947, %v2946
        %v3000 = vpack.c.b16 %v2949, %v2948
        %v3001 = vpack.c.b16 %v2951, %v2950
        %v3002 = vpack.c.b16 %v2953, %v2952
        %v3003 = vpack.c.b16 %v2955, %v2954
        %v3004 = vpack.c.b16 %v2957, %v2956
        %v3005 = vpack.c.b16 %v2959, %v2958
        %v3006 = vpack.c.b16 %v2961, %v2960
        %v3007 = vpack.c.b16 %v2963, %v2962
        %v3008 = vpack.c.b16 %v2965, %v2964
        %v3009 = vpack.c.b16 %v2967, %v2966
        %v3010 = vpack.c.b16 %v2969, %v2968
        %v3011 = vpack.c.b16 %v2971, %v2970
        %v3012 = vpack.c.b16 %v2973, %v2972
        %v3013 = vpack.c.b16 %v2975, %v2974
        %v3014 = vpack.c.b16 %v2977, %v2976
        %v3015 = vpack.c.b16 %v2979, %v2978
        %v3016 = vpack.c.b16 %v2981, %v2980
        %v3017 = vpack.c.b16 %v2983, %v2982
        %v3018 = vpack.c.b16 %v2985, %v2984
        %v3019 = vpack.c.b16 %v2987, %v2986
        %3052 = vmatprep.subr.bf16.mxu0 0
        %3053 = vmatpush1.bf16.msra.mxu0 %v2995
        %3054 = vmatprep.subr.bf16.mxu0 0
        %3055 = vmatpush1.bf16.msra.mxu0 %v2994
        %3056 = vmatprep.subr.bf16.mxu0 0
        %3057 = vmatpush1.bf16.msra.mxu0 %v2993
        %3058 = vmatprep.subr.bf16.mxu0 0
        %3059 = vmatpush1.bf16.msra.mxu0 %v2992
        %3060 = vmatprep.subr.bf16.mxu0 0
        %3061 = vmatpush1.bf16.msra.mxu0 %v2991
        %3062 = vmatprep.subr.bf16.mxu0 0
        %3063 = vmatpush1.bf16.msra.mxu0 %v2990
        %3064 = vmatprep.subr.bf16.mxu0 0
        %3065 = vmatpush1.bf16.msra.mxu0 %v2989
        %3066 = vmatprep.subr.bf16.mxu0 0
        %3067 = vmatpush1.bf16.msra.mxu0 %v2988
        %3068 = vmatprep.subr.bf16.mxu0 0
        %3069 = vmatpush2.bf16.msra.mxu0 %v3003
        %3070 = vmatprep.subr.bf16.mxu0 0
        %3071 = vmatpush2.bf16.msra.mxu0 %v3002
        %3072 = vmatprep.subr.bf16.mxu0 0
        %3073 = vmatpush2.bf16.msra.mxu0 %v3001
        %3074 = vmatprep.subr.bf16.mxu0 0
        %3075 = vmatpush2.bf16.msra.mxu0 %v3000
        %3076 = vmatprep.subr.bf16.mxu0 0
        %3077 = vmatpush2.bf16.msra.mxu0 %v2999
        %3078 = vmatprep.subr.bf16.mxu0 0
        %3079 = vmatpush2.bf16.msra.mxu0 %v2998
        %3080 = vmatprep.subr.bf16.mxu0 0
        %3081 = vmatpush2.bf16.msra.mxu0 %v2997
        %3082 = vmatprep.subr.bf16.mxu0 0
        %3083 = vmatpush2.bf16.msra.mxu0 %v2996
        %3084 = vmatprep.mubr.bf16.mxu0 %v2782
        %3085 = vmatmul.mubr.bf16.gmra.mxu0 %v2781
        %v3086 = vpop.f32.mrf.mxu0
        %v3087 = vadd.f32 %v2858, %v3086
        %v3088 = vpop.f32.mrf.mxu0
        %v3089 = vpop.f32.mrf.mxu0
        %v3090 = vadd.f32 %v2858, %v3089
        %v3091 = vpop.f32.mrf.mxu0
        %3092 = vmatprep.mubr.bf16.mxu0 %v2786
        %3093 = vmatmul.mubr.bf16.gmra.mxu0 %v2785
        %v3094 = vpop.f32.mrf.mxu0
        %v3095 = vadd.f32 %v2858, %v3094
        %v3096 = vpop.f32.mrf.mxu0
        %v3097 = vpop.f32.mrf.mxu0
        %v3098 = vadd.f32 %v2858, %v3097
        %v3099 = vpop.f32.mrf.mxu0
        %3100 = vdwg.mxu0
        %3101 = vmatprep.subr.bf16.mxu0 0
        %3102 = vmatpush1.bf16.msra.mxu0 %v3011
        %3103 = vmatprep.subr.bf16.mxu0 0
        %3104 = vmatpush1.bf16.msra.mxu0 %v3010
        %3105 = vmatprep.subr.bf16.mxu0 0
        %3106 = vmatpush1.bf16.msra.mxu0 %v3009
        %3107 = vmatprep.subr.bf16.mxu0 0
        %3108 = vmatpush1.bf16.msra.mxu0 %v3008
        %3109 = vmatprep.subr.bf16.mxu0 0
        %3110 = vmatpush1.bf16.msra.mxu0 %v3007
        %3111 = vmatprep.subr.bf16.mxu0 0
        %3112 = vmatpush1.bf16.msra.mxu0 %v3006
        %3113 = vmatprep.subr.bf16.mxu0 0
        %3114 = vmatpush1.bf16.msra.mxu0 %v3005
        %3115 = vmatprep.subr.bf16.mxu0 0
        %3116 = vmatpush1.bf16.msra.mxu0 %v3004
        %3117 = vmatprep.subr.bf16.mxu0 0
        %3118 = vmatpush2.bf16.msra.mxu0 %v3019
        %3119 = vmatprep.subr.bf16.mxu0 0
        %3120 = vmatpush2.bf16.msra.mxu0 %v3018
        %3121 = vmatprep.subr.bf16.mxu0 0
        %3122 = vmatpush2.bf16.msra.mxu0 %v3017
        %3123 = vmatprep.subr.bf16.mxu0 0
        %3124 = vmatpush2.bf16.msra.mxu0 %v3016
        %3125 = vmatprep.subr.bf16.mxu0 0
        %3126 = vmatpush2.bf16.msra.mxu0 %v3015
        %3127 = vmatprep.subr.bf16.mxu0 0
        %3128 = vmatpush2.bf16.msra.mxu0 %v3014
        %3129 = vmatprep.subr.bf16.mxu0 0
        %3130 = vmatpush2.bf16.msra.mxu0 %v3013
        %3131 = vmatprep.subr.bf16.mxu0 0
        %3132 = vmatpush2.bf16.msra.mxu0 %v3012
        %3133 = vmatprep.mubr.bf16.mxu0 %v2784
        %3134 = vmatmul.mubr.bf16.gmra.mxu0 %v2783
        %v3135 = vpop.f32.mrf.mxu0
        %v3136 = vadd.f32 %v3087, %v3135
        %v3137 = vpop.f32.mrf.mxu0
        %v3138 = vpop.f32.mrf.mxu0
        %v3139 = vadd.f32 %v3090, %v3138
        %v3140 = vpop.f32.mrf.mxu0
        %3141 = vmatprep.mubr.bf16.mxu0 %v2788
        %3142 = vmatmul.mubr.bf16.gmra.mxu0 %v2787
        %v3143 = vpop.f32.mrf.mxu0
        %v3144 = vadd.f32 %v3095, %v3143
        %v3145 = vpop.f32.mrf.mxu0
        %v3146 = vpop.f32.mrf.mxu0
        %v3147 = vadd.f32 %v3098, %v3146
        %v3148 = vpop.f32.mrf.mxu0
        %3149 = vdwg.mxu0
        %v3150 = vadd.f32 %v3136, %v2311
        %v3151 = vadd.f32 %v3139, %v2312
        %v3152 = vadd.f32 %v3144, %v2313
        %v3153 = vadd.f32 %v3147, %v2314
        %v3154 = vld [vmem:[%s744] sm:$0x1]
        %v3155 = vld [vmem:[%s747] sm:$0x1]
        %3156 = vadd.xlane.f32.xlu0 %v3150
        %v3157 = vpop.xlane.xlu0 %3156
        %3158 = vadd.xlane.f32.xlu0 %v3151
        %v3159 = vpop.xlane.xlu0 %3158
        %3160 = vadd.xlane.f32.xlu0 %v3152
        %v3161 = vpop.xlane.xlu0 %3160
        %3162 = vadd.xlane.f32.xlu0 %v3153
        %v3163 = vpop.xlane.xlu0 %3162
        %v3164 = vmul.f32 %v3157, %v2258
        %v3165 = vmul.f32 %v3159, %v2258
        %v3166 = vmul.f32 %v3161, %v2258
        %v3167 = vmul.f32 %v3163, %v2258
        %v3168 = vsub.f32 %v3150, %v3164
        %v3169 = vsub.f32 %v3151, %v3165
        %v3170 = vsub.f32 %v3152, %v3166
        %v3171 = vsub.f32 %v3153, %v3167
        %v3172 = vmul.f32 %v3168, %v3168
        %v3173 = vmul.f32 %v3169, %v3169
        %v3174 = vmul.f32 %v3170, %v3170
        %v3175 = vmul.f32 %v3171, %v3171
        %3176 = vadd.xlane.f32.xlu0 %v3172
        %v3177 = vpop.xlane.xlu0 %3176
        %3178 = vadd.xlane.f32.xlu0 %v3173
        %v3179 = vpop.xlane.xlu0 %3178
        %3180 = vadd.xlane.f32.xlu0 %v3174
        %v3181 = vpop.xlane.xlu0 %3180
        %3182 = vadd.xlane.f32.xlu0 %v3175
        %v3183 = vpop.xlane.xlu0 %3182
        %v3184 = vmul.f32 %v3177, %v2258
        %v3185 = vmul.f32 %v3179, %v2258
        %v3186 = vmul.f32 %v3181, %v2258
        %v3187 = vmul.f32 %v3183, %v2258
        %v3188 = vadd.f32 %v3184, 1e-12
        %v3189 = vadd.f32 %v3185, 1e-12
        %v3190 = vadd.f32 %v3186, 1e-12
        %v3191 = vadd.f32 %v3187, 1e-12
        %v3192 = vrsqrt.pop %v3188
        %v3193 = vrsqrt.pop %v3189
        %v3194 = vrsqrt.pop %v3190
        %v3195 = vrsqrt.pop %v3191
        %v3196 = vmul.f32 %v3168, %v3192
        %v3197 = vmul.f32 %v3169, %v3193
        %v3198 = vmul.f32 %v3170, %v3194
        %v3199 = vmul.f32 %v3171, %v3195
        %v3201 = vlaneseq
        %v3202 = vshrl.u32 %v3201, 7
        %v3203 = vsub.s32 0, %v3202
        %v3204 = vrot.slane %v3154, %v3203
        %v3206 = vmul.f32 %v3196, %v3204
        %v3207 = vmul.f32 %v3197, %v3204
        %v3208 = vmul.f32 %v3198, %v3204
        %v3209 = vmul.f32 %v3199, %v3204
        %v3211 = vlaneseq
        %v3212 = vshrl.u32 %v3211, 7
        %v3213 = vsub.s32 0, %v3212
        %v3214 = vrot.slane %v3155, %v3213
        %v3216 = vadd.f32 %v3206, %v3214
        %v3217 = vadd.f32 %v3207, %v3214
        %v3218 = vadd.f32 %v3208, %v3214
        %v3219 = vadd.f32 %v3209, %v3214
        %3220 = vst [vmem:[#allocation12] sm:$0xff] %v3216
        %3221 = vst [vmem:[#allocation12 + $0x8] sm:$0xff] %v3217
        %3222 = vst [vmem:[#allocation12 + $0x10] sm:$0xff] %v3218
        %3223 = vst [vmem:[#allocation12 + $0x18] sm:$0xff] %v3219
        // Predicated region
        $region109: #{tpu_custom_call.1} parent=75 // pred_check
          %p3224 = pneg %p395
        $region110: #{tpu_custom_call.1} parent=75 // pred_check_branch
          %3226 = sbr.rel (%p3224) target = $region112
        $region111: #{tpu_custom_call.1} parent=75 // pred_region
          %s3228 = ssub.s32 512, 512
          %3229 = vsyncadd [#allocation4], %s3228
          %s3230 = sshll.u32 [#allocation12], 4
          %s3231 = int_to_ptr.vmem [resolvable:$true] %s3230
          %3236 = dma.vmem_to_hbm [thread:$0]  %s3231, 512, %s14, [#allocation4], 128, 128, 8
        $region112: #{tpu_custom_call.1} parent=75 // pred_fallthru
          _
        // Predicated region
        $region113: #{tpu_custom_call.1} parent=75 // pred_check
          %p3237 = pneg %p395
        $region114: #{tpu_custom_call.1} parent=75 // pred_check_branch
          %3239 = sbr.rel (%p3237) target = $region116
        $region115: #{tpu_custom_call.1} parent=75 // pred_region
          %3240 = dma.done [#allocation4], 512
        $region116: #{tpu_custom_call.1} parent=75 // pred_fallthru
          _
      $region76: #{tpu_custom_call.1} parent=5 // pred_fallthru
        _
      %p3241 = scmp.le.s32.totalorder 2, %s23
      // Predicated region
      $region117: #{tpu_custom_call.1} parent=5 // pred_check
        %p3242 = pneg %p3241
      $region118: #{tpu_custom_call.1} parent=5 // pred_check_branch
        %3244 = sbr.rel (%p3242) target = $region120
      $region119: #{tpu_custom_call.1} parent=5 // pred_region
        %s3245 = ssub.s32 %s23, 2
      $region120: #{tpu_custom_call.1} parent=5 // pred_fallthru
        _
    $region6: #{tpu_custom_call.1} parent=1 // loop_footer
      %s27 = sadd.s32 1, %s23
    $region7: #{tpu_custom_call.1} parent=1 // loop_footer_branch
      %22 = sbr.rel target = $region3
    $region8: #{tpu_custom_call.1} parent=1 // loop_exit
      _
    %3246 = vsyncpa [#allocation3], 1
    %s3247 = scalar_lea.sflag [#allocation3], 1
    %3248 = vsyncpa %s3247, 1
    %3249 = vsyncpa [#allocation6], 1
    %3250 = vsyncpa [#allocation4], 1
    %s3251 = scalar_lea.sflag [#allocation4], 1
    %3252 = vsyncpa %s3251, 1

</llo_original>
